<compile_context>
chip_gen: v7x
topology: tpu7x:2x2x1
jax: 0.10.0
libtpu: 0.0.40
codegen_flags: <defaults>
</compile_context>

<pallas_src>
import functools
import math

import jax
import jax.numpy as jnp
from jax.experimental import pallas as pl
from jax.experimental.pallas import tpu as pltpu

EPS = 1e-5
_VMEM_LIMIT = 48 * 1024 * 1024  # leaves headroom on v7x (64 MiB physical VMEM)


# --------------------------------------------------------------------------
# Pass 1: mean-aggregation (tiled A @ X) + fused SAGE projection + residual,
#         plus per-row-tile BatchNorm#1 partial statistics.
# Grid: (row_tiles, k_tiles)  -- rows "parallel", contraction "arbitrary".
# --------------------------------------------------------------------------
def _sage_bn_stats_kernel(adj_ref, xk_ref, xr_ref, wcat_ref, bl_ref, mask_ref,
                          h1_ref, s1_ref, ss1_ref, acc_ref):
    k = pl.program_id(1)
    d_pad = xr_ref.shape[1]

    @pl.when(k == 0)
    def _init():
        acc_ref[...] = jnp.zeros_like(acc_ref)

    # Partial product of the row-normalized adjacency tile with an X k-tile.
    acc_ref[:, :d_pad] += jnp.dot(adj_ref[...], xk_ref[...],
                                  preferred_element_type=jnp.float32)

    @pl.when(k == pl.num_programs(1) - 1)
    def _finalize():
        xr = xr_ref[...]                                  # bf16 row tile of x
        acc_ref[:, d_pad:] = xr.astype(jnp.float32)       # slab = [agg | x]
        # Fused SAGE projection: [agg, x] @ [[Wl], [Wr]]  (contraction K = 2*D_pad)
        h = (jnp.dot(acc_ref[...].astype(jnp.bfloat16), wcat_ref[...],
                     preferred_element_type=jnp.float32)
             + bl_ref[...]
             + xr.astype(jnp.float32))                    # residual (x + SAGE(x))
        h1_ref[...] = h
        # Single-pass BN statistics; mask excludes padded rows.
        hm = h * mask_ref[...]
        s1_ref[...] = jnp.broadcast_to(jnp.sum(hm, axis=0, keepdims=True),
                                       s1_ref.shape)
        ss1_ref[...] = jnp.broadcast_to(jnp.sum(hm * h, axis=0, keepdims=True),
                                        ss1_ref.shape)


# --------------------------------------------------------------------------
# Pass 2: apply folded BatchNorm#1, feed-forward block, residual,
#         plus per-row-tile BatchNorm#2 partial statistics.
# --------------------------------------------------------------------------
def _bn_ff_stats_kernel(h1_ref, sc1_ref, sh1_ref, w1_ref, b1_ref, w2_ref, b2_ref,
                        mask_ref, h2_ref, s2_ref, ss2_ref):
    h = h1_ref[...] * sc1_ref[...] + sh1_ref[...]          # folded BN #1
    ff = jnp.dot(h.astype(jnp.bfloat16), w1_ref[...],
                 preferred_element_type=jnp.float32) + b1_ref[...]
    ff = jnp.maximum(ff, 0.0)                              # ReLU
    ff = jnp.dot(ff.astype(jnp.bfloat16), w2_ref[...],
                 preferred_element_type=jnp.float32) + b2_ref[...]
    h2 = h + ff                                            # FF residual
    h2_ref[...] = h2
    hm = h2 * mask_ref[...]
    s2_ref[...] = jnp.broadcast_to(jnp.sum(hm, axis=0, keepdims=True),
                                   s2_ref.shape)
    ss2_ref[...] = jnp.broadcast_to(jnp.sum(hm * h2, axis=0, keepdims=True),
                                    ss2_ref.shape)


# --------------------------------------------------------------------------
# Pass 3: apply folded BatchNorm#2 (pure elementwise).
# --------------------------------------------------------------------------
def _bn_apply_kernel(h2_ref, sc2_ref, sh2_ref, out_ref):
    out_ref[...] = h2_ref[...] * sc2_ref[...] + sh2_ref[...]


# --------------------------------------------------------------------------
# Host-side glue
# --------------------------------------------------------------------------
def _round_up(v, m):
    return (v + m - 1) // m * m


def _pad_cast(a, shape, dtype):
    out = jnp.zeros(shape, dtype)
    return out.at[: a.shape[0], : a.shape[1]].set(a.astype(dtype))


def _fold_bn(s_tiles, ss_tiles, gamma, beta, n_true, d_pad):
    """Combine per-tile sums -> mean/var -> folded scale/shift (f32, tiny)."""
    rt = s_tiles.shape[0] // 8
    s = s_tiles.reshape(rt, 8, d_pad)[:, 0].sum(axis=0, keepdims=True)
    ss = ss_tiles.reshape(rt, 8, d_pad)[:, 0].sum(axis=0, keepdims=True)
    mean = s / n_true
    var = jnp.maximum(ss / n_true - mean * mean, 0.0)      # biased (PyTorch BN fwd)
    scale = gamma * jax.lax.rsqrt(var + EPS)
    shift = beta - mean * scale
    return scale, shift


@functools.partial(jax.jit, static_argnames=("tile_m", "tile_k"))
def nsgnn_layer_forward(x, adj_mean, params, *, tile_m=128, tile_k=128):
    """x: [N, D] node features (f32); adj_mean: [N, N] row-normalized adjacency."""
    n, d = x.shape
    f32, bf16 = jnp.float32, jnp.bfloat16

    d_pad = _round_up(d, 128)
    n_pad = _round_up(n, (tile_m * tile_k) // math.gcd(tile_m, tile_k))
    rt, kt = n_pad // tile_m, n_pad // tile_k

    # ---- pad / cast operands (bf16 MXU inputs, f32 biases/affine) ----------
    xb = _pad_cast(x, (n_pad, d_pad), bf16)
    ab = _pad_cast(adj_mean, (n_pad, n_pad), bf16)
    mask = jnp.zeros((n_pad, 1), f32).at[:n].set(1.0)

    w_cat = jnp.zeros((2 * d_pad, d_pad), bf16)
    w_cat = w_cat.at[:d, :d].set(params["wl"].astype(bf16))
    w_cat = w_cat.at[d_pad:d_pad + d, :d].set(params["wr"].astype(bf16))
    bl = _pad_cast(params["bl"], (1, d_pad), f32)
    g1 = _pad_cast(params["gamma1"], (1, d_pad), f32)
    bt1 = _pad_cast(params["beta1"], (1, d_pad), f32)
    w1 = _pad_cast(params["w1"], (d_pad, 2 * d_pad), bf16)
    b1 = _pad_cast(params["b1"], (1, 2 * d_pad), f32)
    w2 = _pad_cast(params["w2"], (2 * d_pad, d_pad), bf16)
    b2 = _pad_cast(params["b2"], (1, d_pad), f32)
    g2 = _pad_cast(params["gamma2"], (1, d_pad), f32)
    bt2 = _pad_cast(params["beta2"], (1, d_pad), f32)

    # ---- Pass 1: SAGE + residual + BN1 partial stats ------------------------
    row_tile2 = pl.BlockSpec((tile_m, d_pad), lambda i, k: (i, 0))
    stat_tile2 = pl.BlockSpec((8, d_pad), lambda i, k: (i, 0))
    const2 = lambda shape: pl.BlockSpec(shape, lambda i, k: (0, 0))

    h1, s1, ss1 = pl.pallas_call(
        _sage_bn_stats_kernel,
        grid=(rt, kt),
        in_specs=[
            pl.BlockSpec((tile_m, tile_k), lambda i, k: (i, k)),   # adj tile
            pl.BlockSpec((tile_k, d_pad), lambda i, k: (k, 0)),    # x (contraction)
            row_tile2,                                             # x (row / residual)
            const2((2 * d_pad, d_pad)),                            # [Wl; Wr]
            const2((1, d_pad)),                                    # bias_l
            pl.BlockSpec((tile_m, 1), lambda i, k: (i, 0)),        # row mask
        ],
        out_specs=(row_tile2, stat_tile2, stat_tile2),
        out_shape=(
            jax.ShapeDtypeStruct((n_pad, d_pad), f32),             # h_local (+res)
            jax.ShapeDtypeStruct((rt * 8, d_pad), f32),            # per-tile sum
            jax.ShapeDtypeStruct((rt * 8, d_pad), f32),            # per-tile sumsq
        ),
        scratch_shapes=[pltpu.VMEM((tile_m, 2 * d_pad), f32)],
        compiler_params=pltpu.CompilerParams(
            dimension_semantics=("parallel", "arbitrary"),
            vmem_limit_bytes=_VMEM_LIMIT),
        cost_estimate=pl.CostEstimate(
            flops=2 * n_pad * n_pad * d_pad + 4 * n_pad * d_pad * d_pad,
            transcendentals=0,
            bytes_accessed=2 * n_pad * n_pad + 10 * n_pad * d_pad
                           + 4 * d_pad * d_pad),
    )(ab, xb, xb, w_cat, bl, mask)

    sc1, sh1 = _fold_bn(s1, ss1, g1, bt1, n, d_pad)

    # ---- Pass 2: BN1 apply (folded) + FF + residual + BN2 partial stats ------
    row_tile1 = pl.BlockSpec((tile_m, d_pad), lambda i: (i, 0))
    stat_tile1 = pl.BlockSpec((8, d_pad), lambda i: (i, 0))
    const1 = lambda shape: pl.BlockSpec(shape, lambda i: (0, 0))

    h2, s2, ss2 = pl.pallas_call(
        _bn_ff_stats_kernel,
        grid=(rt,),
        in_specs=[
            row_tile1,                                             # h1
            const1((1, d_pad)), const1((1, d_pad)),                # scale1, shift1
            const1((d_pad, 2 * d_pad)), const1((1, 2 * d_pad)),    # W1, b1
            const1((2 * d_pad, d_pad)), const1((1, d_pad)),        # W2, b2
            pl.BlockSpec((tile_m, 1), lambda i: (i, 0)),           # row mask
        ],
        out_specs=(row_tile1, stat_tile1, stat_tile1),
        out_shape=(
            jax.ShapeDtypeStruct((n_pad, d_pad), f32),
            jax.ShapeDtypeStruct((rt * 8, d_pad), f32),
            jax.ShapeDtypeStruct((rt * 8, d_pad), f32),
        ),
        compiler_params=pltpu.CompilerParams(
            dimension_semantics=("parallel",),
            vmem_limit_bytes=_VMEM_LIMIT),
        cost_estimate=pl.CostEstimate(
            flops=8 * n_pad * d_pad * d_pad,
            transcendentals=0,
            bytes_accessed=10 * n_pad * d_pad + 8 * d_pad * d_pad),
    )(h1, sc1, sh1, w1, b1, w2, b2, mask)

    sc2, sh2 = _fold_bn(s2, ss2, g2, bt2, n, d_pad)

    # ---- Pass 3: BN2 apply (folded elementwise) ------------------------------
    out = pl.pallas_call(
        _bn_apply_kernel,
        grid=(rt,),
        in_specs=[row_tile1, const1((1, d_pad)), const1((1, d_pad))],
        out_specs=row_tile1,
        out_shape=jax.ShapeDtypeStruct((n_pad, d_pad), f32),
        compiler_params=pltpu.CompilerParams(
            dimension_semantics=("parallel",),
            vmem_limit_bytes=_VMEM_LIMIT),
    )(h2, sc2, sh2)

    return out[:n, :d]


def build_mean_adjacency(edge_index, num_nodes):
    """Dense row-normalized adjacency: row i = mean over incoming messages (PyG mean agg)."""
    src, dst = edge_index[0], edge_index[1]
    adj = jnp.zeros((num_nodes, num_nodes), jnp.float32)
    adj = adj.at[dst, src].add(1.0)
    deg = adj.sum(axis=1, keepdims=True)
    return adj / jnp.maximum(deg, 1.0)


def init_params(key, dim_h):
    """Deterministic synthetic parameters (shapes follow the PyTorch module)."""
    ks = jax.random.split(key, 6)
    scale = 1.0 / jnp.sqrt(dim_h)
    return {
        # SAGEConv: lin_l (neighbor path, with bias), lin_r (root path, no bias)
        "wl": jax.random.normal(ks[0], (dim_h, dim_h), jnp.float32) * scale,
        "bl": jnp.zeros((1, dim_h), jnp.float32),
        "wr": jax.random.normal(ks[1], (dim_h, dim_h), jnp.float32) * scale,
        # BatchNorm1d #1
        "gamma1": jnp.ones((1, dim_h), jnp.float32),
        "beta1": jnp.zeros((1, dim_h), jnp.float32),
        # ff_linear1: dim_h -> 2*dim_h ; ff_linear2: 2*dim_h -> dim_h
        "w1": jax.random.normal(ks[2], (dim_h, 2 * dim_h), jnp.float32) * scale,
        "b1": jax.random.normal(ks[3], (1, 2 * dim_h), jnp.float32) * 0.01,
        "w2": jax.random.normal(ks[4], (2 * dim_h, dim_h), jnp.float32)
              * (1.0 / jnp.sqrt(2.0 * dim_h)),
        "b2": jax.random.normal(ks[5], (1, dim_h), jnp.float32) * 0.01,
        # BatchNorm1d #2
        "gamma2": jnp.ones((1, dim_h), jnp.float32),
        "beta2": jnp.zeros((1, dim_h), jnp.float32),
    }


def reference_forward(x, adj, p):
    """Pure-JAX reference mirroring the kernel's bf16 MXU casts (f32 accumulation)."""
    f32, bf16 = jnp.float32, jnp.bfloat16
    xb = x.astype(bf16)
    agg = jnp.dot(adj.astype(bf16), xb, preferred_element_type=f32)
    proj = (jnp.dot(agg.astype(bf16), p["wl"].astype(bf16), preferred_element_type=f32)
            + jnp.dot(xb, p["wr"].astype(bf16), preferred_element_type=f32)
            + p["bl"])
    h_local = xb.astype(f32) + proj
    m1 = h_local.mean(0, keepdims=True)
    v1 = ((h_local - m1) ** 2).mean(0, keepdims=True)
    h = (h_local - m1) * jax.lax.rsqrt(v1 + EPS) * p["gamma1"] + p["beta1"]
    ff = jnp.dot(h.astype(bf16), p["w1"].astype(bf16),
                 preferred_element_type=f32) + p["b1"]
    ff = jnp.maximum(ff, 0.0)
    ff = jnp.dot(ff.astype(bf16), p["w2"].astype(bf16),
                 preferred_element_type=f32) + p["b2"]
    h = h + ff
    m2 = h.mean(0, keepdims=True)
    v2 = ((h - m2) ** 2).mean(0, keepdims=True)
    return (h - m2) * jax.lax.rsqrt(v2 + EPS) * p["gamma2"] + p["beta2"]


if __name__ == "__main__":
    N, DIM_H = 200, 48           # small graph; padded internally to 256 x 128
    key = jax.random.PRNGKey(0)
    k_x, k_e, k_p = jax.random.split(key, 3)

    # Node features [N, dim_h]
    x = jax.random.normal(k_x, (N, DIM_H), jnp.float32)

    # Deterministic edge_index [2, E]: ring graph + a few extra edges
    ring_src = jnp.arange(N, dtype=jnp.int32)
    ring_dst = (ring_src + 1) % N
    extra_src = jax.random.randint(k_e, (64,), 0, N, dtype=jnp.int32)
    extra_dst = (extra_src + 7) % N
    edge_index = jnp.stack([jnp.concatenate([ring_src, extra_src]),
                            jnp.concatenate([ring_dst, extra_dst])], axis=0)

    adj_mean = build_mean_adjacency(edge_index, N)
    params = init_params(k_p, DIM_H)

    out = nsgnn_layer_forward(x, adj_mean, params)
    out = jax.block_until_ready(out)

    ref = reference_forward(x, adj_mean, params)
    assert out.shape == (N, DIM_H)
    max_err = float(jnp.max(jnp.abs(out - ref)))
    assert jnp.allclose(out, ref, atol=5e-3, rtol=5e-3), \
        f"mismatch vs JAX reference (max|err|={max_err:.3e})"

    print("KERNEL_OK")
</pallas_src>

<mosaic_0001>
module attributes {stable_mosaic.version = 11 : i64} {
  func.func @_sage_bn_stats_kernel(%arg0: i32, %arg1: i32, %arg2: memref<128x128xbf16, #tpu.memory_space<vmem>>, %arg3: memref<128x128xbf16, #tpu.memory_space<vmem>>, %arg4: memref<128x128xbf16, #tpu.memory_space<vmem>>, %arg5: memref<256x128xbf16, #tpu.memory_space<vmem>>, %arg6: memref<1x128xf32, #tpu.memory_space<vmem>>, %arg7: memref<128x1xf32, #tpu.memory_space<vmem>>, %arg8: memref<128x128xf32, #tpu.memory_space<vmem>>, %arg9: memref<8x128xf32, #tpu.memory_space<vmem>>, %arg10: memref<8x128xf32, #tpu.memory_space<vmem>>, %arg11: memref<128x256xf32, #tpu.memory_space<vmem>>) attributes {dimension_semantics = [#tpu.dimension_semantics<parallel>, #tpu.dimension_semantics<arbitrary>], iteration_bounds = array<i64: 2, 2>, scalar_prefetch = 0 : i64, scratch_operands = 1 : i64, tpu.core_type = #tpu.core_type<tc>, window_params = [{transform_indices = @transform_0, window_bounds = array<i64: 128, 128>}, {transform_indices = @transform_1, window_bounds = array<i64: 128, 128>}, {transform_indices = @transform_2, window_bounds = array<i64: 128, 128>}, {pipeline_mode = #tpu.pipeline_mode<synchronous>, transform_indices = @transform_3, window_bounds = array<i64: 256, 128>}, {pipeline_mode = #tpu.pipeline_mode<synchronous>, transform_indices = @transform_4, window_bounds = array<i64: 1, 128>}, {transform_indices = @transform_5, window_bounds = array<i64: 128, 1>}, {transform_indices = @transform_6, window_bounds = array<i64: 128, 128>}, {transform_indices = @transform_7, window_bounds = array<i64: 8, 128>}, {transform_indices = @transform_8, window_bounds = array<i64: 8, 128>}]} {
    %c0_i32 = arith.constant 0 : i32
    %0 = arith.cmpi eq, %arg1, %c0_i32 : i32
    %1 = arith.extui %0 : i1 to i32
    %c0_i32_0 = arith.constant 0 : i32
    %2 = arith.cmpi ne, %1, %c0_i32_0 : i32
    scf.if %2 {
      %cst_9 = arith.constant 0.000000e+00 : f32
      %12 = vector.broadcast %cst_9 : f32 to vector<128x256xf32>
      %c0_10 = arith.constant 0 : index
      %c0_11 = arith.constant 0 : index
      %13 = vector.load %arg11[%c0_10, %c0_11] : memref<128x256xf32, #tpu.memory_space<vmem>>, vector<128x256xf32>
      tpu.vector_store %arg11[%c0_10, %c0_11], %12 {strides = array<i32>} : memref<128x256xf32, #tpu.memory_space<vmem>>, vector<128x256xf32>,
    } else {
    }
    %c0 = arith.constant 0 : index
    %c0_1 = arith.constant 0 : index
    %3 = vector.load %arg11[%c0, %c0_1] : memref<128x256xf32, #tpu.memory_space<vmem>>, vector<128x128xf32>
    %c0_2 = arith.constant 0 : index
    %c0_3 = arith.constant 0 : index
    %4 = vector.load %arg2[%c0_2, %c0_3] : memref<128x128xbf16, #tpu.memory_space<vmem>>, vector<128x128xbf16>
    %c0_4 = arith.constant 0 : index
    %c0_5 = arith.constant 0 : index
    %5 = vector.load %arg3[%c0_4, %c0_5] : memref<128x128xbf16, #tpu.memory_space<vmem>>, vector<128x128xbf16>
    %cst = arith.constant dense<0.000000e+00> : vector<128x128xf32>
    %6 = tpu.matmul %4, %5, %cst {dimension_numbers = #tpu.dot_dimension_numbers<[1], [0], [0], [1], [0, 0, 1, 1], [], []>} : vector<128x128xbf16>, vector<128x128xbf16>, vector<128x128xf32> -> vector<128x128xf32>
    %7 = arith.addf %3, %6 : vector<128x128xf32>
    %c0_6 = arith.constant 0 : index
    %c0_7 = arith.constant 0 : index
    %8 = vector.load %arg11[%c0_6, %c0_7] : memref<128x256xf32, #tpu.memory_space<vmem>>, vector<128x128xf32>
    tpu.vector_store %arg11[%c0_6, %c0_7], %7 {strides = array<i32>} : memref<128x256xf32, #tpu.memory_space<vmem>>, vector<128x128xf32>,
    %c1_i32 = arith.constant 1 : i32
    %9 = arith.cmpi eq, %arg1, %c1_i32 : i32
    %10 = arith.extui %9 : i1 to i32
    %c0_i32_8 = arith.constant 0 : i32
    %11 = arith.cmpi ne, %10, %c0_i32_8 : i32
    scf.if %11 {
      %c0_9 = arith.constant 0 : index
      %c0_10 = arith.constant 0 : index
      %12 = vector.load %arg4[%c0_9, %c0_10] : memref<128x128xbf16, #tpu.memory_space<vmem>>, vector<128x128xbf16>
      %13 = arith.extf %12 : vector<128x128xbf16> to vector<128x128xf32>
      %c0_11 = arith.constant 0 : index
      %c128 = arith.constant 128 : index
      %14 = vector.load %arg11[%c0_11, %c128] : memref<128x256xf32, #tpu.memory_space<vmem>>, vector<128x128xf32>
      tpu.vector_store %arg11[%c0_11, %c128], %13 {strides = array<i32>} : memref<128x256xf32, #tpu.memory_space<vmem>>, vector<128x128xf32>,
      %c0_12 = arith.constant 0 : index
      %c0_13 = arith.constant 0 : index
      %15 = vector.load %arg11[%c0_12, %c0_13] : memref<128x256xf32, #tpu.memory_space<vmem>>, vector<128x256xf32>
      %16 = arith.truncf %15 : vector<128x256xf32> to vector<128x256xbf16>
      %c0_14 = arith.constant 0 : index
      %c0_15 = arith.constant 0 : index
      %17 = vector.load %arg5[%c0_14, %c0_15] : memref<256x128xbf16, #tpu.memory_space<vmem>>, vector<256x128xbf16>
      %cst_16 = arith.constant dense<0.000000e+00> : vector<128x128xf32>
      %18 = tpu.matmul %16, %17, %cst_16 {dimension_numbers = #tpu.dot_dimension_numbers<[1], [0], [0], [1], [0, 0, 1, 1], [], []>} : vector<128x256xbf16>, vector<256x128xbf16>, vector<128x128xf32> -> vector<128x128xf32>
      %c0_17 = arith.constant 0 : index
      %c0_18 = arith.constant 0 : index
      %19 = vector.load %arg6[%c0_17, %c0_18] : memref<1x128xf32, #tpu.memory_space<vmem>>, vector<1x128xf32>
      %20 = vector.broadcast %19 : vector<1x128xf32> to vector<128x128xf32>
      %21 = arith.addf %18, %20 : vector<128x128xf32>
      %22 = arith.extf %12 : vector<128x128xbf16> to vector<128x128xf32>
      %23 = arith.addf %21, %22 : vector<128x128xf32>
      %c0_19 = arith.constant 0 : index
      %c0_20 = arith.constant 0 : index
      %24 = vector.load %arg8[%c0_19, %c0_20] : memref<128x128xf32, #tpu.memory_space<vmem>>, vector<128x128xf32>
      tpu.vector_store %arg8[%c0_19, %c0_20], %23 {strides = array<i32>} : memref<128x128xf32, #tpu.memory_space<vmem>>, vector<128x128xf32>,
      %c0_21 = arith.constant 0 : index
      %c0_22 = arith.constant 0 : index
      %25 = vector.load %arg7[%c0_21, %c0_22] : memref<128x1xf32, #tpu.memory_space<vmem>>, vector<128x1xf32>
      %26 = vector.broadcast %25 : vector<128x1xf32> to vector<128x128xf32>
      %27 = arith.mulf %23, %26 : vector<128x128xf32>
      %cst_23 = arith.constant dense<0.000000e+00> : vector<128xf32>
      %28 = vector.multi_reduction <add>, %27, %cst_23 [0] : vector<128x128xf32> to vector<128xf32>
      %29 = vector.shape_cast %28 : vector<128xf32> to vector<1x128xf32>
      %30 = vector.shape_cast %29 : vector<1x128xf32> to vector<1x128xf32>
      %31 = vector.broadcast %30 : vector<1x128xf32> to vector<8x128xf32>
      %c0_24 = arith.constant 0 : index
      %c0_25 = arith.constant 0 : index
      %32 = vector.load %arg9[%c0_24, %c0_25] : memref<8x128xf32, #tpu.memory_space<vmem>>, vector<8x128xf32>
      tpu.vector_store %arg9[%c0_24, %c0_25], %31 {strides = array<i32>} : memref<8x128xf32, #tpu.memory_space<vmem>>, vector<8x128xf32>,
      %33 = arith.mulf %27, %23 : vector<128x128xf32>
      %cst_26 = arith.constant dense<0.000000e+00> : vector<128xf32>
      %34 = vector.multi_reduction <add>, %33, %cst_26 [0] : vector<128x128xf32> to vector<128xf32>
      %35 = vector.shape_cast %34 : vector<128xf32> to vector<1x128xf32>
      %36 = vector.shape_cast %35 : vector<1x128xf32> to vector<1x128xf32>
      %37 = vector.broadcast %36 : vector<1x128xf32> to vector<8x128xf32>
      %c0_27 = arith.constant 0 : index
      %c0_28 = arith.constant 0 : index
      %38 = vector.load %arg10[%c0_27, %c0_28] : memref<8x128xf32, #tpu.memory_space<vmem>>, vector<8x128xf32>
      tpu.vector_store %arg10[%c0_27, %c0_28], %37 {strides = array<i32>} : memref<8x128xf32, #tpu.memory_space<vmem>>, vector<8x128xf32>,
    } else {
    }
    return
  }
  func.func @transform_0(%arg0: i32, %arg1: i32) -> (i32, i32) {
    %c0_i32 = arith.constant 0 : i32
    return %arg0, %arg1 : i32, i32
  }
  func.func @transform_1(%arg0: i32, %arg1: i32) -> (i32, i32) {
    %c0_i32 = arith.constant 0 : i32
    %c0_i32_0 = arith.constant 0 : i32
    return %arg1, %c0_i32 : i32, i32
  }
  func.func @transform_2(%arg0: i32, %arg1: i32) -> (i32, i32) {
    %c0_i32 = arith.constant 0 : i32
    %c0_i32_0 = arith.constant 0 : i32
    return %arg0, %c0_i32 : i32, i32
  }
  func.func @transform_3(%arg0: i32, %arg1: i32) -> (i32, i32) {
    %c0_i32 = arith.constant 0 : i32
    %c0_i32_0 = arith.constant 0 : i32
    %c0_i32_1 = arith.constant 0 : i32
    return %c0_i32, %c0_i32_0 : i32, i32
  }
  func.func @transform_4(%arg0: i32, %arg1: i32) -> (i32, i32) {
    %c0_i32 = arith.constant 0 : i32
    %c0_i32_0 = arith.constant 0 : i32
    %c0_i32_1 = arith.constant 0 : i32
    return %c0_i32, %c0_i32_0 : i32, i32
  }
  func.func @transform_5(%arg0: i32, %arg1: i32) -> (i32, i32) {
    %c0_i32 = arith.constant 0 : i32
    %c0_i32_0 = arith.constant 0 : i32
    return %arg0, %c0_i32 : i32, i32
  }
  func.func @transform_6(%arg0: i32, %arg1: i32) -> (i32, i32) {
    %c0_i32 = arith.constant 0 : i32
    %c0_i32_0 = arith.constant 0 : i32
    return %arg0, %c0_i32 : i32, i32
  }
  func.func @transform_7(%arg0: i32, %arg1: i32) -> (i32, i32) {
    %c0_i32 = arith.constant 0 : i32
    %c0_i32_0 = arith.constant 0 : i32
    return %arg0, %c0_i32 : i32, i32
  }
  func.func @transform_8(%arg0: i32, %arg1: i32) -> (i32, i32) {
    %c0_i32 = arith.constant 0 : i32
    %c0_i32_0 = arith.constant 0 : i32
    return %arg0, %c0_i32 : i32, i32
  }
}

module attributes {stable_mosaic.version = 11 : i64} {
  func.func @_bn_apply_kernel(%arg0: i32, %arg1: memref<128x128xf32, #tpu.memory_space<vmem>>, %arg2: memref<1x128xf32, #tpu.memory_space<vmem>>, %arg3: memref<1x128xf32, #tpu.memory_space<vmem>>, %arg4: memref<128x128xf32, #tpu.memory_space<vmem>>) attributes {dimension_semantics = [#tpu.dimension_semantics<parallel>], iteration_bounds = array<i64: 2>, scalar_prefetch = 0 : i64, scratch_operands = 0 : i64, tpu.core_type = #tpu.core_type<tc>, window_params = [{transform_indices = @transform_0, window_bounds = array<i64: 128, 128>}, {pipeline_mode = #tpu.pipeline_mode<synchronous>, transform_indices = @transform_1, window_bounds = array<i64: 1, 128>}, {pipeline_mode = #tpu.pipeline_mode<synchronous>, transform_indices = @transform_2, window_bounds = array<i64: 1, 128>}, {transform_indices = @transform_3, window_bounds = array<i64: 128, 128>}]} {
    %c0 = arith.constant 0 : index
    %c0_0 = arith.constant 0 : index
    %0 = vector.load %arg1[%c0, %c0_0] : memref<128x128xf32, #tpu.memory_space<vmem>>, vector<128x128xf32>
    %c0_1 = arith.constant 0 : index
    %c0_2 = arith.constant 0 : index
    %1 = vector.load %arg2[%c0_1, %c0_2] : memref<1x128xf32, #tpu.memory_space<vmem>>, vector<1x128xf32>
    %2 = vector.broadcast %1 : vector<1x128xf32> to vector<128x128xf32>
    %3 = arith.mulf %0, %2 : vector<128x128xf32>
    %c0_3 = arith.constant 0 : index
    %c0_4 = arith.constant 0 : index
    %4 = vector.load %arg3[%c0_3, %c0_4] : memref<1x128xf32, #tpu.memory_space<vmem>>, vector<1x128xf32>
    %5 = vector.broadcast %4 : vector<1x128xf32> to vector<128x128xf32>
    %6 = arith.addf %3, %5 : vector<128x128xf32>
    %c0_5 = arith.constant 0 : index
    %c0_6 = arith.constant 0 : index
    %7 = vector.load %arg4[%c0_5, %c0_6] : memref<128x128xf32, #tpu.memory_space<vmem>>, vector<128x128xf32>
    tpu.vector_store %arg4[%c0_5, %c0_6], %6 {strides = array<i32>} : memref<128x128xf32, #tpu.memory_space<vmem>>, vector<128x128xf32>,
    return
  }
  func.func @transform_0(%arg0: i32) -> (i32, i32) {
    %c0_i32 = arith.constant 0 : i32
    %c0_i32_0 = arith.constant 0 : i32
    return %arg0, %c0_i32 : i32, i32
  }
  func.func @transform_1(%arg0: i32) -> (i32, i32) {
    %c0_i32 = arith.constant 0 : i32
    %c0_i32_0 = arith.constant 0 : i32
    %c0_i32_1 = arith.constant 0 : i32
    return %c0_i32, %c0_i32_0 : i32, i32
  }
  func.func @transform_2(%arg0: i32) -> (i32, i32) {
    %c0_i32 = arith.constant 0 : i32
    %c0_i32_0 = arith.constant 0 : i32
    %c0_i32_1 = arith.constant 0 : i32
    return %c0_i32, %c0_i32_0 : i32, i32
  }
  func.func @transform_3(%arg0: i32) -> (i32, i32) {
    %c0_i32 = arith.constant 0 : i32
    %c0_i32_0 = arith.constant 0 : i32
    return %arg0, %c0_i32 : i32, i32
  }
}

module attributes {stable_mosaic.version = 11 : i64} {
  func.func @_bn_ff_stats_kernel(%arg0: i32, %arg1: memref<128x128xf32, #tpu.memory_space<vmem>>, %arg2: memref<1x128xf32, #tpu.memory_space<vmem>>, %arg3: memref<1x128xf32, #tpu.memory_space<vmem>>, %arg4: memref<128x256xbf16, #tpu.memory_space<vmem>>, %arg5: memref<1x256xf32, #tpu.memory_space<vmem>>, %arg6: memref<256x128xbf16, #tpu.memory_space<vmem>>, %arg7: memref<1x128xf32, #tpu.memory_space<vmem>>, %arg8: memref<128x1xf32, #tpu.memory_space<vmem>>, %arg9: memref<128x128xf32, #tpu.memory_space<vmem>>, %arg10: memref<8x128xf32, #tpu.memory_space<vmem>>, %arg11: memref<8x128xf32, #tpu.memory_space<vmem>>) attributes {dimension_semantics = [#tpu.dimension_semantics<parallel>], iteration_bounds = array<i64: 2>, scalar_prefetch = 0 : i64, scratch_operands = 0 : i64, tpu.core_type = #tpu.core_type<tc>, window_params = [{transform_indices = @transform_0, window_bounds = array<i64: 128, 128>}, {pipeline_mode = #tpu.pipeline_mode<synchronous>, transform_indices = @transform_1, window_bounds = array<i64: 1, 128>}, {pipeline_mode = #tpu.pipeline_mode<synchronous>, transform_indices = @transform_2, window_bounds = array<i64: 1, 128>}, {pipeline_mode = #tpu.pipeline_mode<synchronous>, transform_indices = @transform_3, window_bounds = array<i64: 128, 256>}, {pipeline_mode = #tpu.pipeline_mode<synchronous>, transform_indices = @transform_4, window_bounds = array<i64: 1, 256>}, {pipeline_mode = #tpu.pipeline_mode<synchronous>, transform_indices = @transform_5, window_bounds = array<i64: 256, 128>}, {pipeline_mode = #tpu.pipeline_mode<synchronous>, transform_indices = @transform_6, window_bounds = array<i64: 1, 128>}, {transform_indices = @transform_7, window_bounds = array<i64: 128, 1>}, {transform_indices = @transform_8, window_bounds = array<i64: 128, 128>}, {transform_indices = @transform_9, window_bounds = array<i64: 8, 128>}, {transform_indices = @transform_10, window_bounds = array<i64: 8, 128>}]} {
    %c0 = arith.constant 0 : index
    %c0_0 = arith.constant 0 : index
    %0 = vector.load %arg1[%c0, %c0_0] : memref<128x128xf32, #tpu.memory_space<vmem>>, vector<128x128xf32>
    %c0_1 = arith.constant 0 : index
    %c0_2 = arith.constant 0 : index
    %1 = vector.load %arg2[%c0_1, %c0_2] : memref<1x128xf32, #tpu.memory_space<vmem>>, vector<1x128xf32>
    %2 = vector.broadcast %1 : vector<1x128xf32> to vector<128x128xf32>
    %3 = arith.mulf %0, %2 : vector<128x128xf32>
    %c0_3 = arith.constant 0 : index
    %c0_4 = arith.constant 0 : index
    %4 = vector.load %arg3[%c0_3, %c0_4] : memref<1x128xf32, #tpu.memory_space<vmem>>, vector<1x128xf32>
    %5 = vector.broadcast %4 : vector<1x128xf32> to vector<128x128xf32>
    %6 = arith.addf %3, %5 : vector<128x128xf32>
    %7 = arith.truncf %6 : vector<128x128xf32> to vector<128x128xbf16>
    %c0_5 = arith.constant 0 : index
    %c0_6 = arith.constant 0 : index
    %8 = vector.load %arg4[%c0_5, %c0_6] : memref<128x256xbf16, #tpu.memory_space<vmem>>, vector<128x256xbf16>
    %cst = arith.constant dense<0.000000e+00> : vector<128x256xf32>
    %9 = tpu.matmul %7, %8, %cst {dimension_numbers = #tpu.dot_dimension_numbers<[1], [0], [0], [1], [0, 0, 1, 1], [], []>} : vector<128x128xbf16>, vector<128x256xbf16>, vector<128x256xf32> -> vector<128x256xf32>
    %c0_7 = arith.constant 0 : index
    %c0_8 = arith.constant 0 : index
    %10 = vector.load %arg5[%c0_7, %c0_8] : memref<1x256xf32, #tpu.memory_space<vmem>>, vector<1x256xf32>
    %11 = vector.broadcast %10 : vector<1x256xf32> to vector<128x256xf32>
    %12 = arith.addf %9, %11 : vector<128x256xf32>
    %cst_9 = arith.constant 0.000000e+00 : f32
    %13 = vector.broadcast %cst_9 : f32 to vector<128x256xf32>
    %14 = arith.maximumf %12, %13 : vector<128x256xf32>
    %15 = arith.truncf %14 : vector<128x256xf32> to vector<128x256xbf16>
    %c0_10 = arith.constant 0 : index
    %c0_11 = arith.constant 0 : index
    %16 = vector.load %arg6[%c0_10, %c0_11] : memref<256x128xbf16, #tpu.memory_space<vmem>>, vector<256x128xbf16>
    %cst_12 = arith.constant dense<0.000000e+00> : vector<128x128xf32>
    %17 = tpu.matmul %15, %16, %cst_12 {dimension_numbers = #tpu.dot_dimension_numbers<[1], [0], [0], [1], [0, 0, 1, 1], [], []>} : vector<128x256xbf16>, vector<256x128xbf16>, vector<128x128xf32> -> vector<128x128xf32>
    %c0_13 = arith.constant 0 : index
    %c0_14 = arith.constant 0 : index
    %18 = vector.load %arg7[%c0_13, %c0_14] : memref<1x128xf32, #tpu.memory_space<vmem>>, vector<1x128xf32>
    %19 = vector.broadcast %18 : vector<1x128xf32> to vector<128x128xf32>
    %20 = arith.addf %17, %19 : vector<128x128xf32>
    %21 = arith.addf %6, %20 : vector<128x128xf32>
    %c0_15 = arith.constant 0 : index
    %c0_16 = arith.constant 0 : index
    %22 = vector.load %arg9[%c0_15, %c0_16] : memref<128x128xf32, #tpu.memory_space<vmem>>, vector<128x128xf32>
    tpu.vector_store %arg9[%c0_15, %c0_16], %21 {strides = array<i32>} : memref<128x128xf32, #tpu.memory_space<vmem>>, vector<128x128xf32>,
    %c0_17 = arith.constant 0 : index
    %c0_18 = arith.constant 0 : index
    %23 = vector.load %arg8[%c0_17, %c0_18] : memref<128x1xf32, #tpu.memory_space<vmem>>, vector<128x1xf32>
    %24 = vector.broadcast %23 : vector<128x1xf32> to vector<128x128xf32>
    %25 = arith.mulf %21, %24 : vector<128x128xf32>
    %cst_19 = arith.constant dense<0.000000e+00> : vector<128xf32>
    %26 = vector.multi_reduction <add>, %25, %cst_19 [0] : vector<128x128xf32> to vector<128xf32>
    %27 = vector.shape_cast %26 : vector<128xf32> to vector<1x128xf32>
    %28 = vector.shape_cast %27 : vector<1x128xf32> to vector<1x128xf32>
    %29 = vector.broadcast %28 : vector<1x128xf32> to vector<8x128xf32>
    %c0_20 = arith.constant 0 : index
    %c0_21 = arith.constant 0 : index
    %30 = vector.load %arg10[%c0_20, %c0_21] : memref<8x128xf32, #tpu.memory_space<vmem>>, vector<8x128xf32>
    tpu.vector_store %arg10[%c0_20, %c0_21], %29 {strides = array<i32>} : memref<8x128xf32, #tpu.memory_space<vmem>>, vector<8x128xf32>,
    %31 = arith.mulf %25, %21 : vector<128x128xf32>
    %cst_22 = arith.constant dense<0.000000e+00> : vector<128xf32>
    %32 = vector.multi_reduction <add>, %31, %cst_22 [0] : vector<128x128xf32> to vector<128xf32>
    %33 = vector.shape_cast %32 : vector<128xf32> to vector<1x128xf32>
    %34 = vector.shape_cast %33 : vector<1x128xf32> to vector<1x128xf32>
    %35 = vector.broadcast %34 : vector<1x128xf32> to vector<8x128xf32>
    %c0_23 = arith.constant 0 : index
    %c0_24 = arith.constant 0 : index
    %36 = vector.load %arg11[%c0_23, %c0_24] : memref<8x128xf32, #tpu.memory_space<vmem>>, vector<8x128xf32>
    tpu.vector_store %arg11[%c0_23, %c0_24], %35 {strides = array<i32>} : memref<8x128xf32, #tpu.memory_space<vmem>>, vector<8x128xf32>,
    return
  }
  func.func @transform_0(%arg0: i32) -> (i32, i32) {
    %c0_i32 = arith.constant 0 : i32
    %c0_i32_0 = arith.constant 0 : i32
    return %arg0, %c0_i32 : i32, i32
  }
  func.func @transform_1(%arg0: i32) -> (i32, i32) {
    %c0_i32 = arith.constant 0 : i32
    %c0_i32_0 = arith.constant 0 : i32
    %c0_i32_1 = arith.constant 0 : i32
    return %c0_i32, %c0_i32_0 : i32, i32
  }
  func.func @transform_2(%arg0: i32) -> (i32, i32) {
    %c0_i32 = arith.constant 0 : i32
    %c0_i32_0 = arith.constant 0 : i32
    %c0_i32_1 = arith.constant 0 : i32
    return %c0_i32, %c0_i32_0 : i32, i32
  }
  func.func @transform_3(%arg0: i32) -> (i32, i32) {
    %c0_i32 = arith.constant 0 : i32
    %c0_i32_0 = arith.constant 0 : i32
    %c0_i32_1 = arith.constant 0 : i32
    return %c0_i32, %c0_i32_0 : i32, i32
  }
  func.func @transform_4(%arg0: i32) -> (i32, i32) {
    %c0_i32 = arith.constant 0 : i32
    %c0_i32_0 = arith.constant 0 : i32
    %c0_i32_1 = arith.constant 0 : i32
    return %c0_i32, %c0_i32_0 : i32, i32
  }
  func.func @transform_5(%arg0: i32) -> (i32, i32) {
    %c0_i32 = arith.constant 0 : i32
    %c0_i32_0 = arith.constant 0 : i32
    %c0_i32_1 = arith.constant 0 : i32
    return %c0_i32, %c0_i32_0 : i32, i32
  }
  func.func @transform_6(%arg0: i32) -> (i32, i32) {
    %c0_i32 = arith.constant 0 : i32
    %c0_i32_0 = arith.constant 0 : i32
    %c0_i32_1 = arith.constant 0 : i32
    return %c0_i32, %c0_i32_0 : i32, i32
  }
  func.func @transform_7(%arg0: i32) -> (i32, i32) {
    %c0_i32 = arith.constant 0 : i32
    %c0_i32_0 = arith.constant 0 : i32
    return %arg0, %c0_i32 : i32, i32
  }
  func.func @transform_8(%arg0: i32) -> (i32, i32) {
    %c0_i32 = arith.constant 0 : i32
    %c0_i32_0 = arith.constant 0 : i32
    return %arg0, %c0_i32 : i32, i32
  }
  func.func @transform_9(%arg0: i32) -> (i32, i32) {
    %c0_i32 = arith.constant 0 : i32
    %c0_i32_0 = arith.constant 0 : i32
    return %arg0, %c0_i32 : i32, i32
  }
  func.func @transform_10(%arg0: i32) -> (i32, i32) {
    %c0_i32 = arith.constant 0 : i32
    %c0_i32_0 = arith.constant 0 : i32
    return %arg0, %c0_i32 : i32, i32
  }
}

</mosaic_0001>

<llo_original>
// kernel: nsgnn_layer_forward.5
$region0: #{nsgnn_layer_forward.5}
  #allocation0 [shape = 'u32[]', space=smem, size = 0x4, offset = 0x4, fixed_abs, tag = 'smem constant byte address 0x4 - core index']
  #allocation1 [shape = 'u32[144,128]{1,0:T(1,128)}', space=vmem, size = 0x12000, scoped, tag = 'internal scratch']
  %s0 = inlined_call_operand.vmem [shape: f32[256,128], index: 0, kind: input, shape index: {}]
  %s1 = inlined_call_operand.vmem [shape: f32[1,128], index: 1, kind: input, shape index: {}]
  %s2 = inlined_call_operand.vmem [shape: f32[1,128], index: 2, kind: input, shape index: {}]
  %s3 = inlined_call_operand.vmem [shape: f32[256,128], index: 3, kind: output, shape index: {}]
  %s4 = sld [smem:[#allocation0]]
  $region45: #{nsgnn_layer_forward.5} parent=0
    _
  %s6 = ssub.s32 1, %s4
  %s7 = scalar_select 0, %s6, %s4
  loop: start=0, step=1, limit=4
  $region2: #{nsgnn_layer_forward.5} parent=0 // loop_pre_header
    _
  $region3: #{nsgnn_layer_forward.5} parent=0 // loop_header
    %s9 = sphi 0, %s13
    %p10 = scmp.ge.s32.totalorder %s9, 4
    %s19 = sphi 0, %s21
    %s22 = sphi 0, %s19
    %s23 = sphi 0, %s22
    %s39 = sphi 0, %s23
    %s43 = sphi 0, %s43
    %s45 = sphi 0, %s43
    %s46 = sphi 0, %s45
    %s60 = sphi 0, %s46
    %s64 = sphi 0, %s64
    %s66 = sphi 0, %s64
    %s67 = sphi 0, %s66
    %s81 = sphi 0, %s67
    %s87 = sphi 0, %s89
    %s90 = sphi 0, %s87
    %s91 = sphi 0, %s90
    %s107 = sphi 0, %s91
  $region4: #{nsgnn_layer_forward.5} parent=0 // loop_header_branch
    %12 = sbr.rel (%p10) target = $region8
  $region5: #{nsgnn_layer_forward.5} parent=0 // loop_body
    %s14 = ssub.s32 %s9, 1
    %s15 = ssub.s32 %s9, 2
    %s16 = sadd.s32 %s9, 1
    %s17 = ssub.s32 %s9, %s16
    %p18 = scmp.eq.s32.totalorder %s17, 0
    %s20 = sadd.s32 %s19, 1
    %s21 = scalar_select %p18, %s19, %s20
    %p24 = pneg %p18
    %p25 = scmp.eq.s32.totalorder %s9, 1
    %p26 = por %p24, %p25
    %p27 = scmp.ne.s32.totalorder %s19, %s22
    %p28 = scmp.eq.s32.totalorder %s9, 0
    %p29 = por %p27, %p28
    %p30 = scmp.ne.s32.totalorder %s19, %s22
    %p31 = scmp.eq.s32.totalorder %s14, 1
    %p32 = por %p30, %p31
    %p33 = scmp.ne.s32.totalorder %s22, %s23
    %p34 = scmp.eq.s32.totalorder %s14, 0
    %p35 = por %p33, %p34
    %p36 = scmp.ne.s32.totalorder %s22, %s23
    %p37 = scmp.eq.s32.totalorder %s15, 1
    %p38 = por %p36, %p37
    %p40 = scmp.ne.s32.totalorder %s23, %s39
    %p41 = scmp.eq.s32.totalorder %s15, 0
    %p42 = por %p40, %p41
    %s44 = sadd.s32 %s43, 1
    %p47 = scmp.eq.s32.totalorder %s9, 1
    %p48 = scmp.ne.s32.totalorder %s43, %s45
    %p49 = scmp.eq.s32.totalorder %s9, 0
    %p50 = por %p48, %p49
    %p51 = scmp.ne.s32.totalorder %s43, %s45
    %p52 = scmp.eq.s32.totalorder %s14, 1
    %p53 = por %p51, %p52
    %p54 = scmp.ne.s32.totalorder %s45, %s46
    %p55 = scmp.eq.s32.totalorder %s14, 0
    %p56 = por %p54, %p55
    %p57 = scmp.ne.s32.totalorder %s45, %s46
    %p58 = scmp.eq.s32.totalorder %s15, 1
    %p59 = por %p57, %p58
    %p61 = scmp.ne.s32.totalorder %s46, %s60
    %p62 = scmp.eq.s32.totalorder %s15, 0
    %p63 = por %p61, %p62
    %s65 = sadd.s32 %s64, 1
    %p68 = scmp.eq.s32.totalorder %s9, 1
    %p69 = scmp.ne.s32.totalorder %s64, %s66
    %p70 = scmp.eq.s32.totalorder %s9, 0
    %p71 = por %p69, %p70
    %p72 = scmp.ne.s32.totalorder %s64, %s66
    %p73 = scmp.eq.s32.totalorder %s14, 1
    %p74 = por %p72, %p73
    %p75 = scmp.ne.s32.totalorder %s66, %s67
    %p76 = scmp.eq.s32.totalorder %s14, 0
    %p77 = por %p75, %p76
    %p78 = scmp.ne.s32.totalorder %s66, %s67
    %p79 = scmp.eq.s32.totalorder %s15, 1
    %p80 = por %p78, %p79
    %p82 = scmp.ne.s32.totalorder %s67, %s81
    %p83 = scmp.eq.s32.totalorder %s15, 0
    %p84 = por %p82, %p83
    %s85 = ssub.s32 %s9, %s16
    %p86 = scmp.eq.s32.totalorder %s85, 0
    %s88 = sadd.s32 %s87, 1
    %s89 = scalar_select %p86, %s87, %s88
    %p92 = pneg %p86
    %p93 = scmp.eq.s32.totalorder %s9, 1
    %p94 = por %p92, %p93
    %p95 = scmp.ne.s32.totalorder %s87, %s90
    %p96 = scmp.eq.s32.totalorder %s9, 0
    %p97 = por %p95, %p96
    %p98 = scmp.ne.s32.totalorder %s87, %s90
    %p99 = scmp.eq.s32.totalorder %s14, 1
    %p100 = por %p98, %p99
    %p101 = scmp.ne.s32.totalorder %s90, %s91
    %p102 = scmp.eq.s32.totalorder %s14, 0
    %p103 = por %p101, %p102
    %p104 = scmp.ne.s32.totalorder %s90, %s91
    %p105 = scmp.eq.s32.totalorder %s15, 1
    %p106 = por %p104, %p105
    %p108 = scmp.ne.s32.totalorder %s91, %s107
    %p109 = scmp.eq.s32.totalorder %s15, 0
    %p110 = por %p108, %p109
    %p111 = scmp.le.s32.totalorder 1, %s9
    %p112 = scmp.lt.s32.totalorder %s9, 3
    %p113 = pnand %p111, %p112
    %p114 = pneg %p113
    // Predicated region
    $region9: #{nsgnn_layer_forward.5} parent=5 // pred_check
      _
    $region10: #{nsgnn_layer_forward.5} parent=5 // pred_check_branch
      %116 = sbr.rel (%p113) target = $region12
    $region11: #{nsgnn_layer_forward.5} parent=5 // pred_region
      %s117 = ssub.s32 %s9, 1
      // Predicated region
      $region13: #{nsgnn_layer_forward.5} parent=11 // pred_check
        %p118 = pneg %p56
      $region14: #{nsgnn_layer_forward.5} parent=11 // pred_check_branch
        %120 = sbr.rel (%p118) target = $region16
      $region15: #{nsgnn_layer_forward.5} parent=11 // pred_region
        _
      $region16: #{nsgnn_layer_forward.5} parent=11 // pred_fallthru
        _
      // Predicated region
      $region17: #{nsgnn_layer_forward.5} parent=11 // pred_check
        %p121 = pneg %p77
      $region18: #{nsgnn_layer_forward.5} parent=11 // pred_check_branch
        %123 = sbr.rel (%p121) target = $region20
      $region19: #{nsgnn_layer_forward.5} parent=11 // pred_region
        _
      $region20: #{nsgnn_layer_forward.5} parent=11 // pred_fallthru
        _
    $region12: #{nsgnn_layer_forward.5} parent=5 // pred_fallthru
      _
    %p124 = scmp.lt.s32.totalorder %s9, 2
    // Predicated region
    $region21: #{nsgnn_layer_forward.5} parent=5 // pred_check
      %p125 = pneg %p124
    $region22: #{nsgnn_layer_forward.5} parent=5 // pred_check_branch
      %127 = sbr.rel (%p125) target = $region24
    $region23: #{nsgnn_layer_forward.5} parent=5 // pred_region
      // Predicated region
      $region25: #{nsgnn_layer_forward.5} parent=23 // pred_check
        %p128 = pneg %p29
      $region26: #{nsgnn_layer_forward.5} parent=23 // pred_check_branch
        %130 = sbr.rel (%p128) target = $region28
      $region27: #{nsgnn_layer_forward.5} parent=23 // pred_region
        %s131 = smul.u32 16, %s9
        %p132 = scmp.lt.s32.totalorder %s131, 31
        %s133 = scalar_select %p132, %s131, 31
        %s134 = smul.addr %s133, 8
        %s135 = scalar_lea.vmem %s0, %s134
        %s136 = smul.u32 16, %s9
      $region28: #{nsgnn_layer_forward.5} parent=23 // pred_fallthru
        _
    $region24: #{nsgnn_layer_forward.5} parent=5 // pred_fallthru
      _
    %p137 = scmp.le.s32.totalorder 1, %s9
    %p138 = scmp.lt.s32.totalorder %s9, 3
    %p139 = pnand %p137, %p138
    %p140 = pneg %p139
    // Predicated region
    $region29: #{nsgnn_layer_forward.5} parent=5 // pred_check
      _
    $region30: #{nsgnn_layer_forward.5} parent=5 // pred_check_branch
      %142 = sbr.rel (%p139) target = $region32
    $region31: #{nsgnn_layer_forward.5} parent=5 // pred_region
      %s143 = ssub.s32 %s9, 1
      %s144 = smul.u32 16, %s14
      %p145 = scmp.lt.s32.totalorder %s144, 31
      %s146 = scalar_select %p145, %s144, 31
      %s147 = smul.addr %s146, 8
      %s148 = scalar_lea.vmem %s0, %s147
      %p149 = pneg %p35
      %p150 = pneg %p32
      %p151 = pneg %p56
      %p152 = pneg %p53
      %p153 = pneg %p77
      %p154 = pneg %p74
      %p155 = pneg %p103
      %p156 = pneg %p100
      %s157 = smul.u32 16, %s14
      %p158 = scmp.lt.s32.totalorder %s157, 31
      %s159 = scalar_select %p158, %s157, 31
      %s160 = smul.addr %s159, 8
      %s161 = scalar_lea.vmem %s3, %s160
      %s162 = smul.u32 16, %s14
      %p163 = scmp.lt.s32.totalorder %s162, 31
      %s164 = scalar_select %p163, %s162, 31
      %s165 = smul.addr %s164, 8
      %s166 = scalar_lea.vmem %s0, %s165
      %s167 = smul.u32 16, %s14
      %s168 = smul.u32 16, %s14
      %p169 = scmp.lt.s32.totalorder %s168, 31
      %s170 = scalar_select %p169, %s168, 31
      %s171 = smul.addr %s170, 8
      %s172 = scalar_lea.vmem %s3, %s171
      %s173 = smul.u32 16, %s14
      %v174 = vld [vmem:[%s166] sm:$0xff]
      %v175 = vld [vmem:[%s166 + $0x8] sm:$0xff]
      %v176 = vld [vmem:[%s166 + $0x10] sm:$0xff]
      %v177 = vld [vmem:[%s166 + $0x18] sm:$0xff]
      %v178 = vld [vmem:[%s166 + $0x20] sm:$0xff]
      %v179 = vld [vmem:[%s166 + $0x28] sm:$0xff]
      %v180 = vld [vmem:[%s166 + $0x30] sm:$0xff]
      %v181 = vld [vmem:[%s166 + $0x38] sm:$0xff]
      %v182 = vld [vmem:[%s166 + $0x40] sm:$0xff]
      %v183 = vld [vmem:[%s166 + $0x48] sm:$0xff]
      %v184 = vld [vmem:[%s166 + $0x50] sm:$0xff]
      %v185 = vld [vmem:[%s166 + $0x58] sm:$0xff]
      %v186 = vld [vmem:[%s166 + $0x60] sm:$0xff]
      %v187 = vld [vmem:[%s166 + $0x68] sm:$0xff]
      %v188 = vld [vmem:[%s166 + $0x70] sm:$0xff]
      %v189 = vld [vmem:[%s166 + $0x78] sm:$0xff]
      %v190 = vld [vmem:[%s1] sm:$0x1]
      %v192 = vlaneseq
      %v193 = vshrl.u32 %v192, 7
      %v194 = vsub.s32 0, %v193
      %v195 = vrot.slane %v190, %v194
      %v197 = vmul.f32 %v174, %v195
      %v198 = vmul.f32 %v175, %v195
      %v199 = vmul.f32 %v176, %v195
      %v200 = vmul.f32 %v177, %v195
      %v201 = vmul.f32 %v178, %v195
      %v202 = vmul.f32 %v179, %v195
      %v203 = vmul.f32 %v180, %v195
      %v204 = vmul.f32 %v181, %v195
      %v205 = vmul.f32 %v182, %v195
      %v206 = vmul.f32 %v183, %v195
      %v207 = vmul.f32 %v184, %v195
      %v208 = vmul.f32 %v185, %v195
      %v209 = vmul.f32 %v186, %v195
      %v210 = vmul.f32 %v187, %v195
      %v211 = vmul.f32 %v188, %v195
      %v212 = vmul.f32 %v189, %v195
      %v213 = vld [vmem:[%s2] sm:$0x1]
      %v215 = vlaneseq
      %v216 = vshrl.u32 %v215, 7
      %v217 = vsub.s32 0, %v216
      %v218 = vrot.slane %v213, %v217
      %v220 = vadd.f32 %v197, %v218
      %v221 = vadd.f32 %v198, %v218
      %v222 = vadd.f32 %v199, %v218
      %v223 = vadd.f32 %v200, %v218
      %v224 = vadd.f32 %v201, %v218
      %v225 = vadd.f32 %v202, %v218
      %v226 = vadd.f32 %v203, %v218
      %v227 = vadd.f32 %v204, %v218
      %v228 = vadd.f32 %v205, %v218
      %v229 = vadd.f32 %v206, %v218
      %v230 = vadd.f32 %v207, %v218
      %v231 = vadd.f32 %v208, %v218
      %v232 = vadd.f32 %v209, %v218
      %v233 = vadd.f32 %v210, %v218
      %v234 = vadd.f32 %v211, %v218
      %v235 = vadd.f32 %v212, %v218
      %236 = vst [vmem:[%s172] sm:$0xff] %v220
      %237 = vst [vmem:[%s172 + $0x8] sm:$0xff] %v221
      %238 = vst [vmem:[%s172 + $0x10] sm:$0xff] %v222
      %239 = vst [vmem:[%s172 + $0x18] sm:$0xff] %v223
      %240 = vst [vmem:[%s172 + $0x20] sm:$0xff] %v224
      %241 = vst [vmem:[%s172 + $0x28] sm:$0xff] %v225
      %242 = vst [vmem:[%s172 + $0x30] sm:$0xff] %v226
      %243 = vst [vmem:[%s172 + $0x38] sm:$0xff] %v227
      %244 = vst [vmem:[%s172 + $0x40] sm:$0xff] %v228
      %245 = vst [vmem:[%s172 + $0x48] sm:$0xff] %v229
      %246 = vst [vmem:[%s172 + $0x50] sm:$0xff] %v230
      %247 = vst [vmem:[%s172 + $0x58] sm:$0xff] %v231
      %248 = vst [vmem:[%s172 + $0x60] sm:$0xff] %v232
      %249 = vst [vmem:[%s172 + $0x68] sm:$0xff] %v233
      %250 = vst [vmem:[%s172 + $0x70] sm:$0xff] %v234
      %251 = vst [vmem:[%s172 + $0x78] sm:$0xff] %v235
      %s252 = smul.u32 16, %s14
      %p253 = scmp.lt.s32.totalorder %s252, 31
      %s254 = scalar_select %p253, %s252, 31
      %s255 = smul.addr %s254, 8
      %s256 = scalar_lea.vmem %s3, %s255
      // Predicated region
      $region33: #{nsgnn_layer_forward.5} parent=31 // pred_check
        %p257 = pneg %p100
      $region34: #{nsgnn_layer_forward.5} parent=31 // pred_check_branch
        %259 = sbr.rel (%p257) target = $region36
      $region35: #{nsgnn_layer_forward.5} parent=31 // pred_region
        %s260 = smul.u32 16, %s14
      $region36: #{nsgnn_layer_forward.5} parent=31 // pred_fallthru
        _
    $region32: #{nsgnn_layer_forward.5} parent=5 // pred_fallthru
      _
    %p261 = scmp.le.s32.totalorder 2, %s9
    // Predicated region
    $region37: #{nsgnn_layer_forward.5} parent=5 // pred_check
      %p262 = pneg %p261
    $region38: #{nsgnn_layer_forward.5} parent=5 // pred_check_branch
      %264 = sbr.rel (%p262) target = $region40
    $region39: #{nsgnn_layer_forward.5} parent=5 // pred_region
      %s265 = ssub.s32 %s9, 2
      // Predicated region
      $region41: #{nsgnn_layer_forward.5} parent=39 // pred_check
        %p266 = pneg %p106
      $region42: #{nsgnn_layer_forward.5} parent=39 // pred_check_branch
        %268 = sbr.rel (%p266) target = $region44
      $region43: #{nsgnn_layer_forward.5} parent=39 // pred_region
        %s269 = smul.u32 16, %s15
        %p270 = scmp.lt.s32.totalorder %s269, 31
        %s271 = scalar_select %p270, %s269, 31
        %s272 = smul.addr %s271, 8
        %s273 = scalar_lea.vmem %s3, %s272
      $region44: #{nsgnn_layer_forward.5} parent=39 // pred_fallthru
        _
    $region40: #{nsgnn_layer_forward.5} parent=5 // pred_fallthru
      _
  $region6: #{nsgnn_layer_forward.5} parent=0 // loop_footer
    %s13 = sadd.s32 1, %s9
  $region7: #{nsgnn_layer_forward.5} parent=0 // loop_footer_branch
    %8 = sbr.rel target = $region3
  $region8: #{nsgnn_layer_forward.5} parent=0 // loop_exit
    _

// kernel: nsgnn_layer_forward.4
$region0: #{nsgnn_layer_forward.4}
  #allocation0 [shape = 'u32[]', space=smem, size = 0x4, offset = 0x4, fixed_abs, tag = 'smem constant byte address 0x4 - core index']
  #allocation1 [shape = 'u32[144,128]{1,0:T(1,128)}', space=vmem, size = 0x12000, scoped, tag = 'internal scratch']
  %s0 = inlined_call_operand.vmem [shape: f32[256,128], index: 0, kind: input, shape index: {}]
  %s1 = inlined_call_operand.vmem [shape: f32[1,128], index: 1, kind: input, shape index: {}]
  %s2 = inlined_call_operand.vmem [shape: f32[1,128], index: 2, kind: input, shape index: {}]
  %s3 = inlined_call_operand.vmem [shape: bf16[128,256], index: 3, kind: input, shape index: {}]
  %s4 = inlined_call_operand.vmem [shape: f32[1,256], index: 4, kind: input, shape index: {}]
  %s5 = inlined_call_operand.vmem [shape: bf16[256,128], index: 5, kind: input, shape index: {}]
  %s6 = inlined_call_operand.vmem [shape: f32[1,128], index: 6, kind: input, shape index: {}]
  %s7 = inlined_call_operand.vmem [shape: f32[256,1], index: 7, kind: input, shape index: {}]
  %s8 = inlined_call_operand.vmem [shape: f32[256,128], index: 8, kind: output, shape index: {0}]
  %s9 = inlined_call_operand.vmem [shape: f32[16,128], index: 9, kind: output, shape index: {1}]
  %s10 = inlined_call_operand.vmem [shape: f32[16,128], index: 10, kind: output, shape index: {2}]
  %11 = xla_tuple %s8, %s9, %s10
  %s12 = sld [smem:[#allocation0]]
  $region81: #{nsgnn_layer_forward.4} parent=0
    _
  %s14 = ssub.s32 1, %s12
  %s15 = scalar_select 0, %s14, %s12
  loop: start=0, step=1, limit=4
  $region2: #{nsgnn_layer_forward.4} parent=0 // loop_pre_header
    _
  $region3: #{nsgnn_layer_forward.4} parent=0 // loop_header
    %s17 = sphi 0, %s21
    %p18 = scmp.ge.s32.totalorder %s17, 4
    %s27 = sphi 0, %s29
    %s30 = sphi 0, %s27
    %s31 = sphi 0, %s30
    %s47 = sphi 0, %s31
    %s51 = sphi 0, %s51
    %s53 = sphi 0, %s51
    %s54 = sphi 0, %s53
    %s68 = sphi 0, %s54
    %s72 = sphi 0, %s72
    %s74 = sphi 0, %s72
    %s75 = sphi 0, %s74
    %s89 = sphi 0, %s75
    %s93 = sphi 0, %s93
    %s95 = sphi 0, %s93
    %s96 = sphi 0, %s95
    %s110 = sphi 0, %s96
    %s114 = sphi 0, %s114
    %s116 = sphi 0, %s114
    %s117 = sphi 0, %s116
    %s131 = sphi 0, %s117
    %s135 = sphi 0, %s135
    %s137 = sphi 0, %s135
    %s138 = sphi 0, %s137
    %s152 = sphi 0, %s138
    %s156 = sphi 0, %s156
    %s158 = sphi 0, %s156
    %s159 = sphi 0, %s158
    %s173 = sphi 0, %s159
    %s179 = sphi 0, %s181
    %s182 = sphi 0, %s179
    %s183 = sphi 0, %s182
    %s199 = sphi 0, %s183
    %s205 = sphi 0, %s207
    %s208 = sphi 0, %s205
    %s209 = sphi 0, %s208
    %s225 = sphi 0, %s209
    %s231 = sphi 0, %s233
    %s234 = sphi 0, %s231
    %s235 = sphi 0, %s234
    %s251 = sphi 0, %s235
    %s257 = sphi 0, %s259
    %s260 = sphi 0, %s257
    %s261 = sphi 0, %s260
    %s277 = sphi 0, %s261
  $region4: #{nsgnn_layer_forward.4} parent=0 // loop_header_branch
    %20 = sbr.rel (%p18) target = $region8
  $region5: #{nsgnn_layer_forward.4} parent=0 // loop_body
    %s22 = ssub.s32 %s17, 1
    %s23 = ssub.s32 %s17, 2
    %s24 = sadd.s32 %s17, 1
    %s25 = ssub.s32 %s17, %s24
    %p26 = scmp.eq.s32.totalorder %s25, 0
    %s28 = sadd.s32 %s27, 1
    %s29 = scalar_select %p26, %s27, %s28
    %p32 = pneg %p26
    %p33 = scmp.eq.s32.totalorder %s17, 1
    %p34 = por %p32, %p33
    %p35 = scmp.ne.s32.totalorder %s27, %s30
    %p36 = scmp.eq.s32.totalorder %s17, 0
    %p37 = por %p35, %p36
    %p38 = scmp.ne.s32.totalorder %s27, %s30
    %p39 = scmp.eq.s32.totalorder %s22, 1
    %p40 = por %p38, %p39
    %p41 = scmp.ne.s32.totalorder %s30, %s31
    %p42 = scmp.eq.s32.totalorder %s22, 0
    %p43 = por %p41, %p42
    %p44 = scmp.ne.s32.totalorder %s30, %s31
    %p45 = scmp.eq.s32.totalorder %s23, 1
    %p46 = por %p44, %p45
    %p48 = scmp.ne.s32.totalorder %s31, %s47
    %p49 = scmp.eq.s32.totalorder %s23, 0
    %p50 = por %p48, %p49
    %s52 = sadd.s32 %s51, 1
    %p55 = scmp.eq.s32.totalorder %s17, 1
    %p56 = scmp.ne.s32.totalorder %s51, %s53
    %p57 = scmp.eq.s32.totalorder %s17, 0
    %p58 = por %p56, %p57
    %p59 = scmp.ne.s32.totalorder %s51, %s53
    %p60 = scmp.eq.s32.totalorder %s22, 1
    %p61 = por %p59, %p60
    %p62 = scmp.ne.s32.totalorder %s53, %s54
    %p63 = scmp.eq.s32.totalorder %s22, 0
    %p64 = por %p62, %p63
    %p65 = scmp.ne.s32.totalorder %s53, %s54
    %p66 = scmp.eq.s32.totalorder %s23, 1
    %p67 = por %p65, %p66
    %p69 = scmp.ne.s32.totalorder %s54, %s68
    %p70 = scmp.eq.s32.totalorder %s23, 0
    %p71 = por %p69, %p70
    %s73 = sadd.s32 %s72, 1
    %p76 = scmp.eq.s32.totalorder %s17, 1
    %p77 = scmp.ne.s32.totalorder %s72, %s74
    %p78 = scmp.eq.s32.totalorder %s17, 0
    %p79 = por %p77, %p78
    %p80 = scmp.ne.s32.totalorder %s72, %s74
    %p81 = scmp.eq.s32.totalorder %s22, 1
    %p82 = por %p80, %p81
    %p83 = scmp.ne.s32.totalorder %s74, %s75
    %p84 = scmp.eq.s32.totalorder %s22, 0
    %p85 = por %p83, %p84
    %p86 = scmp.ne.s32.totalorder %s74, %s75
    %p87 = scmp.eq.s32.totalorder %s23, 1
    %p88 = por %p86, %p87
    %p90 = scmp.ne.s32.totalorder %s75, %s89
    %p91 = scmp.eq.s32.totalorder %s23, 0
    %p92 = por %p90, %p91
    %s94 = sadd.s32 %s93, 1
    %p97 = scmp.eq.s32.totalorder %s17, 1
    %p98 = scmp.ne.s32.totalorder %s93, %s95
    %p99 = scmp.eq.s32.totalorder %s17, 0
    %p100 = por %p98, %p99
    %p101 = scmp.ne.s32.totalorder %s93, %s95
    %p102 = scmp.eq.s32.totalorder %s22, 1
    %p103 = por %p101, %p102
    %p104 = scmp.ne.s32.totalorder %s95, %s96
    %p105 = scmp.eq.s32.totalorder %s22, 0
    %p106 = por %p104, %p105
    %p107 = scmp.ne.s32.totalorder %s95, %s96
    %p108 = scmp.eq.s32.totalorder %s23, 1
    %p109 = por %p107, %p108
    %p111 = scmp.ne.s32.totalorder %s96, %s110
    %p112 = scmp.eq.s32.totalorder %s23, 0
    %p113 = por %p111, %p112
    %s115 = sadd.s32 %s114, 1
    %p118 = scmp.eq.s32.totalorder %s17, 1
    %p119 = scmp.ne.s32.totalorder %s114, %s116
    %p120 = scmp.eq.s32.totalorder %s17, 0
    %p121 = por %p119, %p120
    %p122 = scmp.ne.s32.totalorder %s114, %s116
    %p123 = scmp.eq.s32.totalorder %s22, 1
    %p124 = por %p122, %p123
    %p125 = scmp.ne.s32.totalorder %s116, %s117
    %p126 = scmp.eq.s32.totalorder %s22, 0
    %p127 = por %p125, %p126
    %p128 = scmp.ne.s32.totalorder %s116, %s117
    %p129 = scmp.eq.s32.totalorder %s23, 1
    %p130 = por %p128, %p129
    %p132 = scmp.ne.s32.totalorder %s117, %s131
    %p133 = scmp.eq.s32.totalorder %s23, 0
    %p134 = por %p132, %p133
    %s136 = sadd.s32 %s135, 1
    %p139 = scmp.eq.s32.totalorder %s17, 1
    %p140 = scmp.ne.s32.totalorder %s135, %s137
    %p141 = scmp.eq.s32.totalorder %s17, 0
    %p142 = por %p140, %p141
    %p143 = scmp.ne.s32.totalorder %s135, %s137
    %p144 = scmp.eq.s32.totalorder %s22, 1
    %p145 = por %p143, %p144
    %p146 = scmp.ne.s32.totalorder %s137, %s138
    %p147 = scmp.eq.s32.totalorder %s22, 0
    %p148 = por %p146, %p147
    %p149 = scmp.ne.s32.totalorder %s137, %s138
    %p150 = scmp.eq.s32.totalorder %s23, 1
    %p151 = por %p149, %p150
    %p153 = scmp.ne.s32.totalorder %s138, %s152
    %p154 = scmp.eq.s32.totalorder %s23, 0
    %p155 = por %p153, %p154
    %s157 = sadd.s32 %s156, 1
    %p160 = scmp.eq.s32.totalorder %s17, 1
    %p161 = scmp.ne.s32.totalorder %s156, %s158
    %p162 = scmp.eq.s32.totalorder %s17, 0
    %p163 = por %p161, %p162
    %p164 = scmp.ne.s32.totalorder %s156, %s158
    %p165 = scmp.eq.s32.totalorder %s22, 1
    %p166 = por %p164, %p165
    %p167 = scmp.ne.s32.totalorder %s158, %s159
    %p168 = scmp.eq.s32.totalorder %s22, 0
    %p169 = por %p167, %p168
    %p170 = scmp.ne.s32.totalorder %s158, %s159
    %p171 = scmp.eq.s32.totalorder %s23, 1
    %p172 = por %p170, %p171
    %p174 = scmp.ne.s32.totalorder %s159, %s173
    %p175 = scmp.eq.s32.totalorder %s23, 0
    %p176 = por %p174, %p175
    %s177 = ssub.s32 %s17, %s24
    %p178 = scmp.eq.s32.totalorder %s177, 0
    %s180 = sadd.s32 %s179, 1
    %s181 = scalar_select %p178, %s179, %s180
    %p184 = pneg %p178
    %p185 = scmp.eq.s32.totalorder %s17, 1
    %p186 = por %p184, %p185
    %p187 = scmp.ne.s32.totalorder %s179, %s182
    %p188 = scmp.eq.s32.totalorder %s17, 0
    %p189 = por %p187, %p188
    %p190 = scmp.ne.s32.totalorder %s179, %s182
    %p191 = scmp.eq.s32.totalorder %s22, 1
    %p192 = por %p190, %p191
    %p193 = scmp.ne.s32.totalorder %s182, %s183
    %p194 = scmp.eq.s32.totalorder %s22, 0
    %p195 = por %p193, %p194
    %p196 = scmp.ne.s32.totalorder %s182, %s183
    %p197 = scmp.eq.s32.totalorder %s23, 1
    %p198 = por %p196, %p197
    %p200 = scmp.ne.s32.totalorder %s183, %s199
    %p201 = scmp.eq.s32.totalorder %s23, 0
    %p202 = por %p200, %p201
    %s203 = ssub.s32 %s17, %s24
    %p204 = scmp.eq.s32.totalorder %s203, 0
    %s206 = sadd.s32 %s205, 1
    %s207 = scalar_select %p204, %s205, %s206
    %p210 = pneg %p204
    %p211 = scmp.eq.s32.totalorder %s17, 1
    %p212 = por %p210, %p211
    %p213 = scmp.ne.s32.totalorder %s205, %s208
    %p214 = scmp.eq.s32.totalorder %s17, 0
    %p215 = por %p213, %p214
    %p216 = scmp.ne.s32.totalorder %s205, %s208
    %p217 = scmp.eq.s32.totalorder %s22, 1
    %p218 = por %p216, %p217
    %p219 = scmp.ne.s32.totalorder %s208, %s209
    %p220 = scmp.eq.s32.totalorder %s22, 0
    %p221 = por %p219, %p220
    %p222 = scmp.ne.s32.totalorder %s208, %s209
    %p223 = scmp.eq.s32.totalorder %s23, 1
    %p224 = por %p222, %p223
    %p226 = scmp.ne.s32.totalorder %s209, %s225
    %p227 = scmp.eq.s32.totalorder %s23, 0
    %p228 = por %p226, %p227
    %s229 = ssub.s32 %s17, %s24
    %p230 = scmp.eq.s32.totalorder %s229, 0
    %s232 = sadd.s32 %s231, 1
    %s233 = scalar_select %p230, %s231, %s232
    %p236 = pneg %p230
    %p237 = scmp.eq.s32.totalorder %s17, 1
    %p238 = por %p236, %p237
    %p239 = scmp.ne.s32.totalorder %s231, %s234
    %p240 = scmp.eq.s32.totalorder %s17, 0
    %p241 = por %p239, %p240
    %p242 = scmp.ne.s32.totalorder %s231, %s234
    %p243 = scmp.eq.s32.totalorder %s22, 1
    %p244 = por %p242, %p243
    %p245 = scmp.ne.s32.totalorder %s234, %s235
    %p246 = scmp.eq.s32.totalorder %s22, 0
    %p247 = por %p245, %p246
    %p248 = scmp.ne.s32.totalorder %s234, %s235
    %p249 = scmp.eq.s32.totalorder %s23, 1
    %p250 = por %p248, %p249
    %p252 = scmp.ne.s32.totalorder %s235, %s251
    %p253 = scmp.eq.s32.totalorder %s23, 0
    %p254 = por %p252, %p253
    %s255 = ssub.s32 %s17, %s24
    %p256 = scmp.eq.s32.totalorder %s255, 0
    %s258 = sadd.s32 %s257, 1
    %s259 = scalar_select %p256, %s257, %s258
    %p262 = pneg %p256
    %p263 = scmp.eq.s32.totalorder %s17, 1
    %p264 = por %p262, %p263
    %p265 = scmp.ne.s32.totalorder %s257, %s260
    %p266 = scmp.eq.s32.totalorder %s17, 0
    %p267 = por %p265, %p266
    %p268 = scmp.ne.s32.totalorder %s257, %s260
    %p269 = scmp.eq.s32.totalorder %s22, 1
    %p270 = por %p268, %p269
    %p271 = scmp.ne.s32.totalorder %s260, %s261
    %p272 = scmp.eq.s32.totalorder %s22, 0
    %p273 = por %p271, %p272
    %p274 = scmp.ne.s32.totalorder %s260, %s261
    %p275 = scmp.eq.s32.totalorder %s23, 1
    %p276 = por %p274, %p275
    %p278 = scmp.ne.s32.totalorder %s261, %s277
    %p279 = scmp.eq.s32.totalorder %s23, 0
    %p280 = por %p278, %p279
    %p281 = scmp.le.s32.totalorder 1, %s17
    %p282 = scmp.lt.s32.totalorder %s17, 3
    %p283 = pnand %p281, %p282
    %p284 = pneg %p283
    // Predicated region
    $region9: #{nsgnn_layer_forward.4} parent=5 // pred_check
      _
    $region10: #{nsgnn_layer_forward.4} parent=5 // pred_check_branch
      %286 = sbr.rel (%p283) target = $region12
    $region11: #{nsgnn_layer_forward.4} parent=5 // pred_region
      %s287 = ssub.s32 %s17, 1
      // Predicated region
      $region13: #{nsgnn_layer_forward.4} parent=11 // pred_check
        %p288 = pneg %p64
      $region14: #{nsgnn_layer_forward.4} parent=11 // pred_check_branch
        %290 = sbr.rel (%p288) target = $region16
      $region15: #{nsgnn_layer_forward.4} parent=11 // pred_region
        _
      $region16: #{nsgnn_layer_forward.4} parent=11 // pred_fallthru
        _
      // Predicated region
      $region17: #{nsgnn_layer_forward.4} parent=11 // pred_check
        %p291 = pneg %p85
      $region18: #{nsgnn_layer_forward.4} parent=11 // pred_check_branch
        %293 = sbr.rel (%p291) target = $region20
      $region19: #{nsgnn_layer_forward.4} parent=11 // pred_region
        _
      $region20: #{nsgnn_layer_forward.4} parent=11 // pred_fallthru
        _
      // Predicated region
      $region21: #{nsgnn_layer_forward.4} parent=11 // pred_check
        %p294 = pneg %p106
      $region22: #{nsgnn_layer_forward.4} parent=11 // pred_check_branch
        %296 = sbr.rel (%p294) target = $region24
      $region23: #{nsgnn_layer_forward.4} parent=11 // pred_region
        _
      $region24: #{nsgnn_layer_forward.4} parent=11 // pred_fallthru
        _
      // Predicated region
      $region25: #{nsgnn_layer_forward.4} parent=11 // pred_check
        %p297 = pneg %p127
      $region26: #{nsgnn_layer_forward.4} parent=11 // pred_check_branch
        %299 = sbr.rel (%p297) target = $region28
      $region27: #{nsgnn_layer_forward.4} parent=11 // pred_region
        _
      $region28: #{nsgnn_layer_forward.4} parent=11 // pred_fallthru
        _
      // Predicated region
      $region29: #{nsgnn_layer_forward.4} parent=11 // pred_check
        %p300 = pneg %p148
      $region30: #{nsgnn_layer_forward.4} parent=11 // pred_check_branch
        %302 = sbr.rel (%p300) target = $region32
      $region31: #{nsgnn_layer_forward.4} parent=11 // pred_region
        _
      $region32: #{nsgnn_layer_forward.4} parent=11 // pred_fallthru
        _
      // Predicated region
      $region33: #{nsgnn_layer_forward.4} parent=11 // pred_check
        %p303 = pneg %p169
      $region34: #{nsgnn_layer_forward.4} parent=11 // pred_check_branch
        %305 = sbr.rel (%p303) target = $region36
      $region35: #{nsgnn_layer_forward.4} parent=11 // pred_region
        _
      $region36: #{nsgnn_layer_forward.4} parent=11 // pred_fallthru
        _
    $region12: #{nsgnn_layer_forward.4} parent=5 // pred_fallthru
      _
    %p306 = scmp.lt.s32.totalorder %s17, 2
    // Predicated region
    $region37: #{nsgnn_layer_forward.4} parent=5 // pred_check
      %p307 = pneg %p306
    $region38: #{nsgnn_layer_forward.4} parent=5 // pred_check_branch
      %309 = sbr.rel (%p307) target = $region40
    $region39: #{nsgnn_layer_forward.4} parent=5 // pred_region
      // Predicated region
      $region41: #{nsgnn_layer_forward.4} parent=39 // pred_check
        %p310 = pneg %p37
      $region42: #{nsgnn_layer_forward.4} parent=39 // pred_check_branch
        %312 = sbr.rel (%p310) target = $region44
      $region43: #{nsgnn_layer_forward.4} parent=39 // pred_region
        %s313 = smul.u32 16, %s17
        %p314 = scmp.lt.s32.totalorder %s313, 31
        %s315 = scalar_select %p314, %s313, 31
        %s316 = smul.addr %s315, 8
        %s317 = scalar_lea.vmem %s0, %s316
        %s318 = smul.u32 16, %s17
      $region44: #{nsgnn_layer_forward.4} parent=39 // pred_fallthru
        _
      // Predicated region
      $region45: #{nsgnn_layer_forward.4} parent=39 // pred_check
        %p319 = pneg %p189
      $region46: #{nsgnn_layer_forward.4} parent=39 // pred_check_branch
        %321 = sbr.rel (%p319) target = $region48
      $region47: #{nsgnn_layer_forward.4} parent=39 // pred_region
        %s322 = smul.u32 16, %s17
        %p323 = scmp.lt.s32.totalorder %s322, 31
        %s324 = scalar_select %p323, %s322, 31
        %s325 = smul.addr %s324, 8
        %s326 = scalar_lea.vmem %s7, %s325
        %s327 = smul.u32 16, %s17
      $region48: #{nsgnn_layer_forward.4} parent=39 // pred_fallthru
        _
    $region40: #{nsgnn_layer_forward.4} parent=5 // pred_fallthru
      _
    %p328 = scmp.le.s32.totalorder 1, %s17
    %p329 = scmp.lt.s32.totalorder %s17, 3
    %p330 = pnand %p328, %p329
    %p331 = pneg %p330
    // Predicated region
    $region49: #{nsgnn_layer_forward.4} parent=5 // pred_check
      _
    $region50: #{nsgnn_layer_forward.4} parent=5 // pred_check_branch
      %333 = sbr.rel (%p330) target = $region52
    $region51: #{nsgnn_layer_forward.4} parent=5 // pred_region
      %s334 = ssub.s32 %s17, 1
      %s335 = smul.u32 16, %s22
      %p336 = scmp.lt.s32.totalorder %s335, 31
      %s337 = scalar_select %p336, %s335, 31
      %s338 = smul.addr %s337, 8
      %s339 = scalar_lea.vmem %s0, %s338
      %p340 = pneg %p43
      %p341 = pneg %p40
      %p342 = pneg %p64
      %p343 = pneg %p61
      %p344 = pneg %p85
      %p345 = pneg %p82
      %p346 = pneg %p106
      %p347 = pneg %p103
      %p348 = pneg %p127
      %p349 = pneg %p124
      %p350 = pneg %p148
      %p351 = pneg %p145
      %p352 = pneg %p169
      %p353 = pneg %p166
      %s354 = smul.u32 16, %s22
      %p355 = scmp.lt.s32.totalorder %s354, 31
      %s356 = scalar_select %p355, %s354, 31
      %s357 = smul.addr %s356, 8
      %s358 = scalar_lea.vmem %s7, %s357
      %p359 = pneg %p195
      %p360 = pneg %p192
      %p361 = pneg %p221
      %p362 = pneg %p218
      %s363 = smul.u32 16, %s22
      %p364 = scmp.lt.s32.totalorder %s363, 31
      %s365 = scalar_select %p364, %s363, 31
      %s366 = smul.addr %s365, 8
      %s367 = scalar_lea.vmem %s8, %s366
      %p368 = pneg %p247
      %p369 = pneg %p244
      %p370 = scmp.lt.s32.totalorder %s22, 1
      %s371 = scalar_select %p370, %s22, 1
      %s372 = smul.addr %s371, 8
      %s373 = scalar_lea.vmem %s9, %s372
      %p374 = pneg %p273
      %p375 = pneg %p270
      %p376 = scmp.lt.s32.totalorder %s22, 1
      %s377 = scalar_select %p376, %s22, 1
      %s378 = smul.addr %s377, 8
      %s379 = scalar_lea.vmem %s10, %s378
      %s380 = smul.u32 16, %s22
      %p381 = scmp.lt.s32.totalorder %s380, 31
      %s382 = scalar_select %p381, %s380, 31
      %s383 = smul.addr %s382, 8
      %s384 = scalar_lea.vmem %s0, %s383
      %s385 = smul.u32 16, %s22
      %s386 = smul.u32 16, %s22
      %p387 = scmp.lt.s32.totalorder %s386, 31
      %s388 = scalar_select %p387, %s386, 31
      %s389 = smul.addr %s388, 8
      %s390 = scalar_lea.vmem %s7, %s389
      %s391 = smul.u32 16, %s22
      %s392 = smul.u32 16, %s22
      %p393 = scmp.lt.s32.totalorder %s392, 31
      %s394 = scalar_select %p393, %s392, 31
      %s395 = smul.addr %s394, 8
      %s396 = scalar_lea.vmem %s8, %s395
      %s397 = smul.u32 16, %s22
      %p398 = scmp.lt.s32.totalorder %s22, 1
      %s399 = scalar_select %p398, %s22, 1
      %s400 = smul.addr %s399, 8
      %s401 = scalar_lea.vmem %s9, %s400
      %p402 = scmp.lt.s32.totalorder %s22, 1
      %s403 = scalar_select %p402, %s22, 1
      %s404 = smul.addr %s403, 8
      %s405 = scalar_lea.vmem %s10, %s404
      %v407 = vld [vmem:[%s384] sm:$0xff]
      %v408 = vld [vmem:[%s384 + $0x8] sm:$0xff]
      %v409 = vld [vmem:[%s384 + $0x10] sm:$0xff]
      %v410 = vld [vmem:[%s384 + $0x18] sm:$0xff]
      %v411 = vld [vmem:[%s384 + $0x20] sm:$0xff]
      %v412 = vld [vmem:[%s384 + $0x28] sm:$0xff]
      %v413 = vld [vmem:[%s384 + $0x30] sm:$0xff]
      %v414 = vld [vmem:[%s384 + $0x38] sm:$0xff]
      %v415 = vld [vmem:[%s384 + $0x40] sm:$0xff]
      %v416 = vld [vmem:[%s384 + $0x48] sm:$0xff]
      %v417 = vld [vmem:[%s384 + $0x50] sm:$0xff]
      %v418 = vld [vmem:[%s384 + $0x58] sm:$0xff]
      %v419 = vld [vmem:[%s384 + $0x60] sm:$0xff]
      %v420 = vld [vmem:[%s384 + $0x68] sm:$0xff]
      %v421 = vld [vmem:[%s384 + $0x70] sm:$0xff]
      %v422 = vld [vmem:[%s384 + $0x78] sm:$0xff]
      %v423 = vld [vmem:[%s1] sm:$0x1]
      %v425 = vlaneseq
      %v426 = vshrl.u32 %v425, 7
      %v427 = vsub.s32 0, %v426
      %v428 = vrot.slane %v423, %v427
      %v430 = vmul.f32 %v407, %v428
      %v431 = vmul.f32 %v408, %v428
      %v432 = vmul.f32 %v409, %v428
      %v433 = vmul.f32 %v410, %v428
      %v434 = vmul.f32 %v411, %v428
      %v435 = vmul.f32 %v412, %v428
      %v436 = vmul.f32 %v413, %v428
      %v437 = vmul.f32 %v414, %v428
      %v438 = vmul.f32 %v415, %v428
      %v439 = vmul.f32 %v416, %v428
      %v440 = vmul.f32 %v417, %v428
      %v441 = vmul.f32 %v418, %v428
      %v442 = vmul.f32 %v419, %v428
      %v443 = vmul.f32 %v420, %v428
      %v444 = vmul.f32 %v421, %v428
      %v445 = vmul.f32 %v422, %v428
      %v446 = vld [vmem:[%s2] sm:$0x1]
      %v448 = vlaneseq
      %v449 = vshrl.u32 %v448, 7
      %v450 = vsub.s32 0, %v449
      %v451 = vrot.slane %v446, %v450
      %v453 = vadd.f32 %v430, %v451
      %v454 = vadd.f32 %v431, %v451
      %v455 = vadd.f32 %v432, %v451
      %v456 = vadd.f32 %v433, %v451
      %v457 = vadd.f32 %v434, %v451
      %v458 = vadd.f32 %v435, %v451
      %v459 = vadd.f32 %v436, %v451
      %v460 = vadd.f32 %v437, %v451
      %v461 = vadd.f32 %v438, %v451
      %v462 = vadd.f32 %v439, %v451
      %v463 = vadd.f32 %v440, %v451
      %v464 = vadd.f32 %v441, %v451
      %v465 = vadd.f32 %v442, %v451
      %v466 = vadd.f32 %v443, %v451
      %v467 = vadd.f32 %v444, %v451
      %v468 = vadd.f32 %v445, %v451
      %v469 = vpack.c.bf16 %v454, %v453
      %v470 = vpack.c.bf16 %v456, %v455
      %v471 = vpack.c.bf16 %v458, %v457
      %v472 = vpack.c.bf16 %v460, %v459
      %v473 = vpack.c.bf16 %v462, %v461
      %v474 = vpack.c.bf16 %v464, %v463
      %v475 = vpack.c.bf16 %v466, %v465
      %v476 = vpack.c.bf16 %v468, %v467
      %v477 = vld [vmem:[%s3] sm:$0xff]
      %v478 = vld [vmem:[%s3 + $0x8] sm:$0xff]
      %v479 = vld [vmem:[%s3 + $0x10] sm:$0xff]
      %v480 = vld [vmem:[%s3 + $0x18] sm:$0xff]
      %v481 = vld [vmem:[%s3 + $0x20] sm:$0xff]
      %v482 = vld [vmem:[%s3 + $0x28] sm:$0xff]
      %v483 = vld [vmem:[%s3 + $0x30] sm:$0xff]
      %v484 = vld [vmem:[%s3 + $0x38] sm:$0xff]
      %v485 = vld [vmem:[%s3 + $0x40] sm:$0xff]
      %v486 = vld [vmem:[%s3 + $0x48] sm:$0xff]
      %v487 = vld [vmem:[%s3 + $0x50] sm:$0xff]
      %v488 = vld [vmem:[%s3 + $0x58] sm:$0xff]
      %v489 = vld [vmem:[%s3 + $0x60] sm:$0xff]
      %v490 = vld [vmem:[%s3 + $0x68] sm:$0xff]
      %v491 = vld [vmem:[%s3 + $0x70] sm:$0xff]
      %v492 = vld [vmem:[%s3 + $0x78] sm:$0xff]
      %v493 = vld [vmem:[%s4] sm:$0x3]
      %v495 = vlaneseq
      %v496 = vshrl.u32 %v495, 7
      %v497 = vsub.s32 0, %v496
      %v498 = vrot.slane %v493, %v497
      %v499 = vlaneseq
      %v500 = vshrl.u32 %v499, 7
      %v501 = vsub.s32 1, %v500
      %v502 = vrot.slane %v493, %v501
      %v521 = vunpack.c.l.b16 %v477
      %v522 = vunpack.c.h.b16 %v477
      %v523 = vunpack.c.l.b16 %v478
      %v524 = vunpack.c.h.b16 %v478
      %v525 = vunpack.c.l.b16 %v479
      %v526 = vunpack.c.h.b16 %v479
      %v527 = vunpack.c.l.b16 %v480
      %v528 = vunpack.c.h.b16 %v480
      %v529 = vunpack.c.l.b16 %v481
      %v530 = vunpack.c.h.b16 %v481
      %v531 = vunpack.c.l.b16 %v482
      %v532 = vunpack.c.h.b16 %v482
      %v533 = vunpack.c.l.b16 %v483
      %v534 = vunpack.c.h.b16 %v483
      %v535 = vunpack.c.l.b16 %v484
      %v536 = vunpack.c.h.b16 %v484
      %v537 = vunpack.c.l.b16 %v485
      %v538 = vunpack.c.h.b16 %v485
      %v539 = vunpack.c.l.b16 %v486
      %v540 = vunpack.c.h.b16 %v486
      %v541 = vunpack.c.l.b16 %v487
      %v542 = vunpack.c.h.b16 %v487
      %v543 = vunpack.c.l.b16 %v488
      %v544 = vunpack.c.h.b16 %v488
      %v545 = vunpack.c.l.b16 %v489
      %v546 = vunpack.c.h.b16 %v489
      %v547 = vunpack.c.l.b16 %v490
      %v548 = vunpack.c.h.b16 %v490
      %v549 = vunpack.c.l.b16 %v491
      %v550 = vunpack.c.h.b16 %v491
      %v551 = vunpack.c.l.b16 %v492
      %v552 = vunpack.c.h.b16 %v492
      %v553 = vpack.c.b16 %v523, %v521
      %v554 = vpack.c.b16 %v524, %v522
      %v555 = vpack.c.b16 %v527, %v525
      %v556 = vpack.c.b16 %v528, %v526
      %v557 = vpack.c.b16 %v531, %v529
      %v558 = vpack.c.b16 %v532, %v530
      %v559 = vpack.c.b16 %v535, %v533
      %v560 = vpack.c.b16 %v536, %v534
      %v561 = vpack.c.b16 %v539, %v537
      %v562 = vpack.c.b16 %v540, %v538
      %v563 = vpack.c.b16 %v543, %v541
      %v564 = vpack.c.b16 %v544, %v542
      %v565 = vpack.c.b16 %v547, %v545
      %v566 = vpack.c.b16 %v548, %v546
      %v567 = vpack.c.b16 %v551, %v549
      %v568 = vpack.c.b16 %v552, %v550
      %585 = vmatprep.subr.bf16.mxu0 %v554
      %586 = vmatpush1.bf16.msra.mxu0 %v553
      %587 = vmatprep.subr.bf16.mxu0 %v556
      %588 = vmatpush1.bf16.msra.mxu0 %v555
      %589 = vmatprep.subr.bf16.mxu0 %v558
      %590 = vmatpush1.bf16.msra.mxu0 %v557
      %591 = vmatprep.subr.bf16.mxu0 %v560
      %592 = vmatpush1.bf16.msra.mxu0 %v559
      %593 = vmatprep.subr.bf16.mxu0 %v562
      %594 = vmatpush1.bf16.msra.mxu0 %v561
      %595 = vmatprep.subr.bf16.mxu0 %v564
      %596 = vmatpush1.bf16.msra.mxu0 %v563
      %597 = vmatprep.subr.bf16.mxu0 %v566
      %598 = vmatpush1.bf16.msra.mxu0 %v565
      %599 = vmatprep.subr.bf16.mxu0 %v568
      %600 = vmatpush1.bf16.msra.mxu0 %v567
      %601 = vmatprep.subr.bf16.mxu0 0
      %602 = vmatpush1.bf16.msra.mxu0 0
      %603 = vmatprep.subr.bf16.mxu0 0
      %604 = vmatpush1.bf16.msra.mxu0 0
      %605 = vmatprep.subr.bf16.mxu0 0
      %606 = vmatpush1.bf16.msra.mxu0 0
      %607 = vmatprep.subr.bf16.mxu0 0
      %608 = vmatpush1.bf16.msra.mxu0 0
      %609 = vmatprep.subr.bf16.mxu0 0
      %610 = vmatpush1.bf16.msra.mxu0 0
      %611 = vmatprep.subr.bf16.mxu0 0
      %612 = vmatpush1.bf16.msra.mxu0 0
      %613 = vmatprep.subr.bf16.mxu0 0
      %614 = vmatpush1.bf16.msra.mxu0 0
      %615 = vmatprep.subr.bf16.mxu0 0
      %616 = vmatpush1.bf16.msra.mxu0 0
      %617 = vmatprep.mubr.bf16.mxu0 0
      %618 = vmatmul.mubr.bf16.gmra.mrb[0].mxu0 %v469
      %v619 = vpop.f32.mrb[0].mxu0
      %v620 = vadd.f32 %v498, %v619
      %v621 = vpop.f32.mrb[0].mxu0
      %v622 = vadd.f32 %v502, %v621
      %v623 = vpop.f32.mrb[0].mxu0
      %v624 = vadd.f32 %v498, %v623
      %v625 = vpop.f32.mrb[0].mxu0
      %v626 = vadd.f32 %v502, %v625
      %627 = vmatprep.mubr.bf16.mxu0 0
      %628 = vmatmul.mubr.bf16.gmra.mrb[0].mxu0 %v470
      %v629 = vpop.f32.mrb[0].mxu0
      %v630 = vadd.f32 %v498, %v629
      %v631 = vpop.f32.mrb[0].mxu0
      %v632 = vadd.f32 %v502, %v631
      %v633 = vpop.f32.mrb[0].mxu0
      %v634 = vadd.f32 %v498, %v633
      %v635 = vpop.f32.mrb[0].mxu0
      %v636 = vadd.f32 %v502, %v635
      %637 = vmatprep.mubr.bf16.mxu0 0
      %638 = vmatmul.mubr.bf16.gmra.mrb[0].mxu0 %v471
      %v639 = vpop.f32.mrb[0].mxu0
      %v640 = vadd.f32 %v498, %v639
      %v641 = vpop.f32.mrb[0].mxu0
      %v642 = vadd.f32 %v502, %v641
      %v643 = vpop.f32.mrb[0].mxu0
      %v644 = vadd.f32 %v498, %v643
      %v645 = vpop.f32.mrb[0].mxu0
      %v646 = vadd.f32 %v502, %v645
      %647 = vmatprep.mubr.bf16.mxu0 0
      %648 = vmatmul.mubr.bf16.gmra.mrb[0].mxu0 %v472
      %v649 = vpop.f32.mrb[0].mxu0
      %v650 = vadd.f32 %v498, %v649
      %v651 = vpop.f32.mrb[0].mxu0
      %v652 = vadd.f32 %v502, %v651
      %v653 = vpop.f32.mrb[0].mxu0
      %v654 = vadd.f32 %v498, %v653
      %v655 = vpop.f32.mrb[0].mxu0
      %v656 = vadd.f32 %v502, %v655
      %657 = vmatprep.mubr.bf16.mxu0 0
      %658 = vmatmul.mubr.bf16.gmra.mrb[0].mxu0 %v473
      %v659 = vpop.f32.mrb[0].mxu0
      %v660 = vadd.f32 %v498, %v659
      %v661 = vpop.f32.mrb[0].mxu0
      %v662 = vadd.f32 %v502, %v661
      %v663 = vpop.f32.mrb[0].mxu0
      %v664 = vadd.f32 %v498, %v663
      %v665 = vpop.f32.mrb[0].mxu0
      %v666 = vadd.f32 %v502, %v665
      %667 = vmatprep.mubr.bf16.mxu0 0
      %668 = vmatmul.mubr.bf16.gmra.mrb[0].mxu0 %v474
      %v669 = vpop.f32.mrb[0].mxu0
      %v670 = vadd.f32 %v498, %v669
      %v671 = vpop.f32.mrb[0].mxu0
      %v672 = vadd.f32 %v502, %v671
      %v673 = vpop.f32.mrb[0].mxu0
      %v674 = vadd.f32 %v498, %v673
      %v675 = vpop.f32.mrb[0].mxu0
      %v676 = vadd.f32 %v502, %v675
      %677 = vmatprep.mubr.bf16.mxu0 0
      %678 = vmatmul.mubr.bf16.gmra.mrb[0].mxu0 %v475
      %v679 = vpop.f32.mrb[0].mxu0
      %v680 = vadd.f32 %v498, %v679
      %v681 = vpop.f32.mrb[0].mxu0
      %v682 = vadd.f32 %v502, %v681
      %v683 = vpop.f32.mrb[0].mxu0
      %v684 = vadd.f32 %v498, %v683
      %v685 = vpop.f32.mrb[0].mxu0
      %v686 = vadd.f32 %v502, %v685
      %687 = vmatprep.mubr.bf16.mxu0 0
      %688 = vmatmul.mubr.bf16.gmra.mrb[0].mxu0 %v476
      %v689 = vpop.f32.mrb[0].mxu0
      %v690 = vadd.f32 %v498, %v689
      %v691 = vpop.f32.mrb[0].mxu0
      %v692 = vadd.f32 %v502, %v691
      %v693 = vpop.f32.mrb[0].mxu0
      %v694 = vadd.f32 %v498, %v693
      %v695 = vpop.f32.mrb[0].mxu0
      %v696 = vadd.f32 %v502, %v695
      %697 = vdwg.mxu0
      %v698 = vmax.f32 %v620, 0.0
      %v699 = vmax.f32 %v622, 0.0
      %v700 = vmax.f32 %v624, 0.0
      %v701 = vmax.f32 %v626, 0.0
      %v702 = vmax.f32 %v630, 0.0
      %v703 = vmax.f32 %v632, 0.0
      %v704 = vmax.f32 %v634, 0.0
      %v705 = vmax.f32 %v636, 0.0
      %v706 = vmax.f32 %v640, 0.0
      %v707 = vmax.f32 %v642, 0.0
      %v708 = vmax.f32 %v644, 0.0
      %v709 = vmax.f32 %v646, 0.0
      %v710 = vmax.f32 %v650, 0.0
      %v711 = vmax.f32 %v652, 0.0
      %v712 = vmax.f32 %v654, 0.0
      %v713 = vmax.f32 %v656, 0.0
      %v714 = vmax.f32 %v660, 0.0
      %v715 = vmax.f32 %v662, 0.0
      %v716 = vmax.f32 %v664, 0.0
      %v717 = vmax.f32 %v666, 0.0
      %v718 = vmax.f32 %v670, 0.0
      %v719 = vmax.f32 %v672, 0.0
      %v720 = vmax.f32 %v674, 0.0
      %v721 = vmax.f32 %v676, 0.0
      %v722 = vmax.f32 %v680, 0.0
      %v723 = vmax.f32 %v682, 0.0
      %v724 = vmax.f32 %v684, 0.0
      %v725 = vmax.f32 %v686, 0.0
      %v726 = vmax.f32 %v690, 0.0
      %v727 = vmax.f32 %v692, 0.0
      %v728 = vmax.f32 %v694, 0.0
      %v729 = vmax.f32 %v696, 0.0
      %v730 = vpack.c.bf16 %v700, %v698
      %v731 = vpack.c.bf16 %v701, %v699
      %v732 = vpack.c.bf16 %v704, %v702
      %v733 = vpack.c.bf16 %v705, %v703
      %v734 = vpack.c.bf16 %v708, %v706
      %v735 = vpack.c.bf16 %v709, %v707
      %v736 = vpack.c.bf16 %v712, %v710
      %v737 = vpack.c.bf16 %v713, %v711
      %v738 = vpack.c.bf16 %v716, %v714
      %v739 = vpack.c.bf16 %v717, %v715
      %v740 = vpack.c.bf16 %v720, %v718
      %v741 = vpack.c.bf16 %v721, %v719
      %v742 = vpack.c.bf16 %v724, %v722
      %v743 = vpack.c.bf16 %v725, %v723
      %v744 = vpack.c.bf16 %v728, %v726
      %v745 = vpack.c.bf16 %v729, %v727
      %v746 = vld [vmem:[%s5] sm:$0xf]
      %v747 = vld [vmem:[%s5 + $0x4] sm:$0xf]
      %v748 = vld [vmem:[%s5 + $0x8] sm:$0xf]
      %v749 = vld [vmem:[%s5 + $0xc] sm:$0xf]
      %v750 = vld [vmem:[%s5 + $0x10] sm:$0xf]
      %v751 = vld [vmem:[%s5 + $0x14] sm:$0xf]
      %v752 = vld [vmem:[%s5 + $0x18] sm:$0xf]
      %v753 = vld [vmem:[%s5 + $0x1c] sm:$0xf]
      %v754 = vld [vmem:[%s5 + $0x20] sm:$0xf]
      %v755 = vld [vmem:[%s5 + $0x24] sm:$0xf]
      %v756 = vld [vmem:[%s5 + $0x28] sm:$0xf]
      %v757 = vld [vmem:[%s5 + $0x2c] sm:$0xf]
      %v758 = vld [vmem:[%s5 + $0x30] sm:$0xf]
      %v759 = vld [vmem:[%s5 + $0x34] sm:$0xf]
      %v760 = vld [vmem:[%s5 + $0x38] sm:$0xf]
      %v761 = vld [vmem:[%s5 + $0x3c] sm:$0xf]
      %v762 = vld [vmem:[%s5 + $0x40] sm:$0xf]
      %v763 = vld [vmem:[%s5 + $0x44] sm:$0xf]
      %v764 = vld [vmem:[%s5 + $0x48] sm:$0xf]
      %v765 = vld [vmem:[%s5 + $0x4c] sm:$0xf]
      %v766 = vld [vmem:[%s5 + $0x50] sm:$0xf]
      %v767 = vld [vmem:[%s5 + $0x54] sm:$0xf]
      %v768 = vld [vmem:[%s5 + $0x58] sm:$0xf]
      %v769 = vld [vmem:[%s5 + $0x5c] sm:$0xf]
      %v770 = vld [vmem:[%s5 + $0x60] sm:$0xf]
      %v771 = vld [vmem:[%s5 + $0x64] sm:$0xf]
      %v772 = vld [vmem:[%s5 + $0x68] sm:$0xf]
      %v773 = vld [vmem:[%s5 + $0x6c] sm:$0xf]
      %v774 = vld [vmem:[%s5 + $0x70] sm:$0xf]
      %v775 = vld [vmem:[%s5 + $0x74] sm:$0xf]
      %v776 = vld [vmem:[%s5 + $0x78] sm:$0xf]
      %v777 = vld [vmem:[%s5 + $0x7c] sm:$0xf]
      %v778 = vld [vmem:[%s6] sm:$0x1]
      %v780 = vlaneseq
      %v781 = vshrl.u32 %v780, 7
      %v782 = vsub.s32 0, %v781
      %v783 = vrot.slane %v778, %v782
      %v817 = vunpack.c.l.b16 %v746
      %v818 = vunpack.c.l.b16 %v747
      %v819 = vunpack.c.l.b16 %v748
      %v820 = vunpack.c.l.b16 %v749
      %v821 = vunpack.c.l.b16 %v750
      %v822 = vunpack.c.l.b16 %v751
      %v823 = vunpack.c.l.b16 %v752
      %v824 = vunpack.c.l.b16 %v753
      %v825 = vunpack.c.l.b16 %v754
      %v826 = vunpack.c.l.b16 %v755
      %v827 = vunpack.c.l.b16 %v756
      %v828 = vunpack.c.l.b16 %v757
      %v829 = vunpack.c.l.b16 %v758
      %v830 = vunpack.c.l.b16 %v759
      %v831 = vunpack.c.l.b16 %v760
      %v832 = vunpack.c.l.b16 %v761
      %v833 = vunpack.c.l.b16 %v762
      %v834 = vunpack.c.l.b16 %v763
      %v835 = vunpack.c.l.b16 %v764
      %v836 = vunpack.c.l.b16 %v765
      %v837 = vunpack.c.l.b16 %v766
      %v838 = vunpack.c.l.b16 %v767
      %v839 = vunpack.c.l.b16 %v768
      %v840 = vunpack.c.l.b16 %v769
      %v841 = vunpack.c.l.b16 %v770
      %v842 = vunpack.c.l.b16 %v771
      %v843 = vunpack.c.l.b16 %v772
      %v844 = vunpack.c.l.b16 %v773
      %v845 = vunpack.c.l.b16 %v774
      %v846 = vunpack.c.l.b16 %v775
      %v847 = vunpack.c.l.b16 %v776
      %v848 = vunpack.c.l.b16 %v777
      %v849 = vpack.c.b16 %v818, %v817
      %v850 = vpack.c.b16 %v820, %v819
      %v851 = vpack.c.b16 %v822, %v821
      %v852 = vpack.c.b16 %v824, %v823
      %v853 = vpack.c.b16 %v826, %v825
      %v854 = vpack.c.b16 %v828, %v827
      %v855 = vpack.c.b16 %v830, %v829
      %v856 = vpack.c.b16 %v832, %v831
      %v857 = vpack.c.b16 %v834, %v833
      %v858 = vpack.c.b16 %v836, %v835
      %v859 = vpack.c.b16 %v838, %v837
      %v860 = vpack.c.b16 %v840, %v839
      %v861 = vpack.c.b16 %v842, %v841
      %v862 = vpack.c.b16 %v844, %v843
      %v863 = vpack.c.b16 %v846, %v845
      %v864 = vpack.c.b16 %v848, %v847
      %881 = vmatprep.subr.bf16.mxu0 0
      %882 = vmatpush1.bf16.msra.mxu0 %v849
      %883 = vmatprep.subr.bf16.mxu0 0
      %884 = vmatpush1.bf16.msra.mxu0 %v850
      %885 = vmatprep.subr.bf16.mxu0 0
      %886 = vmatpush1.bf16.msra.mxu0 %v851
      %887 = vmatprep.subr.bf16.mxu0 0
      %888 = vmatpush1.bf16.msra.mxu0 %v852
      %889 = vmatprep.subr.bf16.mxu0 0
      %890 = vmatpush1.bf16.msra.mxu0 %v853
      %891 = vmatprep.subr.bf16.mxu0 0
      %892 = vmatpush1.bf16.msra.mxu0 %v854
      %893 = vmatprep.subr.bf16.mxu0 0
      %894 = vmatpush1.bf16.msra.mxu0 %v855
      %895 = vmatprep.subr.bf16.mxu0 0
      %896 = vmatpush1.bf16.msra.mxu0 %v856
      %897 = vmatprep.subr.bf16.mxu0 0
      %898 = vmatpush1.bf16.msra.mxu0 %v857
      %899 = vmatprep.subr.bf16.mxu0 0
      %900 = vmatpush1.bf16.msra.mxu0 %v858
      %901 = vmatprep.subr.bf16.mxu0 0
      %902 = vmatpush1.bf16.msra.mxu0 %v859
      %903 = vmatprep.subr.bf16.mxu0 0
      %904 = vmatpush1.bf16.msra.mxu0 %v860
      %905 = vmatprep.subr.bf16.mxu0 0
      %906 = vmatpush1.bf16.msra.mxu0 %v861
      %907 = vmatprep.subr.bf16.mxu0 0
      %908 = vmatpush1.bf16.msra.mxu0 %v862
      %909 = vmatprep.subr.bf16.mxu0 0
      %910 = vmatpush1.bf16.msra.mxu0 %v863
      %911 = vmatprep.subr.bf16.mxu0 0
      %912 = vmatpush1.bf16.msra.mxu0 %v864
      %913 = vmatprep.mubr.bf16.mxu0 %v731
      %914 = vmatmul.mubr.bf16.gmra.mrb[0].mxu0 %v730
      %v915 = vpop.f32.mrb[0].mxu0
      %v916 = vadd.f32 %v783, %v915
      %v917 = vpop.f32.mrb[0].mxu0
      %v918 = vpop.f32.mrb[0].mxu0
      %v919 = vadd.f32 %v783, %v918
      %v920 = vpop.f32.mrb[0].mxu0
      %921 = vmatprep.mubr.bf16.mxu0 %v733
      %922 = vmatmul.mubr.bf16.gmra.mrb[0].mxu0 %v732
      %v923 = vpop.f32.mrb[0].mxu0
      %v924 = vadd.f32 %v783, %v923
      %v925 = vpop.f32.mrb[0].mxu0
      %v926 = vpop.f32.mrb[0].mxu0
      %v927 = vadd.f32 %v783, %v926
      %v928 = vpop.f32.mrb[0].mxu0
      %929 = vmatprep.mubr.bf16.mxu0 %v735
      %930 = vmatmul.mubr.bf16.gmra.mrb[0].mxu0 %v734
      %v931 = vpop.f32.mrb[0].mxu0
      %v932 = vadd.f32 %v783, %v931
      %v933 = vpop.f32.mrb[0].mxu0
      %v934 = vpop.f32.mrb[0].mxu0
      %v935 = vadd.f32 %v783, %v934
      %v936 = vpop.f32.mrb[0].mxu0
      %937 = vmatprep.mubr.bf16.mxu0 %v737
      %938 = vmatmul.mubr.bf16.gmra.mrb[0].mxu0 %v736
      %v939 = vpop.f32.mrb[0].mxu0
      %v940 = vadd.f32 %v783, %v939
      %v941 = vpop.f32.mrb[0].mxu0
      %v942 = vpop.f32.mrb[0].mxu0
      %v943 = vadd.f32 %v783, %v942
      %v944 = vpop.f32.mrb[0].mxu0
      %945 = vmatprep.mubr.bf16.mxu0 %v739
      %946 = vmatmul.mubr.bf16.gmra.mrb[0].mxu0 %v738
      %v947 = vpop.f32.mrb[0].mxu0
      %v948 = vadd.f32 %v783, %v947
      %v949 = vpop.f32.mrb[0].mxu0
      %v950 = vpop.f32.mrb[0].mxu0
      %v951 = vadd.f32 %v783, %v950
      %v952 = vpop.f32.mrb[0].mxu0
      %953 = vmatprep.mubr.bf16.mxu0 %v741
      %954 = vmatmul.mubr.bf16.gmra.mrb[0].mxu0 %v740
      %v955 = vpop.f32.mrb[0].mxu0
      %v956 = vadd.f32 %v783, %v955
      %v957 = vpop.f32.mrb[0].mxu0
      %v958 = vpop.f32.mrb[0].mxu0
      %v959 = vadd.f32 %v783, %v958
      %v960 = vpop.f32.mrb[0].mxu0
      %961 = vmatprep.mubr.bf16.mxu0 %v743
      %962 = vmatmul.mubr.bf16.gmra.mrb[0].mxu0 %v742
      %v963 = vpop.f32.mrb[0].mxu0
      %v964 = vadd.f32 %v783, %v963
      %v965 = vpop.f32.mrb[0].mxu0
      %v966 = vpop.f32.mrb[0].mxu0
      %v967 = vadd.f32 %v783, %v966
      %v968 = vpop.f32.mrb[0].mxu0
      %969 = vmatprep.mubr.bf16.mxu0 %v745
      %970 = vmatmul.mubr.bf16.gmra.mrb[0].mxu0 %v744
      %v971 = vpop.f32.mrb[0].mxu0
      %v972 = vadd.f32 %v783, %v971
      %v973 = vpop.f32.mrb[0].mxu0
      %v974 = vpop.f32.mrb[0].mxu0
      %v975 = vadd.f32 %v783, %v974
      %v976 = vpop.f32.mrb[0].mxu0
      %977 = vdwg.mxu0
      %v978 = vadd.f32 %v453, %v916
      %v979 = vadd.f32 %v454, %v919
      %v980 = vadd.f32 %v455, %v924
      %v981 = vadd.f32 %v456, %v927
      %v982 = vadd.f32 %v457, %v932
      %v983 = vadd.f32 %v458, %v935
      %v984 = vadd.f32 %v459, %v940
      %v985 = vadd.f32 %v460, %v943
      %v986 = vadd.f32 %v461, %v948
      %v987 = vadd.f32 %v462, %v951
      %v988 = vadd.f32 %v463, %v956
      %v989 = vadd.f32 %v464, %v959
      %v990 = vadd.f32 %v465, %v964
      %v991 = vadd.f32 %v466, %v967
      %v992 = vadd.f32 %v467, %v972
      %v993 = vadd.f32 %v468, %v975
      %994 = vst [vmem:[%s396] sm:$0xff] %v978
      %995 = vst [vmem:[%s396 + $0x8] sm:$0xff] %v979
      %996 = vst [vmem:[%s396 + $0x10] sm:$0xff] %v980
      %997 = vst [vmem:[%s396 + $0x18] sm:$0xff] %v981
      %998 = vst [vmem:[%s396 + $0x20] sm:$0xff] %v982
      %999 = vst [vmem:[%s396 + $0x28] sm:$0xff] %v983
      %1000 = vst [vmem:[%s396 + $0x30] sm:$0xff] %v984
      %1001 = vst [vmem:[%s396 + $0x38] sm:$0xff] %v985
      %1002 = vst [vmem:[%s396 + $0x40] sm:$0xff] %v986
      %1003 = vst [vmem:[%s396 + $0x48] sm:$0xff] %v987
      %1004 = vst [vmem:[%s396 + $0x50] sm:$0xff] %v988
      %1005 = vst [vmem:[%s396 + $0x58] sm:$0xff] %v989
      %1006 = vst [vmem:[%s396 + $0x60] sm:$0xff] %v990
      %1007 = vst [vmem:[%s396 + $0x68] sm:$0xff] %v991
      %1008 = vst [vmem:[%s396 + $0x70] sm:$0xff] %v992
      %1009 = vst [vmem:[%s396 + $0x78] sm:$0xff] %v993
      %v1010 = vld [vmem:[%s390] sm:$0xff]
      %v1011 = vld [vmem:[%s390 + $0x8] sm:$0xff]
      %v1012 = vld [vmem:[%s390 + $0x10] sm:$0xff]
      %v1013 = vld [vmem:[%s390 + $0x18] sm:$0xff]
      %v1014 = vld [vmem:[%s390 + $0x20] sm:$0xff]
      %v1015 = vld [vmem:[%s390 + $0x28] sm:$0xff]
      %v1016 = vld [vmem:[%s390 + $0x30] sm:$0xff]
      %v1017 = vld [vmem:[%s390 + $0x38] sm:$0xff]
      %v1018 = vld [vmem:[%s390 + $0x40] sm:$0xff]
      %v1019 = vld [vmem:[%s390 + $0x48] sm:$0xff]
      %v1020 = vld [vmem:[%s390 + $0x50] sm:$0xff]
      %v1021 = vld [vmem:[%s390 + $0x58] sm:$0xff]
      %v1022 = vld [vmem:[%s390 + $0x60] sm:$0xff]
      %v1023 = vld [vmem:[%s390 + $0x68] sm:$0xff]
      %v1024 = vld [vmem:[%s390 + $0x70] sm:$0xff]
      %v1025 = vld [vmem:[%s390 + $0x78] sm:$0xff]
      %1027 = vset.pattern.permute.xlu0 0
      %1028 = vperm.xlu0 %1027, %v1010
      %v1029 = vpop.permute.xlu0 %1028
      %1032 = vset.pattern.permute.xlu0 0
      %1033 = vperm.xlu0 %1032, %v1011
      %v1034 = vpop.permute.xlu0 %1033
      %1037 = vset.pattern.permute.xlu0 0
      %1038 = vperm.xlu0 %1037, %v1012
      %v1039 = vpop.permute.xlu0 %1038
      %1042 = vset.pattern.permute.xlu0 0
      %1043 = vperm.xlu0 %1042, %v1013
      %v1044 = vpop.permute.xlu0 %1043
      %1047 = vset.pattern.permute.xlu0 0
      %1048 = vperm.xlu0 %1047, %v1014
      %v1049 = vpop.permute.xlu0 %1048
      %1052 = vset.pattern.permute.xlu0 0
      %1053 = vperm.xlu0 %1052, %v1015
      %v1054 = vpop.permute.xlu0 %1053
      %1057 = vset.pattern.permute.xlu0 0
      %1058 = vperm.xlu0 %1057, %v1016
      %v1059 = vpop.permute.xlu0 %1058
      %1062 = vset.pattern.permute.xlu0 0
      %1063 = vperm.xlu0 %1062, %v1017
      %v1064 = vpop.permute.xlu0 %1063
      %1067 = vset.pattern.permute.xlu0 0
      %1068 = vperm.xlu0 %1067, %v1018
      %v1069 = vpop.permute.xlu0 %1068
      %1072 = vset.pattern.permute.xlu0 0
      %1073 = vperm.xlu0 %1072, %v1019
      %v1074 = vpop.permute.xlu0 %1073
      %1077 = vset.pattern.permute.xlu0 0
      %1078 = vperm.xlu0 %1077, %v1020
      %v1079 = vpop.permute.xlu0 %1078
      %1082 = vset.pattern.permute.xlu0 0
      %1083 = vperm.xlu0 %1082, %v1021
      %v1084 = vpop.permute.xlu0 %1083
      %1087 = vset.pattern.permute.xlu0 0
      %1088 = vperm.xlu0 %1087, %v1022
      %v1089 = vpop.permute.xlu0 %1088
      %1092 = vset.pattern.permute.xlu0 0
      %1093 = vperm.xlu0 %1092, %v1023
      %v1094 = vpop.permute.xlu0 %1093
      %1097 = vset.pattern.permute.xlu0 0
      %1098 = vperm.xlu0 %1097, %v1024
      %v1099 = vpop.permute.xlu0 %1098
      %1102 = vset.pattern.permute.xlu0 0
      %1103 = vperm.xlu0 %1102, %v1025
      %v1104 = vpop.permute.xlu0 %1103
      %v1106 = vmul.f32 %v978, %v1029
      %v1107 = vmul.f32 %v979, %v1034
      %v1108 = vmul.f32 %v980, %v1039
      %v1109 = vmul.f32 %v981, %v1044
      %v1110 = vmul.f32 %v982, %v1049
      %v1111 = vmul.f32 %v983, %v1054
      %v1112 = vmul.f32 %v984, %v1059
      %v1113 = vmul.f32 %v985, %v1064
      %v1114 = vmul.f32 %v986, %v1069
      %v1115 = vmul.f32 %v987, %v1074
      %v1116 = vmul.f32 %v988, %v1079
      %v1117 = vmul.f32 %v989, %v1084
      %v1118 = vmul.f32 %v990, %v1089
      %v1119 = vmul.f32 %v991, %v1094
      %v1120 = vmul.f32 %v992, %v1099
      %v1121 = vmul.f32 %v993, %v1104
      %v1122 = vadd.f32 %v1106, %v1107
      %v1123 = vadd.f32 %v1122, %v1108
      %v1124 = vadd.f32 %v1123, %v1109
      %v1125 = vadd.f32 %v1124, %v1110
      %v1126 = vadd.f32 %v1125, %v1111
      %v1127 = vadd.f32 %v1126, %v1112
      %v1128 = vadd.f32 %v1127, %v1113
      %v1129 = vadd.f32 %v1128, %v1114
      %v1130 = vadd.f32 %v1129, %v1115
      %v1131 = vadd.f32 %v1130, %v1116
      %v1132 = vadd.f32 %v1131, %v1117
      %v1133 = vadd.f32 %v1132, %v1118
      %v1134 = vadd.f32 %v1133, %v1119
      %v1135 = vadd.f32 %v1134, %v1120
      %v1136 = vadd.f32 %v1135, %v1121
      %v1137 = vrot.slane %v1136, 4
      %v1138 = vadd.f32 %v1136, %v1137
      %v1139 = vrot.slane %v1138, 2
      %v1140 = vadd.f32 %v1138, %v1139
      %v1141 = vrot.slane %v1140, 1
      %v1142 = vadd.f32 %v1140, %v1141
      %1143 = vst [vmem:[%s401] sm:$0xff] %v1142
      %v1144 = vmul.f32 %v1106, %v978
      %v1145 = vmul.f32 %v1107, %v979
      %v1146 = vmul.f32 %v1108, %v980
      %v1147 = vmul.f32 %v1109, %v981
      %v1148 = vmul.f32 %v1110, %v982
      %v1149 = vmul.f32 %v1111, %v983
      %v1150 = vmul.f32 %v1112, %v984
      %v1151 = vmul.f32 %v1113, %v985
      %v1152 = vmul.f32 %v1114, %v986
      %v1153 = vmul.f32 %v1115, %v987
      %v1154 = vmul.f32 %v1116, %v988
      %v1155 = vmul.f32 %v1117, %v989
      %v1156 = vmul.f32 %v1118, %v990
      %v1157 = vmul.f32 %v1119, %v991
      %v1158 = vmul.f32 %v1120, %v992
      %v1159 = vmul.f32 %v1121, %v993
      %v1160 = vadd.f32 %v1144, %v1145
      %v1161 = vadd.f32 %v1160, %v1146
      %v1162 = vadd.f32 %v1161, %v1147
      %v1163 = vadd.f32 %v1162, %v1148
      %v1164 = vadd.f32 %v1163, %v1149
      %v1165 = vadd.f32 %v1164, %v1150
      %v1166 = vadd.f32 %v1165, %v1151
      %v1167 = vadd.f32 %v1166, %v1152
      %v1168 = vadd.f32 %v1167, %v1153
      %v1169 = vadd.f32 %v1168, %v1154
      %v1170 = vadd.f32 %v1169, %v1155
      %v1171 = vadd.f32 %v1170, %v1156
      %v1172 = vadd.f32 %v1171, %v1157
      %v1173 = vadd.f32 %v1172, %v1158
      %v1174 = vadd.f32 %v1173, %v1159
      %v1175 = vrot.slane %v1174, 4
      %v1176 = vadd.f32 %v1174, %v1175
      %v1177 = vrot.slane %v1176, 2
      %v1178 = vadd.f32 %v1176, %v1177
      %v1179 = vrot.slane %v1178, 1
      %v1180 = vadd.f32 %v1178, %v1179
      %1181 = vst [vmem:[%s405] sm:$0xff] %v1180
      %s1182 = smul.u32 16, %s22
      %p1183 = scmp.lt.s32.totalorder %s1182, 31
      %s1184 = scalar_select %p1183, %s1182, 31
      %s1185 = smul.addr %s1184, 8
      %s1186 = scalar_lea.vmem %s8, %s1185
      %p1187 = scmp.lt.s32.totalorder %s22, 1
      %s1188 = scalar_select %p1187, %s22, 1
      %s1189 = smul.addr %s1188, 8
      %s1190 = scalar_lea.vmem %s9, %s1189
      %p1191 = scmp.lt.s32.totalorder %s22, 1
      %s1192 = scalar_select %p1191, %s22, 1
      %s1193 = smul.addr %s1192, 8
      %s1194 = scalar_lea.vmem %s10, %s1193
      // Predicated region
      $region53: #{nsgnn_layer_forward.4} parent=51 // pred_check
        %p1195 = pneg %p218
      $region54: #{nsgnn_layer_forward.4} parent=51 // pred_check_branch
        %1197 = sbr.rel (%p1195) target = $region56
      $region55: #{nsgnn_layer_forward.4} parent=51 // pred_region
        %s1198 = smul.u32 16, %s22
      $region56: #{nsgnn_layer_forward.4} parent=51 // pred_fallthru
        _
      // Predicated region
      $region57: #{nsgnn_layer_forward.4} parent=51 // pred_check
        %p1199 = pneg %p244
      $region58: #{nsgnn_layer_forward.4} parent=51 // pred_check_branch
        %1201 = sbr.rel (%p1199) target = $region60
      $region59: #{nsgnn_layer_forward.4} parent=51 // pred_region
        _
      $region60: #{nsgnn_layer_forward.4} parent=51 // pred_fallthru
        _
      // Predicated region
      $region61: #{nsgnn_layer_forward.4} parent=51 // pred_check
        %p1202 = pneg %p270
      $region62: #{nsgnn_layer_forward.4} parent=51 // pred_check_branch
        %1204 = sbr.rel (%p1202) target = $region64
      $region63: #{nsgnn_layer_forward.4} parent=51 // pred_region
        _
      $region64: #{nsgnn_layer_forward.4} parent=51 // pred_fallthru
        _
    $region52: #{nsgnn_layer_forward.4} parent=5 // pred_fallthru
      _
    %p1205 = scmp.le.s32.totalorder 2, %s17
    // Predicated region
    $region65: #{nsgnn_layer_forward.4} parent=5 // pred_check
      %p1206 = pneg %p1205
    $region66: #{nsgnn_layer_forward.4} parent=5 // pred_check_branch
      %1208 = sbr.rel (%p1206) target = $region68
    $region67: #{nsgnn_layer_forward.4} parent=5 // pred_region
      %s1209 = ssub.s32 %s17, 2
      // Predicated region
      $region69: #{nsgnn_layer_forward.4} parent=67 // pred_check
        %p1210 = pneg %p224
      $region70: #{nsgnn_layer_forward.4} parent=67 // pred_check_branch
        %1212 = sbr.rel (%p1210) target = $region72
      $region71: #{nsgnn_layer_forward.4} parent=67 // pred_region
        %s1213 = smul.u32 16, %s23
        %p1214 = scmp.lt.s32.totalorder %s1213, 31
        %s1215 = scalar_select %p1214, %s1213, 31
        %s1216 = smul.addr %s1215, 8
        %s1217 = scalar_lea.vmem %s8, %s1216
      $region72: #{nsgnn_layer_forward.4} parent=67 // pred_fallthru
        _
      // Predicated region
      $region73: #{nsgnn_layer_forward.4} parent=67 // pred_check
        %p1218 = pneg %p250
      $region74: #{nsgnn_layer_forward.4} parent=67 // pred_check_branch
        %1220 = sbr.rel (%p1218) target = $region76
      $region75: #{nsgnn_layer_forward.4} parent=67 // pred_region
        %p1221 = scmp.lt.s32.totalorder %s23, 1
        %s1222 = scalar_select %p1221, %s23, 1
        %s1223 = smul.addr %s1222, 8
        %s1224 = scalar_lea.vmem %s9, %s1223
      $region76: #{nsgnn_layer_forward.4} parent=67 // pred_fallthru
        _
      // Predicated region
      $region77: #{nsgnn_layer_forward.4} parent=67 // pred_check
        %p1225 = pneg %p276
      $region78: #{nsgnn_layer_forward.4} parent=67 // pred_check_branch
        %1227 = sbr.rel (%p1225) target = $region80
      $region79: #{nsgnn_layer_forward.4} parent=67 // pred_region
        %p1228 = scmp.lt.s32.totalorder %s23, 1
        %s1229 = scalar_select %p1228, %s23, 1
        %s1230 = smul.addr %s1229, 8
        %s1231 = scalar_lea.vmem %s10, %s1230
      $region80: #{nsgnn_layer_forward.4} parent=67 // pred_fallthru
        _
    $region68: #{nsgnn_layer_forward.4} parent=5 // pred_fallthru
      _
  $region6: #{nsgnn_layer_forward.4} parent=0 // loop_footer
    %s21 = sadd.s32 1, %s17
  $region7: #{nsgnn_layer_forward.4} parent=0 // loop_footer_branch
    %16 = sbr.rel target = $region3
  $region8: #{nsgnn_layer_forward.4} parent=0 // loop_exit
    _

// kernel: nsgnn_layer_forward.3
$region0: #{nsgnn_layer_forward.3}
  #allocation0 [shape = 'u32[]', space=smem, size = 0x4, offset = 0x4, fixed_abs, tag = 'smem constant byte address 0x4 - core index']
  #allocation1 [shape = 'u32[144,128]{1,0:T(1,128)}', space=vmem, size = 0x12000, scoped, tag = 'internal scratch']
  #allocation2 [shape = 'f32[128,256]{1,0:T(8,128)}', space=vmem, size = 0x20000, scoped, tag = 'scratch operand']
  %s0 = inlined_call_operand.vmem [shape: bf16[256,256], index: 0, kind: input, shape index: {}]
  %s1 = inlined_call_operand.vmem [shape: bf16[256,128], index: 1, kind: input, shape index: {}, may-alias: {1,2}]
  %s2 = inlined_call_operand.vmem [shape: bf16[256,128], index: 2, kind: input, shape index: {}, may-alias: {1,2}]
  %s3 = inlined_call_operand.vmem [shape: bf16[256,128], index: 3, kind: input, shape index: {}]
  %s4 = inlined_call_operand.vmem [shape: f32[1,128], index: 4, kind: input, shape index: {}]
  %s5 = inlined_call_operand.vmem [shape: f32[256,1], index: 5, kind: input, shape index: {}]
  %s6 = inlined_call_operand.vmem [shape: f32[256,128], index: 6, kind: output, shape index: {0}]
  %s7 = inlined_call_operand.vmem [shape: f32[16,128], index: 7, kind: output, shape index: {1}]
  %s8 = inlined_call_operand.vmem [shape: f32[16,128], index: 8, kind: output, shape index: {2}]
  %9 = xla_tuple %s6, %s7, %s8
  %s10 = sld [smem:[#allocation0]]
  $region122: #{nsgnn_layer_forward.3} parent=0
    _
  %s12 = ssub.s32 1, %s10
  %s13 = scalar_select 0, %s12, %s10
  $region1: #{nsgnn_layer_forward.3} parent=0
    #allocation3 [shape = 'u8[65536]{0}', space=vmem, size = 0x10000, scoped, tag = 'input window, operand 0']
    loop: start=0, step=1, limit=6
    $region2: #{nsgnn_layer_forward.3} parent=1 // loop_pre_header
      _
    $region3: #{nsgnn_layer_forward.3} parent=1 // loop_header
      %s15 = sphi 0, %s19
      %p16 = scmp.ge.s32.totalorder %s15, 6
      %s22 = sphi 0, %s34
      %s23 = sphi 0, %s30
      %s24 = sphi 0, %s22
      %s25 = sphi 0, %s23
      %s26 = sphi 0, %s24
      %s27 = sphi 0, %s25
      %s39 = sphi 0, %s41
      %s42 = sphi 0, %s39
      %s43 = sphi 0, %s42
      %s59 = sphi 0, %s43
      %s65 = sphi 0, %s67
      %s68 = sphi 0, %s65
      %s69 = sphi 0, %s68
      %s85 = sphi 0, %s69
      %s91 = sphi 0, %s93
      %s94 = sphi 0, %s91
      %s95 = sphi 0, %s94
      %s111 = sphi 0, %s95
      %s115 = sphi 0, %s115
      %s117 = sphi 0, %s115
      %s118 = sphi 0, %s117
      %s132 = sphi 0, %s118
      %s136 = sphi 0, %s136
      %s138 = sphi 0, %s136
      %s139 = sphi 0, %s138
      %s153 = sphi 0, %s139
      %s159 = sphi 0, %s161
      %s162 = sphi 0, %s159
      %s163 = sphi 0, %s162
      %s179 = sphi 0, %s163
      %s185 = sphi 0, %s187
      %s188 = sphi 0, %s185
      %s189 = sphi 0, %s188
      %s205 = sphi 0, %s189
      %s211 = sphi 0, %s213
      %s214 = sphi 0, %s211
      %s215 = sphi 0, %s214
      %s231 = sphi 0, %s215
      %s237 = sphi 0, %s239
      %s240 = sphi 0, %s237
      %s241 = sphi 0, %s240
      %s257 = sphi 0, %s241
    $region4: #{nsgnn_layer_forward.3} parent=1 // loop_header_branch
      %18 = sbr.rel (%p16) target = $region8
    $region5: #{nsgnn_layer_forward.3} parent=1 // loop_body
      %s20 = ssub.s32 %s15, 1
      %s21 = ssub.s32 %s15, 2
      %s28 = sadd.s32 1, %s23
      %p29 = scmp.ge.s32.totalorder %s28, 2
      %s30 = scalar_select %p29, 0, %s28
      %s31 = sadd.s32 1, %s22
      %s32 = scalar_select %p29, %s31, %s22
      %p33 = scmp.ge.s32.totalorder %s32, 2
      %s34 = scalar_select %p33, 0, %s32
      %s35 = ssub.s32 %s22, %s34
      %s36 = ssub.s32 %s23, %s30
      %s37 = sor.u32 %s35, %s36
      %p38 = scmp.eq.s32.totalorder %s37, 0
      %s40 = sadd.s32 %s39, 1
      %s41 = scalar_select %p38, %s39, %s40
      %p44 = pneg %p38
      %p45 = scmp.eq.s32.totalorder %s15, 3
      %p46 = por %p44, %p45
      %p47 = scmp.ne.s32.totalorder %s39, %s42
      %p48 = scmp.eq.s32.totalorder %s15, 0
      %p49 = por %p47, %p48
      %p50 = scmp.ne.s32.totalorder %s39, %s42
      %p51 = scmp.eq.s32.totalorder %s20, 3
      %p52 = por %p50, %p51
      %p53 = scmp.ne.s32.totalorder %s42, %s43
      %p54 = scmp.eq.s32.totalorder %s20, 0
      %p55 = por %p53, %p54
      %p56 = scmp.ne.s32.totalorder %s42, %s43
      %p57 = scmp.eq.s32.totalorder %s21, 3
      %p58 = por %p56, %p57
      %p60 = scmp.ne.s32.totalorder %s43, %s59
      %p61 = scmp.eq.s32.totalorder %s21, 0
      %p62 = por %p60, %p61
      %s63 = ssub.s32 %s23, %s30
      %p64 = scmp.eq.s32.totalorder %s63, 0
      %s66 = sadd.s32 %s65, 1
      %s67 = scalar_select %p64, %s65, %s66
      %p70 = pneg %p64
      %p71 = scmp.eq.s32.totalorder %s15, 3
      %p72 = por %p70, %p71
      %p73 = scmp.ne.s32.totalorder %s65, %s68
      %p74 = scmp.eq.s32.totalorder %s15, 0
      %p75 = por %p73, %p74
      %p76 = scmp.ne.s32.totalorder %s65, %s68
      %p77 = scmp.eq.s32.totalorder %s20, 3
      %p78 = por %p76, %p77
      %p79 = scmp.ne.s32.totalorder %s68, %s69
      %p80 = scmp.eq.s32.totalorder %s20, 0
      %p81 = por %p79, %p80
      %p82 = scmp.ne.s32.totalorder %s68, %s69
      %p83 = scmp.eq.s32.totalorder %s21, 3
      %p84 = por %p82, %p83
      %p86 = scmp.ne.s32.totalorder %s69, %s85
      %p87 = scmp.eq.s32.totalorder %s21, 0
      %p88 = por %p86, %p87
      %s89 = ssub.s32 %s22, %s34
      %p90 = scmp.eq.s32.totalorder %s89, 0
      %s92 = sadd.s32 %s91, 1
      %s93 = scalar_select %p90, %s91, %s92
      %p96 = pneg %p90
      %p97 = scmp.eq.s32.totalorder %s15, 3
      %p98 = por %p96, %p97
      %p99 = scmp.ne.s32.totalorder %s91, %s94
      %p100 = scmp.eq.s32.totalorder %s15, 0
      %p101 = por %p99, %p100
      %p102 = scmp.ne.s32.totalorder %s91, %s94
      %p103 = scmp.eq.s32.totalorder %s20, 3
      %p104 = por %p102, %p103
      %p105 = scmp.ne.s32.totalorder %s94, %s95
      %p106 = scmp.eq.s32.totalorder %s20, 0
      %p107 = por %p105, %p106
      %p108 = scmp.ne.s32.totalorder %s94, %s95
      %p109 = scmp.eq.s32.totalorder %s21, 3
      %p110 = por %p108, %p109
      %p112 = scmp.ne.s32.totalorder %s95, %s111
      %p113 = scmp.eq.s32.totalorder %s21, 0
      %p114 = por %p112, %p113
      %s116 = sadd.s32 %s115, 1
      %p119 = scmp.eq.s32.totalorder %s15, 3
      %p120 = scmp.ne.s32.totalorder %s115, %s117
      %p121 = scmp.eq.s32.totalorder %s15, 0
      %p122 = por %p120, %p121
      %p123 = scmp.ne.s32.totalorder %s115, %s117
      %p124 = scmp.eq.s32.totalorder %s20, 3
      %p125 = por %p123, %p124
      %p126 = scmp.ne.s32.totalorder %s117, %s118
      %p127 = scmp.eq.s32.totalorder %s20, 0
      %p128 = por %p126, %p127
      %p129 = scmp.ne.s32.totalorder %s117, %s118
      %p130 = scmp.eq.s32.totalorder %s21, 3
      %p131 = por %p129, %p130
      %p133 = scmp.ne.s32.totalorder %s118, %s132
      %p134 = scmp.eq.s32.totalorder %s21, 0
      %p135 = por %p133, %p134
      %s137 = sadd.s32 %s136, 1
      %p140 = scmp.eq.s32.totalorder %s15, 3
      %p141 = scmp.ne.s32.totalorder %s136, %s138
      %p142 = scmp.eq.s32.totalorder %s15, 0
      %p143 = por %p141, %p142
      %p144 = scmp.ne.s32.totalorder %s136, %s138
      %p145 = scmp.eq.s32.totalorder %s20, 3
      %p146 = por %p144, %p145
      %p147 = scmp.ne.s32.totalorder %s138, %s139
      %p148 = scmp.eq.s32.totalorder %s20, 0
      %p149 = por %p147, %p148
      %p150 = scmp.ne.s32.totalorder %s138, %s139
      %p151 = scmp.eq.s32.totalorder %s21, 3
      %p152 = por %p150, %p151
      %p154 = scmp.ne.s32.totalorder %s139, %s153
      %p155 = scmp.eq.s32.totalorder %s21, 0
      %p156 = por %p154, %p155
      %s157 = ssub.s32 %s22, %s34
      %p158 = scmp.eq.s32.totalorder %s157, 0
      %s160 = sadd.s32 %s159, 1
      %s161 = scalar_select %p158, %s159, %s160
      %p164 = pneg %p158
      %p165 = scmp.eq.s32.totalorder %s15, 3
      %p166 = por %p164, %p165
      %p167 = scmp.ne.s32.totalorder %s159, %s162
      %p168 = scmp.eq.s32.totalorder %s15, 0
      %p169 = por %p167, %p168
      %p170 = scmp.ne.s32.totalorder %s159, %s162
      %p171 = scmp.eq.s32.totalorder %s20, 3
      %p172 = por %p170, %p171
      %p173 = scmp.ne.s32.totalorder %s162, %s163
      %p174 = scmp.eq.s32.totalorder %s20, 0
      %p175 = por %p173, %p174
      %p176 = scmp.ne.s32.totalorder %s162, %s163
      %p177 = scmp.eq.s32.totalorder %s21, 3
      %p178 = por %p176, %p177
      %p180 = scmp.ne.s32.totalorder %s163, %s179
      %p181 = scmp.eq.s32.totalorder %s21, 0
      %p182 = por %p180, %p181
      %s183 = ssub.s32 %s22, %s34
      %p184 = scmp.eq.s32.totalorder %s183, 0
      %s186 = sadd.s32 %s185, 1
      %s187 = scalar_select %p184, %s185, %s186
      %p190 = pneg %p184
      %p191 = scmp.eq.s32.totalorder %s15, 3
      %p192 = por %p190, %p191
      %p193 = scmp.ne.s32.totalorder %s185, %s188
      %p194 = scmp.eq.s32.totalorder %s15, 0
      %p195 = por %p193, %p194
      %p196 = scmp.ne.s32.totalorder %s185, %s188
      %p197 = scmp.eq.s32.totalorder %s20, 3
      %p198 = por %p196, %p197
      %p199 = scmp.ne.s32.totalorder %s188, %s189
      %p200 = scmp.eq.s32.totalorder %s20, 0
      %p201 = por %p199, %p200
      %p202 = scmp.ne.s32.totalorder %s188, %s189
      %p203 = scmp.eq.s32.totalorder %s21, 3
      %p204 = por %p202, %p203
      %p206 = scmp.ne.s32.totalorder %s189, %s205
      %p207 = scmp.eq.s32.totalorder %s21, 0
      %p208 = por %p206, %p207
      %s209 = ssub.s32 %s22, %s34
      %p210 = scmp.eq.s32.totalorder %s209, 0
      %s212 = sadd.s32 %s211, 1
      %s213 = scalar_select %p210, %s211, %s212
      %p216 = pneg %p210
      %p217 = scmp.eq.s32.totalorder %s15, 3
      %p218 = por %p216, %p217
      %p219 = scmp.ne.s32.totalorder %s211, %s214
      %p220 = scmp.eq.s32.totalorder %s15, 0
      %p221 = por %p219, %p220
      %p222 = scmp.ne.s32.totalorder %s211, %s214
      %p223 = scmp.eq.s32.totalorder %s20, 3
      %p224 = por %p222, %p223
      %p225 = scmp.ne.s32.totalorder %s214, %s215
      %p226 = scmp.eq.s32.totalorder %s20, 0
      %p227 = por %p225, %p226
      %p228 = scmp.ne.s32.totalorder %s214, %s215
      %p229 = scmp.eq.s32.totalorder %s21, 3
      %p230 = por %p228, %p229
      %p232 = scmp.ne.s32.totalorder %s215, %s231
      %p233 = scmp.eq.s32.totalorder %s21, 0
      %p234 = por %p232, %p233
      %s235 = ssub.s32 %s22, %s34
      %p236 = scmp.eq.s32.totalorder %s235, 0
      %s238 = sadd.s32 %s237, 1
      %s239 = scalar_select %p236, %s237, %s238
      %p242 = pneg %p236
      %p243 = scmp.eq.s32.totalorder %s15, 3
      %p244 = por %p242, %p243
      %p245 = scmp.ne.s32.totalorder %s237, %s240
      %p246 = scmp.eq.s32.totalorder %s15, 0
      %p247 = por %p245, %p246
      %p248 = scmp.ne.s32.totalorder %s237, %s240
      %p249 = scmp.eq.s32.totalorder %s20, 3
      %p250 = por %p248, %p249
      %p251 = scmp.ne.s32.totalorder %s240, %s241
      %p252 = scmp.eq.s32.totalorder %s20, 0
      %p253 = por %p251, %p252
      %p254 = scmp.ne.s32.totalorder %s240, %s241
      %p255 = scmp.eq.s32.totalorder %s21, 3
      %p256 = por %p254, %p255
      %p258 = scmp.ne.s32.totalorder %s241, %s257
      %p259 = scmp.eq.s32.totalorder %s21, 0
      %p260 = por %p258, %p259
      %p261 = scmp.le.s32.totalorder 1, %s15
      %p262 = scmp.lt.s32.totalorder %s15, 5
      %p263 = pnand %p261, %p262
      %p264 = pneg %p263
      // Predicated region
      $region9: #{nsgnn_layer_forward.3} parent=5 // pred_check
        _
      $region10: #{nsgnn_layer_forward.3} parent=5 // pred_check_branch
        %266 = sbr.rel (%p263) target = $region12
      $region11: #{nsgnn_layer_forward.3} parent=5 // pred_region
        %s267 = ssub.s32 %s15, 1
        // Predicated region
        $region13: #{nsgnn_layer_forward.3} parent=11 // pred_check
          %p268 = pneg %p128
        $region14: #{nsgnn_layer_forward.3} parent=11 // pred_check_branch
          %270 = sbr.rel (%p268) target = $region16
        $region15: #{nsgnn_layer_forward.3} parent=11 // pred_region
          _
        $region16: #{nsgnn_layer_forward.3} parent=11 // pred_fallthru
          _
        // Predicated region
        $region17: #{nsgnn_layer_forward.3} parent=11 // pred_check
          %p271 = pneg %p149
        $region18: #{nsgnn_layer_forward.3} parent=11 // pred_check_branch
          %273 = sbr.rel (%p271) target = $region20
        $region19: #{nsgnn_layer_forward.3} parent=11 // pred_region
          _
        $region20: #{nsgnn_layer_forward.3} parent=11 // pred_fallthru
          _
      $region12: #{nsgnn_layer_forward.3} parent=5 // pred_fallthru
        _
      %p274 = scmp.lt.s32.totalorder %s15, 4
      // Predicated region
      $region21: #{nsgnn_layer_forward.3} parent=5 // pred_check
        %p275 = pneg %p274
      $region22: #{nsgnn_layer_forward.3} parent=5 // pred_check_branch
        %277 = sbr.rel (%p275) target = $region24
      $region23: #{nsgnn_layer_forward.3} parent=5 // pred_region
        // Predicated region
        $region25: #{nsgnn_layer_forward.3} parent=23 // pred_check
          %p278 = pneg %p49
        $region26: #{nsgnn_layer_forward.3} parent=23 // pred_check_branch
          %280 = sbr.rel (%p278) target = $region28
        $region27: #{nsgnn_layer_forward.3} parent=23 // pred_region
          %s281 = sand.u32 %s39, 1
          %s282 = sand.u32 %s39, 1
          %s283 = smul.addr %s282, 64
          %s284 = scalar_lea.vmem [#allocation3], %s283
          %s285 = smul.u32 16, %s22
          %s286 = smul.addr %s285, 2
          %s287 = sadd.s32 %s23, %s286
          %s288 = smul.addr %s287, 4
          %s289 = scalar_lea.vmem %s0, %s288
          // Predicated region
          $region29: #{nsgnn_layer_forward.3} parent=27 // pred_check
            _
          $region30: #{nsgnn_layer_forward.3} parent=27 // pred_check_branch
            %291 = sbr.rel (0) target = $region32
          $region31: #{nsgnn_layer_forward.3} parent=27 // pred_region
            // Predicated region
            $region33: #{nsgnn_layer_forward.3} parent=31 // pred_check
              _
            $region34: #{nsgnn_layer_forward.3} parent=31 // pred_check_branch
              %293 = sbr.rel target = $region36
            $region35: #{nsgnn_layer_forward.3} parent=31 // pred_region
              // Predicated region
              $region48: #{nsgnn_layer_forward.3} parent=35 // pred_check
                _
              $region49: #{nsgnn_layer_forward.3} parent=35 // pred_check_branch
                %338 = sbr.rel (0) target = $region51
              $region50: #{nsgnn_layer_forward.3} parent=35 // pred_region
                loop: start=0, step=1, limit=1
                $region52: #{nsgnn_layer_forward.3} parent=50 // loop_pre_header
                  _
                $region53: #{nsgnn_layer_forward.3} parent=50 // loop_header
                  %s340 = sphi 0, %s344
                  %p341 = scmp.ge.s32.totalorder %s340, 1
                  %s345 = sphi %s289, %s289
                  %s346 = sphi %s284, %s284
                $region54: #{nsgnn_layer_forward.3} parent=50 // loop_header_branch
                  %343 = sbr.rel (%p341) target = $region58
                $region55: #{nsgnn_layer_forward.3} parent=50 // loop_body
                  _
                $region56: #{nsgnn_layer_forward.3} parent=50 // loop_footer
                  %s344 = sadd.s32 1, %s340
                $region57: #{nsgnn_layer_forward.3} parent=50 // loop_footer_branch
                  %339 = sbr.rel target = $region53
                $region58: #{nsgnn_layer_forward.3} parent=50 // loop_exit
                  _
                loop: start=0, step=1, limit=1
                $region59: #{nsgnn_layer_forward.3} parent=50 // loop_pre_header
                  _
                $region60: #{nsgnn_layer_forward.3} parent=50 // loop_header
                  %s349 = sphi 0, %s353
                  %p350 = scmp.ge.s32.totalorder %s349, 1
                  %s354 = sphi %s289, %s289
                  %s355 = sphi %s284, %s284
                $region61: #{nsgnn_layer_forward.3} parent=50 // loop_header_branch
                  %352 = sbr.rel (%p350) target = $region65
                $region62: #{nsgnn_layer_forward.3} parent=50 // loop_body
                  %v356 = vld [vmem:[%s354] sm:$0xf]
                  %357 = vst [vmem:[%s355] sm:$0xf] %v356
                  %v358 = vld [vmem:[%s354 + $0x8] sm:$0xf]
                  %359 = vst [vmem:[%s355 + $0x4] sm:$0xf] %v358
                  %v360 = vld [vmem:[%s354 + $0x10] sm:$0xf]
                  %361 = vst [vmem:[%s355 + $0x8] sm:$0xf] %v360
                  %v362 = vld [vmem:[%s354 + $0x18] sm:$0xf]
                  %363 = vst [vmem:[%s355 + $0xc] sm:$0xf] %v362
                  %v364 = vld [vmem:[%s354 + $0x20] sm:$0xf]
                  %365 = vst [vmem:[%s355 + $0x10] sm:$0xf] %v364
                  %v366 = vld [vmem:[%s354 + $0x28] sm:$0xf]
                  %367 = vst [vmem:[%s355 + $0x14] sm:$0xf] %v366
                  %v368 = vld [vmem:[%s354 + $0x30] sm:$0xf]
                  %369 = vst [vmem:[%s355 + $0x18] sm:$0xf] %v368
                  %v370 = vld [vmem:[%s354 + $0x38] sm:$0xf]
                  %371 = vst [vmem:[%s355 + $0x1c] sm:$0xf] %v370
                  %v372 = vld [vmem:[%s354 + $0x40] sm:$0xf]
                  %373 = vst [vmem:[%s355 + $0x20] sm:$0xf] %v372
                  %v374 = vld [vmem:[%s354 + $0x48] sm:$0xf]
                  %375 = vst [vmem:[%s355 + $0x24] sm:$0xf] %v374
                  %v376 = vld [vmem:[%s354 + $0x50] sm:$0xf]
                  %377 = vst [vmem:[%s355 + $0x28] sm:$0xf] %v376
                  %v378 = vld [vmem:[%s354 + $0x58] sm:$0xf]
                  %379 = vst [vmem:[%s355 + $0x2c] sm:$0xf] %v378
                  %v380 = vld [vmem:[%s354 + $0x60] sm:$0xf]
                  %381 = vst [vmem:[%s355 + $0x30] sm:$0xf] %v380
                  %v382 = vld [vmem:[%s354 + $0x68] sm:$0xf]
                  %383 = vst [vmem:[%s355 + $0x34] sm:$0xf] %v382
                  %v384 = vld [vmem:[%s354 + $0x70] sm:$0xf]
                  %385 = vst [vmem:[%s355 + $0x38] sm:$0xf] %v384
                  %v386 = vld [vmem:[%s354 + $0x78] sm:$0xf]
                  %387 = vst [vmem:[%s355 + $0x3c] sm:$0xf] %v386
                $region63: #{nsgnn_layer_forward.3} parent=50 // loop_footer
                  %s353 = sadd.s32 1, %s349
                $region64: #{nsgnn_layer_forward.3} parent=50 // loop_footer_branch
                  %348 = sbr.rel target = $region60
                $region65: #{nsgnn_layer_forward.3} parent=50 // loop_exit
                  _
              $region51: #{nsgnn_layer_forward.3} parent=35 // pred_fallthru
                _
            $region36: #{nsgnn_layer_forward.3} parent=31 // pred_fallthru
              _
            // Predicated region
            $region37: #{nsgnn_layer_forward.3} parent=31 // pred_check
              _
            $region38: #{nsgnn_layer_forward.3} parent=31 // pred_check_branch
              %295 = sbr.rel (0) target = $region40
            $region39: #{nsgnn_layer_forward.3} parent=31 // pred_region
              loop: start=0, step=1, limit=1
              $region41: #{nsgnn_layer_forward.3} parent=39 // loop_pre_header
                _
              $region42: #{nsgnn_layer_forward.3} parent=39 // loop_header
                %s298 = sphi 0, %s302
                %p299 = scmp.ge.s32.totalorder %s298, 1
                %s303 = sphi %s289, %s289
                %s304 = sphi %s284, %s284
              $region43: #{nsgnn_layer_forward.3} parent=39 // loop_header_branch
                %301 = sbr.rel (%p299) target = $region47
              $region44: #{nsgnn_layer_forward.3} parent=39 // loop_body
                %v305 = vld [vmem:[%s303] sm:$0xf]
                %306 = vst [vmem:[%s304] sm:$0xf] %v305
                %v307 = vld [vmem:[%s303 + $0x8] sm:$0xf]
                %308 = vst [vmem:[%s304 + $0x4] sm:$0xf] %v307
                %v309 = vld [vmem:[%s303 + $0x10] sm:$0xf]
                %310 = vst [vmem:[%s304 + $0x8] sm:$0xf] %v309
                %v311 = vld [vmem:[%s303 + $0x18] sm:$0xf]
                %312 = vst [vmem:[%s304 + $0xc] sm:$0xf] %v311
                %v313 = vld [vmem:[%s303 + $0x20] sm:$0xf]
                %314 = vst [vmem:[%s304 + $0x10] sm:$0xf] %v313
                %v315 = vld [vmem:[%s303 + $0x28] sm:$0xf]
                %316 = vst [vmem:[%s304 + $0x14] sm:$0xf] %v315
                %v317 = vld [vmem:[%s303 + $0x30] sm:$0xf]
                %318 = vst [vmem:[%s304 + $0x18] sm:$0xf] %v317
                %v319 = vld [vmem:[%s303 + $0x38] sm:$0xf]
                %320 = vst [vmem:[%s304 + $0x1c] sm:$0xf] %v319
                %v321 = vld [vmem:[%s303 + $0x40] sm:$0xf]
                %322 = vst [vmem:[%s304 + $0x20] sm:$0xf] %v321
                %v323 = vld [vmem:[%s303 + $0x48] sm:$0xf]
                %324 = vst [vmem:[%s304 + $0x24] sm:$0xf] %v323
                %v325 = vld [vmem:[%s303 + $0x50] sm:$0xf]
                %326 = vst [vmem:[%s304 + $0x28] sm:$0xf] %v325
                %v327 = vld [vmem:[%s303 + $0x58] sm:$0xf]
                %328 = vst [vmem:[%s304 + $0x2c] sm:$0xf] %v327
                %v329 = vld [vmem:[%s303 + $0x60] sm:$0xf]
                %330 = vst [vmem:[%s304 + $0x30] sm:$0xf] %v329
                %v331 = vld [vmem:[%s303 + $0x68] sm:$0xf]
                %332 = vst [vmem:[%s304 + $0x34] sm:$0xf] %v331
                %v333 = vld [vmem:[%s303 + $0x70] sm:$0xf]
                %334 = vst [vmem:[%s304 + $0x38] sm:$0xf] %v333
                %v335 = vld [vmem:[%s303 + $0x78] sm:$0xf]
                %336 = vst [vmem:[%s304 + $0x3c] sm:$0xf] %v335
              $region45: #{nsgnn_layer_forward.3} parent=39 // loop_footer
                %s302 = sadd.s32 1, %s298
              $region46: #{nsgnn_layer_forward.3} parent=39 // loop_footer_branch
                %297 = sbr.rel target = $region42
              $region47: #{nsgnn_layer_forward.3} parent=39 // loop_exit
                _
            $region40: #{nsgnn_layer_forward.3} parent=31 // pred_fallthru
              _
          $region32: #{nsgnn_layer_forward.3} parent=27 // pred_fallthru
            _
          %388 = vnop
        $region28: #{nsgnn_layer_forward.3} parent=23 // pred_fallthru
          _
        // Predicated region
        $region66: #{nsgnn_layer_forward.3} parent=23 // pred_check
          %p389 = pneg %p75
        $region67: #{nsgnn_layer_forward.3} parent=23 // pred_check_branch
          %391 = sbr.rel (%p389) target = $region69
        $region68: #{nsgnn_layer_forward.3} parent=23 // pred_region
          %s392 = smul.u32 16, %s23
          %p393 = scmp.lt.s32.totalorder %s392, 31
          %s394 = scalar_select %p393, %s392, 31
          %s395 = smul.addr %s394, 4
          %s396 = scalar_lea.vmem %s1, %s395
          %s397 = smul.u32 16, %s23
        $region69: #{nsgnn_layer_forward.3} parent=23 // pred_fallthru
          _
        // Predicated region
        $region70: #{nsgnn_layer_forward.3} parent=23 // pred_check
          %p398 = pneg %p101
        $region71: #{nsgnn_layer_forward.3} parent=23 // pred_check_branch
          %400 = sbr.rel (%p398) target = $region73
        $region72: #{nsgnn_layer_forward.3} parent=23 // pred_region
          %s401 = smul.u32 16, %s22
          %p402 = scmp.lt.s32.totalorder %s401, 31
          %s403 = scalar_select %p402, %s401, 31
          %s404 = smul.addr %s403, 4
          %s405 = scalar_lea.vmem %s2, %s404
          %s406 = smul.u32 16, %s22
        $region73: #{nsgnn_layer_forward.3} parent=23 // pred_fallthru
          _
        // Predicated region
        $region74: #{nsgnn_layer_forward.3} parent=23 // pred_check
          %p407 = pneg %p169
        $region75: #{nsgnn_layer_forward.3} parent=23 // pred_check_branch
          %409 = sbr.rel (%p407) target = $region77
        $region76: #{nsgnn_layer_forward.3} parent=23 // pred_region
          %s410 = smul.u32 16, %s22
          %p411 = scmp.lt.s32.totalorder %s410, 31
          %s412 = scalar_select %p411, %s410, 31
          %s413 = smul.addr %s412, 8
          %s414 = scalar_lea.vmem %s5, %s413
          %s415 = smul.u32 16, %s22
        $region77: #{nsgnn_layer_forward.3} parent=23 // pred_fallthru
          _
      $region24: #{nsgnn_layer_forward.3} parent=5 // pred_fallthru
        _
      %p416 = scmp.le.s32.totalorder 1, %s15
      %p417 = scmp.lt.s32.totalorder %s15, 5
      %p418 = pnand %p416, %p417
      %p419 = pneg %p418
      // Predicated region
      $region78: #{nsgnn_layer_forward.3} parent=5 // pred_check
        _
      $region79: #{nsgnn_layer_forward.3} parent=5 // pred_check_branch
        %421 = sbr.rel (%p418) target = $region81
      $region80: #{nsgnn_layer_forward.3} parent=5 // pred_region
        %s422 = ssub.s32 %s15, 1
        %s423 = sand.u32 %s42, 1
        %s424 = sand.u32 %s42, 1
        %s425 = smul.addr %s424, 64
        %s426 = scalar_lea.vmem [#allocation3], %s425
        // Predicated region
        $region82: #{nsgnn_layer_forward.3} parent=80 // pred_check
          %p427 = pneg %p55
        $region83: #{nsgnn_layer_forward.3} parent=80 // pred_check_branch
          %429 = sbr.rel (%p427) target = $region85
        $region84: #{nsgnn_layer_forward.3} parent=80 // pred_region
          _
        $region85: #{nsgnn_layer_forward.3} parent=80 // pred_fallthru
          _
        %s430 = sand.u32 %s42, 1
        %s431 = sand.u32 %s42, 1
        %s432 = smul.addr %s431, 64
        %s433 = scalar_lea.vmem [#allocation3], %s432
        %p434 = pneg %p55
        %p435 = pneg %p52
        %s436 = smul.u32 16, %s25
        %p437 = scmp.lt.s32.totalorder %s436, 31
        %s438 = scalar_select %p437, %s436, 31
        %s439 = smul.addr %s438, 4
        %s440 = scalar_lea.vmem %s1, %s439
        %p441 = pneg %p81
        %p442 = pneg %p78
        %s443 = smul.u32 16, %s24
        %p444 = scmp.lt.s32.totalorder %s443, 31
        %s445 = scalar_select %p444, %s443, 31
        %s446 = smul.addr %s445, 4
        %s447 = scalar_lea.vmem %s2, %s446
        %p448 = pneg %p107
        %p449 = pneg %p104
        %p450 = pneg %p128
        %p451 = pneg %p125
        %p452 = pneg %p149
        %p453 = pneg %p146
        %s454 = smul.u32 16, %s24
        %p455 = scmp.lt.s32.totalorder %s454, 31
        %s456 = scalar_select %p455, %s454, 31
        %s457 = smul.addr %s456, 8
        %s458 = scalar_lea.vmem %s5, %s457
        %p459 = pneg %p175
        %p460 = pneg %p172
        %p461 = pneg %p201
        %p462 = pneg %p198
        %s463 = smul.u32 16, %s24
        %p464 = scmp.lt.s32.totalorder %s463, 31
        %s465 = scalar_select %p464, %s463, 31
        %s466 = smul.addr %s465, 8
        %s467 = scalar_lea.vmem %s6, %s466
        %p468 = pneg %p227
        %p469 = pneg %p224
        %p470 = scmp.lt.s32.totalorder %s24, 1
        %s471 = scalar_select %p470, %s24, 1
        %s472 = smul.addr %s471, 8
        %s473 = scalar_lea.vmem %s7, %s472
        %p474 = pneg %p253
        %p475 = pneg %p250
        %p476 = scmp.lt.s32.totalorder %s24, 1
        %s477 = scalar_select %p476, %s24, 1
        %s478 = smul.addr %s477, 8
        %s479 = scalar_lea.vmem %s8, %s478
        %s480 = smul.u32 16, %s24
        %s481 = smul.u32 16, %s25
        %p482 = scmp.lt.s32.totalorder %s481, 31
        %s483 = scalar_select %p482, %s481, 31
        %s484 = smul.addr %s483, 4
        %s485 = scalar_lea.vmem %s1, %s484
        %s486 = smul.u32 16, %s25
        %s487 = smul.u32 16, %s24
        %p488 = scmp.lt.s32.totalorder %s487, 31
        %s489 = scalar_select %p488, %s487, 31
        %s490 = smul.addr %s489, 4
        %s491 = scalar_lea.vmem %s2, %s490
        %s492 = smul.u32 16, %s24
        %s493 = smul.u32 16, %s24
        %p494 = scmp.lt.s32.totalorder %s493, 31
        %s495 = scalar_select %p494, %s493, 31
        %s496 = smul.addr %s495, 8
        %s497 = scalar_lea.vmem %s5, %s496
        %s498 = smul.u32 16, %s24
        %s499 = smul.u32 16, %s24
        %p500 = scmp.lt.s32.totalorder %s499, 31
        %s501 = scalar_select %p500, %s499, 31
        %s502 = smul.addr %s501, 8
        %s503 = scalar_lea.vmem %s6, %s502
        %s504 = smul.u32 16, %s24
        %p505 = scmp.lt.s32.totalorder %s24, 1
        %s506 = scalar_select %p505, %s24, 1
        %s507 = smul.addr %s506, 8
        %s508 = scalar_lea.vmem %s7, %s507
        %p509 = scmp.lt.s32.totalorder %s24, 1
        %s510 = scalar_select %p509, %s24, 1
        %s511 = smul.addr %s510, 8
        %s512 = scalar_lea.vmem %s8, %s511
        %p514 = scmp.eq.s32.totalorder %s25, 0
        // Predicated region
        $region86: #{nsgnn_layer_forward.3} parent=80 // pred_check
          %p515 = pneg %p514
        $region87: #{nsgnn_layer_forward.3} parent=80 // pred_check_branch
          %517 = sbr.rel (%p515) target = $region89
        $region88: #{nsgnn_layer_forward.3} parent=80 // pred_region
          %518 = vst [vmem:[#allocation2] sm:$0xff] 0.0
          %519 = vst [vmem:[#allocation2 + $0x8] sm:$0xff] 0.0
          %520 = vst [vmem:[#allocation2 + $0x10] sm:$0xff] 0.0
          %521 = vst [vmem:[#allocation2 + $0x18] sm:$0xff] 0.0
          %522 = vst [vmem:[#allocation2 + $0x20] sm:$0xff] 0.0
          %523 = vst [vmem:[#allocation2 + $0x28] sm:$0xff] 0.0
          %524 = vst [vmem:[#allocation2 + $0x30] sm:$0xff] 0.0
          %525 = vst [vmem:[#allocation2 + $0x38] sm:$0xff] 0.0
          %526 = vst [vmem:[#allocation2 + $0x40] sm:$0xff] 0.0
          %527 = vst [vmem:[#allocation2 + $0x48] sm:$0xff] 0.0
          %528 = vst [vmem:[#allocation2 + $0x50] sm:$0xff] 0.0
          %529 = vst [vmem:[#allocation2 + $0x58] sm:$0xff] 0.0
          %530 = vst [vmem:[#allocation2 + $0x60] sm:$0xff] 0.0
          %531 = vst [vmem:[#allocation2 + $0x68] sm:$0xff] 0.0
          %532 = vst [vmem:[#allocation2 + $0x70] sm:$0xff] 0.0
          %533 = vst [vmem:[#allocation2 + $0x78] sm:$0xff] 0.0
          %534 = vst [vmem:[#allocation2 + $0x80] sm:$0xff] 0.0
          %535 = vst [vmem:[#allocation2 + $0x88] sm:$0xff] 0.0
          %536 = vst [vmem:[#allocation2 + $0x90] sm:$0xff] 0.0
          %537 = vst [vmem:[#allocation2 + $0x98] sm:$0xff] 0.0
          %538 = vst [vmem:[#allocation2 + $0xa0] sm:$0xff] 0.0
          %539 = vst [vmem:[#allocation2 + $0xa8] sm:$0xff] 0.0
          %540 = vst [vmem:[#allocation2 + $0xb0] sm:$0xff] 0.0
          %541 = vst [vmem:[#allocation2 + $0xb8] sm:$0xff] 0.0
          %542 = vst [vmem:[#allocation2 + $0xc0] sm:$0xff] 0.0
          %543 = vst [vmem:[#allocation2 + $0xc8] sm:$0xff] 0.0
          %544 = vst [vmem:[#allocation2 + $0xd0] sm:$0xff] 0.0
          %545 = vst [vmem:[#allocation2 + $0xd8] sm:$0xff] 0.0
          %546 = vst [vmem:[#allocation2 + $0xe0] sm:$0xff] 0.0
          %547 = vst [vmem:[#allocation2 + $0xe8] sm:$0xff] 0.0
          %548 = vst [vmem:[#allocation2 + $0xf0] sm:$0xff] 0.0
          %549 = vst [vmem:[#allocation2 + $0xf8] sm:$0xff] 0.0
        $region89: #{nsgnn_layer_forward.3} parent=80 // pred_fallthru
          _
        %v550 = vld [vmem:[#allocation2] sm:$0xff]
        %v551 = vld [vmem:[#allocation2 + $0x10] sm:$0xff]
        %v552 = vld [vmem:[#allocation2 + $0x20] sm:$0xff]
        %v553 = vld [vmem:[#allocation2 + $0x30] sm:$0xff]
        %v554 = vld [vmem:[#allocation2 + $0x40] sm:$0xff]
        %v555 = vld [vmem:[#allocation2 + $0x50] sm:$0xff]
        %v556 = vld [vmem:[#allocation2 + $0x60] sm:$0xff]
        %v557 = vld [vmem:[#allocation2 + $0x70] sm:$0xff]
        %v558 = vld [vmem:[#allocation2 + $0x80] sm:$0xff]
        %v559 = vld [vmem:[#allocation2 + $0x90] sm:$0xff]
        %v560 = vld [vmem:[#allocation2 + $0xa0] sm:$0xff]
        %v561 = vld [vmem:[#allocation2 + $0xb0] sm:$0xff]
        %v562 = vld [vmem:[#allocation2 + $0xc0] sm:$0xff]
        %v563 = vld [vmem:[#allocation2 + $0xd0] sm:$0xff]
        %v564 = vld [vmem:[#allocation2 + $0xe0] sm:$0xff]
        %v565 = vld [vmem:[#allocation2 + $0xf0] sm:$0xff]
        %v566 = vld [vmem:[%s426] sm:$0xf]
        %v567 = vld [vmem:[%s426 + $0x4] sm:$0xf]
        %v568 = vld [vmem:[%s426 + $0x8] sm:$0xf]
        %v569 = vld [vmem:[%s426 + $0xc] sm:$0xf]
        %v570 = vld [vmem:[%s426 + $0x10] sm:$0xf]
        %v571 = vld [vmem:[%s426 + $0x14] sm:$0xf]
        %v572 = vld [vmem:[%s426 + $0x18] sm:$0xf]
        %v573 = vld [vmem:[%s426 + $0x1c] sm:$0xf]
        %v574 = vld [vmem:[%s426 + $0x20] sm:$0xf]
        %v575 = vld [vmem:[%s426 + $0x24] sm:$0xf]
        %v576 = vld [vmem:[%s426 + $0x28] sm:$0xf]
        %v577 = vld [vmem:[%s426 + $0x2c] sm:$0xf]
        %v578 = vld [vmem:[%s426 + $0x30] sm:$0xf]
        %v579 = vld [vmem:[%s426 + $0x34] sm:$0xf]
        %v580 = vld [vmem:[%s426 + $0x38] sm:$0xf]
        %v581 = vld [vmem:[%s426 + $0x3c] sm:$0xf]
        %v582 = vld [vmem:[%s485] sm:$0xf]
        %v583 = vld [vmem:[%s485 + $0x4] sm:$0xf]
        %v584 = vld [vmem:[%s485 + $0x8] sm:$0xf]
        %v585 = vld [vmem:[%s485 + $0xc] sm:$0xf]
        %v586 = vld [vmem:[%s485 + $0x10] sm:$0xf]
        %v587 = vld [vmem:[%s485 + $0x14] sm:$0xf]
        %v588 = vld [vmem:[%s485 + $0x18] sm:$0xf]
        %v589 = vld [vmem:[%s485 + $0x1c] sm:$0xf]
        %v590 = vld [vmem:[%s485 + $0x20] sm:$0xf]
        %v591 = vld [vmem:[%s485 + $0x24] sm:$0xf]
        %v592 = vld [vmem:[%s485 + $0x28] sm:$0xf]
        %v593 = vld [vmem:[%s485 + $0x2c] sm:$0xf]
        %v594 = vld [vmem:[%s485 + $0x30] sm:$0xf]
        %v595 = vld [vmem:[%s485 + $0x34] sm:$0xf]
        %v596 = vld [vmem:[%s485 + $0x38] sm:$0xf]
        %v597 = vld [vmem:[%s485 + $0x3c] sm:$0xf]
        %v614 = vunpack.c.l.b16 %v566
        %v615 = vunpack.c.l.b16 %v567
        %v616 = vunpack.c.l.b16 %v568
        %v617 = vunpack.c.l.b16 %v569
        %v618 = vunpack.c.l.b16 %v570
        %v619 = vunpack.c.l.b16 %v571
        %v620 = vunpack.c.l.b16 %v572
        %v621 = vunpack.c.l.b16 %v573
        %v622 = vunpack.c.l.b16 %v574
        %v623 = vunpack.c.l.b16 %v575
        %v624 = vunpack.c.l.b16 %v576
        %v625 = vunpack.c.l.b16 %v577
        %v626 = vunpack.c.l.b16 %v578
        %v627 = vunpack.c.l.b16 %v579
        %v628 = vunpack.c.l.b16 %v580
        %v629 = vunpack.c.l.b16 %v581
        %v630 = vpack.c.b16 %v615, %v614
        %v631 = vpack.c.b16 %v617, %v616
        %v632 = vpack.c.b16 %v619, %v618
        %v633 = vpack.c.b16 %v621, %v620
        %v634 = vpack.c.b16 %v623, %v622
        %v635 = vpack.c.b16 %v625, %v624
        %v636 = vpack.c.b16 %v627, %v626
        %v637 = vpack.c.b16 %v629, %v628
        %v662 = vunpack.c.l.b16 %v582
        %v663 = vunpack.c.l.b16 %v583
        %v664 = vunpack.c.l.b16 %v584
        %v665 = vunpack.c.l.b16 %v585
        %v666 = vunpack.c.l.b16 %v586
        %v667 = vunpack.c.l.b16 %v587
        %v668 = vunpack.c.l.b16 %v588
        %v669 = vunpack.c.l.b16 %v589
        %v670 = vunpack.c.l.b16 %v590
        %v671 = vunpack.c.l.b16 %v591
        %v672 = vunpack.c.l.b16 %v592
        %v673 = vunpack.c.l.b16 %v593
        %v674 = vunpack.c.l.b16 %v594
        %v675 = vunpack.c.l.b16 %v595
        %v676 = vunpack.c.l.b16 %v596
        %v677 = vunpack.c.l.b16 %v597
        %v678 = vpack.c.b16 %v663, %v662
        %v679 = vpack.c.b16 %v665, %v664
        %v680 = vpack.c.b16 %v667, %v666
        %v681 = vpack.c.b16 %v669, %v668
        %v682 = vpack.c.b16 %v671, %v670
        %v683 = vpack.c.b16 %v673, %v672
        %v684 = vpack.c.b16 %v675, %v674
        %v685 = vpack.c.b16 %v677, %v676
        %694 = vmatprep.subr.bf16.mxu0 0
        %695 = vmatpush1.bf16.msra.mxu0 %v678
        %696 = vmatprep.subr.bf16.mxu0 0
        %697 = vmatpush1.bf16.msra.mxu0 %v679
        %698 = vmatprep.subr.bf16.mxu0 0
        %699 = vmatpush1.bf16.msra.mxu0 %v680
        %700 = vmatprep.subr.bf16.mxu0 0
        %701 = vmatpush1.bf16.msra.mxu0 %v681
        %702 = vmatprep.subr.bf16.mxu0 0
        %703 = vmatpush1.bf16.msra.mxu0 %v682
        %704 = vmatprep.subr.bf16.mxu0 0
        %705 = vmatpush1.bf16.msra.mxu0 %v683
        %706 = vmatprep.subr.bf16.mxu0 0
        %707 = vmatpush1.bf16.msra.mxu0 %v684
        %708 = vmatprep.subr.bf16.mxu0 0
        %709 = vmatpush1.bf16.msra.mxu0 %v685
        %710 = vmatprep.subr.bf16.mxu0 0
        %711 = vmatpush1.bf16.msra.mxu0 0
        %712 = vmatprep.subr.bf16.mxu0 0
        %713 = vmatpush1.bf16.msra.mxu0 0
        %714 = vmatprep.subr.bf16.mxu0 0
        %715 = vmatpush1.bf16.msra.mxu0 0
        %716 = vmatprep.subr.bf16.mxu0 0
        %717 = vmatpush1.bf16.msra.mxu0 0
        %718 = vmatprep.subr.bf16.mxu0 0
        %719 = vmatpush1.bf16.msra.mxu0 0
        %720 = vmatprep.subr.bf16.mxu0 0
        %721 = vmatpush1.bf16.msra.mxu0 0
        %722 = vmatprep.subr.bf16.mxu0 0
        %723 = vmatpush1.bf16.msra.mxu0 0
        %724 = vmatprep.subr.bf16.mxu0 0
        %725 = vmatpush1.bf16.msra.mxu0 0
        %726 = vmatprep.mubr.bf16.mxu0 0
        %727 = vmatmul.mubr.bf16.gmra.mrb[0].mxu0 %v630
        %v728 = vpop.f32.mrb[0].mxu0
        %v729 = vadd.f32 0.0, %v728
        %v730 = vpop.f32.mrb[0].mxu0
        %v731 = vpop.f32.mrb[0].mxu0
        %v732 = vadd.f32 0.0, %v731
        %v733 = vpop.f32.mrb[0].mxu0
        %734 = vmatprep.mubr.bf16.mxu0 0
        %735 = vmatmul.mubr.bf16.gmra.mrb[0].mxu0 %v631
        %v736 = vpop.f32.mrb[0].mxu0
        %v737 = vadd.f32 0.0, %v736
        %v738 = vpop.f32.mrb[0].mxu0
        %v739 = vpop.f32.mrb[0].mxu0
        %v740 = vadd.f32 0.0, %v739
        %v741 = vpop.f32.mrb[0].mxu0
        %742 = vmatprep.mubr.bf16.mxu0 0
        %743 = vmatmul.mubr.bf16.gmra.mrb[0].mxu0 %v632
        %v744 = vpop.f32.mrb[0].mxu0
        %v745 = vadd.f32 0.0, %v744
        %v746 = vpop.f32.mrb[0].mxu0
        %v747 = vpop.f32.mrb[0].mxu0
        %v748 = vadd.f32 0.0, %v747
        %v749 = vpop.f32.mrb[0].mxu0
        %750 = vmatprep.mubr.bf16.mxu0 0
        %751 = vmatmul.mubr.bf16.gmra.mrb[0].mxu0 %v633
        %v752 = vpop.f32.mrb[0].mxu0
        %v753 = vadd.f32 0.0, %v752
        %v754 = vpop.f32.mrb[0].mxu0
        %v755 = vpop.f32.mrb[0].mxu0
        %v756 = vadd.f32 0.0, %v755
        %v757 = vpop.f32.mrb[0].mxu0
        %758 = vmatprep.mubr.bf16.mxu0 0
        %759 = vmatmul.mubr.bf16.gmra.mrb[0].mxu0 %v634
        %v760 = vpop.f32.mrb[0].mxu0
        %v761 = vadd.f32 0.0, %v760
        %v762 = vpop.f32.mrb[0].mxu0
        %v763 = vpop.f32.mrb[0].mxu0
        %v764 = vadd.f32 0.0, %v763
        %v765 = vpop.f32.mrb[0].mxu0
        %766 = vmatprep.mubr.bf16.mxu0 0
        %767 = vmatmul.mubr.bf16.gmra.mrb[0].mxu0 %v635
        %v768 = vpop.f32.mrb[0].mxu0
        %v769 = vadd.f32 0.0, %v768
        %v770 = vpop.f32.mrb[0].mxu0
        %v771 = vpop.f32.mrb[0].mxu0
        %v772 = vadd.f32 0.0, %v771
        %v773 = vpop.f32.mrb[0].mxu0
        %774 = vmatprep.mubr.bf16.mxu0 0
        %775 = vmatmul.mubr.bf16.gmra.mrb[0].mxu0 %v636
        %v776 = vpop.f32.mrb[0].mxu0
        %v777 = vadd.f32 0.0, %v776
        %v778 = vpop.f32.mrb[0].mxu0
        %v779 = vpop.f32.mrb[0].mxu0
        %v780 = vadd.f32 0.0, %v779
        %v781 = vpop.f32.mrb[0].mxu0
        %782 = vmatprep.mubr.bf16.mxu0 0
        %783 = vmatmul.mubr.bf16.gmra.mrb[0].mxu0 %v637
        %v784 = vpop.f32.mrb[0].mxu0
        %v785 = vadd.f32 0.0, %v784
        %v786 = vpop.f32.mrb[0].mxu0
        %v787 = vpop.f32.mrb[0].mxu0
        %v788 = vadd.f32 0.0, %v787
        %v789 = vpop.f32.mrb[0].mxu0
        %790 = vdwg.mxu0
        %v791 = vadd.f32 %v550, %v729
        %v792 = vadd.f32 %v551, %v732
        %v793 = vadd.f32 %v552, %v737
        %v794 = vadd.f32 %v553, %v740
        %v795 = vadd.f32 %v554, %v745
        %v796 = vadd.f32 %v555, %v748
        %v797 = vadd.f32 %v556, %v753
        %v798 = vadd.f32 %v557, %v756
        %v799 = vadd.f32 %v558, %v761
        %v800 = vadd.f32 %v559, %v764
        %v801 = vadd.f32 %v560, %v769
        %v802 = vadd.f32 %v561, %v772
        %v803 = vadd.f32 %v562, %v777
        %v804 = vadd.f32 %v563, %v780
        %v805 = vadd.f32 %v564, %v785
        %v806 = vadd.f32 %v565, %v788
        %807 = vst [vmem:[#allocation2] sm:$0xff] %v791
        %808 = vst [vmem:[#allocation2 + $0x10] sm:$0xff] %v792
        %809 = vst [vmem:[#allocation2 + $0x20] sm:$0xff] %v793
        %810 = vst [vmem:[#allocation2 + $0x30] sm:$0xff] %v794
        %811 = vst [vmem:[#allocation2 + $0x40] sm:$0xff] %v795
        %812 = vst [vmem:[#allocation2 + $0x50] sm:$0xff] %v796
        %813 = vst [vmem:[#allocation2 + $0x60] sm:$0xff] %v797
        %814 = vst [vmem:[#allocation2 + $0x70] sm:$0xff] %v798
        %815 = vst [vmem:[#allocation2 + $0x80] sm:$0xff] %v799
        %816 = vst [vmem:[#allocation2 + $0x90] sm:$0xff] %v800
        %817 = vst [vmem:[#allocation2 + $0xa0] sm:$0xff] %v801
        %818 = vst [vmem:[#allocation2 + $0xb0] sm:$0xff] %v802
        %819 = vst [vmem:[#allocation2 + $0xc0] sm:$0xff] %v803
        %820 = vst [vmem:[#allocation2 + $0xd0] sm:$0xff] %v804
        %821 = vst [vmem:[#allocation2 + $0xe0] sm:$0xff] %v805
        %822 = vst [vmem:[#allocation2 + $0xf0] sm:$0xff] %v806
        %p823 = scmp.eq.s32.totalorder %s25, 1
        // Predicated region
        $region90: #{nsgnn_layer_forward.3} parent=80 // pred_check
          %p824 = pneg %p823
        $region91: #{nsgnn_layer_forward.3} parent=80 // pred_check_branch
          %826 = sbr.rel (%p824) target = $region93
        $region92: #{nsgnn_layer_forward.3} parent=80 // pred_region
          %v827 = vld [vmem:[%s491] sm:$0xf]
          %v828 = vld [vmem:[%s491 + $0x4] sm:$0xf]
          %v829 = vld [vmem:[%s491 + $0x8] sm:$0xf]
          %v830 = vld [vmem:[%s491 + $0xc] sm:$0xf]
          %v831 = vld [vmem:[%s491 + $0x10] sm:$0xf]
          %v832 = vld [vmem:[%s491 + $0x14] sm:$0xf]
          %v833 = vld [vmem:[%s491 + $0x18] sm:$0xf]
          %v834 = vld [vmem:[%s491 + $0x1c] sm:$0xf]
          %v835 = vld [vmem:[%s491 + $0x20] sm:$0xf]
          %v836 = vld [vmem:[%s491 + $0x24] sm:$0xf]
          %v837 = vld [vmem:[%s491 + $0x28] sm:$0xf]
          %v838 = vld [vmem:[%s491 + $0x2c] sm:$0xf]
          %v839 = vld [vmem:[%s491 + $0x30] sm:$0xf]
          %v840 = vld [vmem:[%s491 + $0x34] sm:$0xf]
          %v841 = vld [vmem:[%s491 + $0x38] sm:$0xf]
          %v842 = vld [vmem:[%s491 + $0x3c] sm:$0xf]
          %v843 = vunpack.c.l.bf16 %v827
          %v844 = vunpack.c.l.bf16 %v828
          %v845 = vunpack.c.l.bf16 %v829
          %v846 = vunpack.c.l.bf16 %v830
          %v847 = vunpack.c.l.bf16 %v831
          %v848 = vunpack.c.l.bf16 %v832
          %v849 = vunpack.c.l.bf16 %v833
          %v850 = vunpack.c.l.bf16 %v834
          %v851 = vunpack.c.l.bf16 %v835
          %v852 = vunpack.c.l.bf16 %v836
          %v853 = vunpack.c.l.bf16 %v837
          %v854 = vunpack.c.l.bf16 %v838
          %v855 = vunpack.c.l.bf16 %v839
          %v856 = vunpack.c.l.bf16 %v840
          %v857 = vunpack.c.l.bf16 %v841
          %v858 = vunpack.c.l.bf16 %v842
          %859 = vst [vmem:[#allocation2 + $0x8] sm:$0xff] %v843
          %860 = vst [vmem:[#allocation2 + $0x18] sm:$0xff] %v844
          %861 = vst [vmem:[#allocation2 + $0x28] sm:$0xff] %v845
          %862 = vst [vmem:[#allocation2 + $0x38] sm:$0xff] %v846
          %863 = vst [vmem:[#allocation2 + $0x48] sm:$0xff] %v847
          %864 = vst [vmem:[#allocation2 + $0x58] sm:$0xff] %v848
          %865 = vst [vmem:[#allocation2 + $0x68] sm:$0xff] %v849
          %866 = vst [vmem:[#allocation2 + $0x78] sm:$0xff] %v850
          %867 = vst [vmem:[#allocation2 + $0x88] sm:$0xff] %v851
          %868 = vst [vmem:[#allocation2 + $0x98] sm:$0xff] %v852
          %869 = vst [vmem:[#allocation2 + $0xa8] sm:$0xff] %v853
          %870 = vst [vmem:[#allocation2 + $0xb8] sm:$0xff] %v854
          %871 = vst [vmem:[#allocation2 + $0xc8] sm:$0xff] %v855
          %872 = vst [vmem:[#allocation2 + $0xd8] sm:$0xff] %v856
          %873 = vst [vmem:[#allocation2 + $0xe8] sm:$0xff] %v857
          %874 = vst [vmem:[#allocation2 + $0xf8] sm:$0xff] %v858
          %v875 = vld [vmem:[#allocation2] sm:$0xff]
          %v876 = vld [vmem:[#allocation2 + $0x8] sm:$0xff]
          %v877 = vld [vmem:[#allocation2 + $0x10] sm:$0xff]
          %v878 = vld [vmem:[#allocation2 + $0x18] sm:$0xff]
          %v879 = vld [vmem:[#allocation2 + $0x20] sm:$0xff]
          %v880 = vld [vmem:[#allocation2 + $0x28] sm:$0xff]
          %v881 = vld [vmem:[#allocation2 + $0x30] sm:$0xff]
          %v882 = vld [vmem:[#allocation2 + $0x38] sm:$0xff]
          %v883 = vld [vmem:[#allocation2 + $0x40] sm:$0xff]
          %v884 = vld [vmem:[#allocation2 + $0x48] sm:$0xff]
          %v885 = vld [vmem:[#allocation2 + $0x50] sm:$0xff]
          %v886 = vld [vmem:[#allocation2 + $0x58] sm:$0xff]
          %v887 = vld [vmem:[#allocation2 + $0x60] sm:$0xff]
          %v888 = vld [vmem:[#allocation2 + $0x68] sm:$0xff]
          %v889 = vld [vmem:[#allocation2 + $0x70] sm:$0xff]
          %v890 = vld [vmem:[#allocation2 + $0x78] sm:$0xff]
          %v891 = vld [vmem:[#allocation2 + $0x80] sm:$0xff]
          %v892 = vld [vmem:[#allocation2 + $0x88] sm:$0xff]
          %v893 = vld [vmem:[#allocation2 + $0x90] sm:$0xff]
          %v894 = vld [vmem:[#allocation2 + $0x98] sm:$0xff]
          %v895 = vld [vmem:[#allocation2 + $0xa0] sm:$0xff]
          %v896 = vld [vmem:[#allocation2 + $0xa8] sm:$0xff]
          %v897 = vld [vmem:[#allocation2 + $0xb0] sm:$0xff]
          %v898 = vld [vmem:[#allocation2 + $0xb8] sm:$0xff]
          %v899 = vld [vmem:[#allocation2 + $0xc0] sm:$0xff]
          %v900 = vld [vmem:[#allocation2 + $0xc8] sm:$0xff]
          %v901 = vld [vmem:[#allocation2 + $0xd0] sm:$0xff]
          %v902 = vld [vmem:[#allocation2 + $0xd8] sm:$0xff]
          %v903 = vld [vmem:[#allocation2 + $0xe0] sm:$0xff]
          %v904 = vld [vmem:[#allocation2 + $0xe8] sm:$0xff]
          %v905 = vld [vmem:[#allocation2 + $0xf0] sm:$0xff]
          %v906 = vld [vmem:[#allocation2 + $0xf8] sm:$0xff]
          %v907 = vpack.c.bf16 %v877, %v875
          %v908 = vpack.c.bf16 %v878, %v876
          %v909 = vpack.c.bf16 %v881, %v879
          %v910 = vpack.c.bf16 %v882, %v880
          %v911 = vpack.c.bf16 %v885, %v883
          %v912 = vpack.c.bf16 %v886, %v884
          %v913 = vpack.c.bf16 %v889, %v887
          %v914 = vpack.c.bf16 %v890, %v888
          %v915 = vpack.c.bf16 %v893, %v891
          %v916 = vpack.c.bf16 %v894, %v892
          %v917 = vpack.c.bf16 %v897, %v895
          %v918 = vpack.c.bf16 %v898, %v896
          %v919 = vpack.c.bf16 %v901, %v899
          %v920 = vpack.c.bf16 %v902, %v900
          %v921 = vpack.c.bf16 %v905, %v903
          %v922 = vpack.c.bf16 %v906, %v904
          %v923 = vld [vmem:[%s3] sm:$0xf]
          %v924 = vld [vmem:[%s3 + $0x4] sm:$0xf]
          %v925 = vld [vmem:[%s3 + $0x8] sm:$0xf]
          %v926 = vld [vmem:[%s3 + $0xc] sm:$0xf]
          %v927 = vld [vmem:[%s3 + $0x10] sm:$0xf]
          %v928 = vld [vmem:[%s3 + $0x14] sm:$0xf]
          %v929 = vld [vmem:[%s3 + $0x18] sm:$0xf]
          %v930 = vld [vmem:[%s3 + $0x1c] sm:$0xf]
          %v931 = vld [vmem:[%s3 + $0x20] sm:$0xf]
          %v932 = vld [vmem:[%s3 + $0x24] sm:$0xf]
          %v933 = vld [vmem:[%s3 + $0x28] sm:$0xf]
          %v934 = vld [vmem:[%s3 + $0x2c] sm:$0xf]
          %v935 = vld [vmem:[%s3 + $0x30] sm:$0xf]
          %v936 = vld [vmem:[%s3 + $0x34] sm:$0xf]
          %v937 = vld [vmem:[%s3 + $0x38] sm:$0xf]
          %v938 = vld [vmem:[%s3 + $0x3c] sm:$0xf]
          %v939 = vld [vmem:[%s3 + $0x40] sm:$0xf]
          %v940 = vld [vmem:[%s3 + $0x44] sm:$0xf]
          %v941 = vld [vmem:[%s3 + $0x48] sm:$0xf]
          %v942 = vld [vmem:[%s3 + $0x4c] sm:$0xf]
          %v943 = vld [vmem:[%s3 + $0x50] sm:$0xf]
          %v944 = vld [vmem:[%s3 + $0x54] sm:$0xf]
          %v945 = vld [vmem:[%s3 + $0x58] sm:$0xf]
          %v946 = vld [vmem:[%s3 + $0x5c] sm:$0xf]
          %v947 = vld [vmem:[%s3 + $0x60] sm:$0xf]
          %v948 = vld [vmem:[%s3 + $0x64] sm:$0xf]
          %v949 = vld [vmem:[%s3 + $0x68] sm:$0xf]
          %v950 = vld [vmem:[%s3 + $0x6c] sm:$0xf]
          %v951 = vld [vmem:[%s3 + $0x70] sm:$0xf]
          %v952 = vld [vmem:[%s3 + $0x74] sm:$0xf]
          %v953 = vld [vmem:[%s3 + $0x78] sm:$0xf]
          %v954 = vld [vmem:[%s3 + $0x7c] sm:$0xf]
          %v955 = vld [vmem:[%s4] sm:$0x1]
          %v957 = vlaneseq
          %v958 = vshrl.u32 %v957, 7
          %v959 = vsub.s32 0, %v958
          %v960 = vrot.slane %v955, %v959
          %v994 = vunpack.c.l.b16 %v923
          %v995 = vunpack.c.l.b16 %v924
          %v996 = vunpack.c.l.b16 %v925
          %v997 = vunpack.c.l.b16 %v926
          %v998 = vunpack.c.l.b16 %v927
          %v999 = vunpack.c.l.b16 %v928
          %v1000 = vunpack.c.l.b16 %v929
          %v1001 = vunpack.c.l.b16 %v930
          %v1002 = vunpack.c.l.b16 %v931
          %v1003 = vunpack.c.l.b16 %v932
          %v1004 = vunpack.c.l.b16 %v933
          %v1005 = vunpack.c.l.b16 %v934
          %v1006 = vunpack.c.l.b16 %v935
          %v1007 = vunpack.c.l.b16 %v936
          %v1008 = vunpack.c.l.b16 %v937
          %v1009 = vunpack.c.l.b16 %v938
          %v1010 = vunpack.c.l.b16 %v939
          %v1011 = vunpack.c.l.b16 %v940
          %v1012 = vunpack.c.l.b16 %v941
          %v1013 = vunpack.c.l.b16 %v942
          %v1014 = vunpack.c.l.b16 %v943
          %v1015 = vunpack.c.l.b16 %v944
          %v1016 = vunpack.c.l.b16 %v945
          %v1017 = vunpack.c.l.b16 %v946
          %v1018 = vunpack.c.l.b16 %v947
          %v1019 = vunpack.c.l.b16 %v948
          %v1020 = vunpack.c.l.b16 %v949
          %v1021 = vunpack.c.l.b16 %v950
          %v1022 = vunpack.c.l.b16 %v951
          %v1023 = vunpack.c.l.b16 %v952
          %v1024 = vunpack.c.l.b16 %v953
          %v1025 = vunpack.c.l.b16 %v954
          %v1026 = vpack.c.b16 %v995, %v994
          %v1027 = vpack.c.b16 %v997, %v996
          %v1028 = vpack.c.b16 %v999, %v998
          %v1029 = vpack.c.b16 %v1001, %v1000
          %v1030 = vpack.c.b16 %v1003, %v1002
          %v1031 = vpack.c.b16 %v1005, %v1004
          %v1032 = vpack.c.b16 %v1007, %v1006
          %v1033 = vpack.c.b16 %v1009, %v1008
          %v1034 = vpack.c.b16 %v1011, %v1010
          %v1035 = vpack.c.b16 %v1013, %v1012
          %v1036 = vpack.c.b16 %v1015, %v1014
          %v1037 = vpack.c.b16 %v1017, %v1016
          %v1038 = vpack.c.b16 %v1019, %v1018
          %v1039 = vpack.c.b16 %v1021, %v1020
          %v1040 = vpack.c.b16 %v1023, %v1022
          %v1041 = vpack.c.b16 %v1025, %v1024
          %1058 = vmatprep.subr.bf16.mxu0 0
          %1059 = vmatpush1.bf16.msra.mxu0 %v1026
          %1060 = vmatprep.subr.bf16.mxu0 0
          %1061 = vmatpush1.bf16.msra.mxu0 %v1027
          %1062 = vmatprep.subr.bf16.mxu0 0
          %1063 = vmatpush1.bf16.msra.mxu0 %v1028
          %1064 = vmatprep.subr.bf16.mxu0 0
          %1065 = vmatpush1.bf16.msra.mxu0 %v1029
          %1066 = vmatprep.subr.bf16.mxu0 0
          %1067 = vmatpush1.bf16.msra.mxu0 %v1030
          %1068 = vmatprep.subr.bf16.mxu0 0
          %1069 = vmatpush1.bf16.msra.mxu0 %v1031
          %1070 = vmatprep.subr.bf16.mxu0 0
          %1071 = vmatpush1.bf16.msra.mxu0 %v1032
          %1072 = vmatprep.subr.bf16.mxu0 0
          %1073 = vmatpush1.bf16.msra.mxu0 %v1033
          %1074 = vmatprep.subr.bf16.mxu0 0
          %1075 = vmatpush1.bf16.msra.mxu0 %v1034
          %1076 = vmatprep.subr.bf16.mxu0 0
          %1077 = vmatpush1.bf16.msra.mxu0 %v1035
          %1078 = vmatprep.subr.bf16.mxu0 0
          %1079 = vmatpush1.bf16.msra.mxu0 %v1036
          %1080 = vmatprep.subr.bf16.mxu0 0
          %1081 = vmatpush1.bf16.msra.mxu0 %v1037
          %1082 = vmatprep.subr.bf16.mxu0 0
          %1083 = vmatpush1.bf16.msra.mxu0 %v1038
          %1084 = vmatprep.subr.bf16.mxu0 0
          %1085 = vmatpush1.bf16.msra.mxu0 %v1039
          %1086 = vmatprep.subr.bf16.mxu0 0
          %1087 = vmatpush1.bf16.msra.mxu0 %v1040
          %1088 = vmatprep.subr.bf16.mxu0 0
          %1089 = vmatpush1.bf16.msra.mxu0 %v1041
          %1090 = vmatprep.mubr.bf16.mxu0 %v908
          %1091 = vmatmul.mubr.bf16.gmra.mrb[0].mxu0 %v907
          %v1092 = vpop.f32.mrb[0].mxu0
          %v1093 = vadd.f32 %v960, %v1092
          %v1094 = vpop.f32.mrb[0].mxu0
          %v1095 = vpop.f32.mrb[0].mxu0
          %v1096 = vadd.f32 %v960, %v1095
          %v1097 = vpop.f32.mrb[0].mxu0
          %1098 = vmatprep.mubr.bf16.mxu0 %v910
          %1099 = vmatmul.mubr.bf16.gmra.mrb[0].mxu0 %v909
          %v1100 = vpop.f32.mrb[0].mxu0
          %v1101 = vadd.f32 %v960, %v1100
          %v1102 = vpop.f32.mrb[0].mxu0
          %v1103 = vpop.f32.mrb[0].mxu0
          %v1104 = vadd.f32 %v960, %v1103
          %v1105 = vpop.f32.mrb[0].mxu0
          %1106 = vmatprep.mubr.bf16.mxu0 %v912
          %1107 = vmatmul.mubr.bf16.gmra.mrb[0].mxu0 %v911
          %v1108 = vpop.f32.mrb[0].mxu0
          %v1109 = vadd.f32 %v960, %v1108
          %v1110 = vpop.f32.mrb[0].mxu0
          %v1111 = vpop.f32.mrb[0].mxu0
          %v1112 = vadd.f32 %v960, %v1111
          %v1113 = vpop.f32.mrb[0].mxu0
          %1114 = vmatprep.mubr.bf16.mxu0 %v914
          %1115 = vmatmul.mubr.bf16.gmra.mrb[0].mxu0 %v913
          %v1116 = vpop.f32.mrb[0].mxu0
          %v1117 = vadd.f32 %v960, %v1116
          %v1118 = vpop.f32.mrb[0].mxu0
          %v1119 = vpop.f32.mrb[0].mxu0
          %v1120 = vadd.f32 %v960, %v1119
          %v1121 = vpop.f32.mrb[0].mxu0
          %1122 = vmatprep.mubr.bf16.mxu0 %v916
          %1123 = vmatmul.mubr.bf16.gmra.mrb[0].mxu0 %v915
          %v1124 = vpop.f32.mrb[0].mxu0
          %v1125 = vadd.f32 %v960, %v1124
          %v1126 = vpop.f32.mrb[0].mxu0
          %v1127 = vpop.f32.mrb[0].mxu0
          %v1128 = vadd.f32 %v960, %v1127
          %v1129 = vpop.f32.mrb[0].mxu0
          %1130 = vmatprep.mubr.bf16.mxu0 %v918
          %1131 = vmatmul.mubr.bf16.gmra.mrb[0].mxu0 %v917
          %v1132 = vpop.f32.mrb[0].mxu0
          %v1133 = vadd.f32 %v960, %v1132
          %v1134 = vpop.f32.mrb[0].mxu0
          %v1135 = vpop.f32.mrb[0].mxu0
          %v1136 = vadd.f32 %v960, %v1135
          %v1137 = vpop.f32.mrb[0].mxu0
          %1138 = vmatprep.mubr.bf16.mxu0 %v920
          %1139 = vmatmul.mubr.bf16.gmra.mrb[0].mxu0 %v919
          %v1140 = vpop.f32.mrb[0].mxu0
          %v1141 = vadd.f32 %v960, %v1140
          %v1142 = vpop.f32.mrb[0].mxu0
          %v1143 = vpop.f32.mrb[0].mxu0
          %v1144 = vadd.f32 %v960, %v1143
          %v1145 = vpop.f32.mrb[0].mxu0
          %1146 = vmatprep.mubr.bf16.mxu0 %v922
          %1147 = vmatmul.mubr.bf16.gmra.mrb[0].mxu0 %v921
          %v1148 = vpop.f32.mrb[0].mxu0
          %v1149 = vadd.f32 %v960, %v1148
          %v1150 = vpop.f32.mrb[0].mxu0
          %v1151 = vpop.f32.mrb[0].mxu0
          %v1152 = vadd.f32 %v960, %v1151
          %v1153 = vpop.f32.mrb[0].mxu0
          %1154 = vdwg.mxu0
          %v1155 = vadd.f32 %v1093, %v843
          %v1156 = vadd.f32 %v1096, %v844
          %v1157 = vadd.f32 %v1101, %v845
          %v1158 = vadd.f32 %v1104, %v846
          %v1159 = vadd.f32 %v1109, %v847
          %v1160 = vadd.f32 %v1112, %v848
          %v1161 = vadd.f32 %v1117, %v849
          %v1162 = vadd.f32 %v1120, %v850
          %v1163 = vadd.f32 %v1125, %v851
          %v1164 = vadd.f32 %v1128, %v852
          %v1165 = vadd.f32 %v1133, %v853
          %v1166 = vadd.f32 %v1136, %v854
          %v1167 = vadd.f32 %v1141, %v855
          %v1168 = vadd.f32 %v1144, %v856
          %v1169 = vadd.f32 %v1149, %v857
          %v1170 = vadd.f32 %v1152, %v858
          %1171 = vst [vmem:[%s503] sm:$0xff] %v1155
          %1172 = vst [vmem:[%s503 + $0x8] sm:$0xff] %v1156
          %1173 = vst [vmem:[%s503 + $0x10] sm:$0xff] %v1157
          %1174 = vst [vmem:[%s503 + $0x18] sm:$0xff] %v1158
          %1175 = vst [vmem:[%s503 + $0x20] sm:$0xff] %v1159
          %1176 = vst [vmem:[%s503 + $0x28] sm:$0xff] %v1160
          %1177 = vst [vmem:[%s503 + $0x30] sm:$0xff] %v1161
          %1178 = vst [vmem:[%s503 + $0x38] sm:$0xff] %v1162
          %1179 = vst [vmem:[%s503 + $0x40] sm:$0xff] %v1163
          %1180 = vst [vmem:[%s503 + $0x48] sm:$0xff] %v1164
          %1181 = vst [vmem:[%s503 + $0x50] sm:$0xff] %v1165
          %1182 = vst [vmem:[%s503 + $0x58] sm:$0xff] %v1166
          %1183 = vst [vmem:[%s503 + $0x60] sm:$0xff] %v1167
          %1184 = vst [vmem:[%s503 + $0x68] sm:$0xff] %v1168
          %1185 = vst [vmem:[%s503 + $0x70] sm:$0xff] %v1169
          %1186 = vst [vmem:[%s503 + $0x78] sm:$0xff] %v1170
          %v1187 = vld [vmem:[%s497] sm:$0xff]
          %v1188 = vld [vmem:[%s497 + $0x8] sm:$0xff]
          %v1189 = vld [vmem:[%s497 + $0x10] sm:$0xff]
          %v1190 = vld [vmem:[%s497 + $0x18] sm:$0xff]
          %v1191 = vld [vmem:[%s497 + $0x20] sm:$0xff]
          %v1192 = vld [vmem:[%s497 + $0x28] sm:$0xff]
          %v1193 = vld [vmem:[%s497 + $0x30] sm:$0xff]
          %v1194 = vld [vmem:[%s497 + $0x38] sm:$0xff]
          %v1195 = vld [vmem:[%s497 + $0x40] sm:$0xff]
          %v1196 = vld [vmem:[%s497 + $0x48] sm:$0xff]
          %v1197 = vld [vmem:[%s497 + $0x50] sm:$0xff]
          %v1198 = vld [vmem:[%s497 + $0x58] sm:$0xff]
          %v1199 = vld [vmem:[%s497 + $0x60] sm:$0xff]
          %v1200 = vld [vmem:[%s497 + $0x68] sm:$0xff]
          %v1201 = vld [vmem:[%s497 + $0x70] sm:$0xff]
          %v1202 = vld [vmem:[%s497 + $0x78] sm:$0xff]
          %1204 = vset.pattern.permute.xlu0 0
          %1205 = vperm.xlu0 %1204, %v1187
          %v1206 = vpop.permute.xlu0 %1205
          %1209 = vset.pattern.permute.xlu0 0
          %1210 = vperm.xlu0 %1209, %v1188
          %v1211 = vpop.permute.xlu0 %1210
          %1214 = vset.pattern.permute.xlu0 0
          %1215 = vperm.xlu0 %1214, %v1189
          %v1216 = vpop.permute.xlu0 %1215
          %1219 = vset.pattern.permute.xlu0 0
          %1220 = vperm.xlu0 %1219, %v1190
          %v1221 = vpop.permute.xlu0 %1220
          %1224 = vset.pattern.permute.xlu0 0
          %1225 = vperm.xlu0 %1224, %v1191
          %v1226 = vpop.permute.xlu0 %1225
          %1229 = vset.pattern.permute.xlu0 0
          %1230 = vperm.xlu0 %1229, %v1192
          %v1231 = vpop.permute.xlu0 %1230
          %1234 = vset.pattern.permute.xlu0 0
          %1235 = vperm.xlu0 %1234, %v1193
          %v1236 = vpop.permute.xlu0 %1235
          %1239 = vset.pattern.permute.xlu0 0
          %1240 = vperm.xlu0 %1239, %v1194
          %v1241 = vpop.permute.xlu0 %1240
          %1244 = vset.pattern.permute.xlu0 0
          %1245 = vperm.xlu0 %1244, %v1195
          %v1246 = vpop.permute.xlu0 %1245
          %1249 = vset.pattern.permute.xlu0 0
          %1250 = vperm.xlu0 %1249, %v1196
          %v1251 = vpop.permute.xlu0 %1250
          %1254 = vset.pattern.permute.xlu0 0
          %1255 = vperm.xlu0 %1254, %v1197
          %v1256 = vpop.permute.xlu0 %1255
          %1259 = vset.pattern.permute.xlu0 0
          %1260 = vperm.xlu0 %1259, %v1198
          %v1261 = vpop.permute.xlu0 %1260
          %1264 = vset.pattern.permute.xlu0 0
          %1265 = vperm.xlu0 %1264, %v1199
          %v1266 = vpop.permute.xlu0 %1265
          %1269 = vset.pattern.permute.xlu0 0
          %1270 = vperm.xlu0 %1269, %v1200
          %v1271 = vpop.permute.xlu0 %1270
          %1274 = vset.pattern.permute.xlu0 0
          %1275 = vperm.xlu0 %1274, %v1201
          %v1276 = vpop.permute.xlu0 %1275
          %1279 = vset.pattern.permute.xlu0 0
          %1280 = vperm.xlu0 %1279, %v1202
          %v1281 = vpop.permute.xlu0 %1280
          %v1283 = vmul.f32 %v1155, %v1206
          %v1284 = vmul.f32 %v1156, %v1211
          %v1285 = vmul.f32 %v1157, %v1216
          %v1286 = vmul.f32 %v1158, %v1221
          %v1287 = vmul.f32 %v1159, %v1226
          %v1288 = vmul.f32 %v1160, %v1231
          %v1289 = vmul.f32 %v1161, %v1236
          %v1290 = vmul.f32 %v1162, %v1241
          %v1291 = vmul.f32 %v1163, %v1246
          %v1292 = vmul.f32 %v1164, %v1251
          %v1293 = vmul.f32 %v1165, %v1256
          %v1294 = vmul.f32 %v1166, %v1261
          %v1295 = vmul.f32 %v1167, %v1266
          %v1296 = vmul.f32 %v1168, %v1271
          %v1297 = vmul.f32 %v1169, %v1276
          %v1298 = vmul.f32 %v1170, %v1281
          %v1299 = vadd.f32 %v1283, %v1284
          %v1300 = vadd.f32 %v1299, %v1285
          %v1301 = vadd.f32 %v1300, %v1286
          %v1302 = vadd.f32 %v1301, %v1287
          %v1303 = vadd.f32 %v1302, %v1288
          %v1304 = vadd.f32 %v1303, %v1289
          %v1305 = vadd.f32 %v1304, %v1290
          %v1306 = vadd.f32 %v1305, %v1291
          %v1307 = vadd.f32 %v1306, %v1292
          %v1308 = vadd.f32 %v1307, %v1293
          %v1309 = vadd.f32 %v1308, %v1294
          %v1310 = vadd.f32 %v1309, %v1295
          %v1311 = vadd.f32 %v1310, %v1296
          %v1312 = vadd.f32 %v1311, %v1297
          %v1313 = vadd.f32 %v1312, %v1298
          %v1314 = vrot.slane %v1313, 4
          %v1315 = vadd.f32 %v1313, %v1314
          %v1316 = vrot.slane %v1315, 2
          %v1317 = vadd.f32 %v1315, %v1316
          %v1318 = vrot.slane %v1317, 1
          %v1319 = vadd.f32 %v1317, %v1318
          %1320 = vst [vmem:[%s508] sm:$0xff] %v1319
          %v1321 = vmul.f32 %v1283, %v1155
          %v1322 = vmul.f32 %v1284, %v1156
          %v1323 = vmul.f32 %v1285, %v1157
          %v1324 = vmul.f32 %v1286, %v1158
          %v1325 = vmul.f32 %v1287, %v1159
          %v1326 = vmul.f32 %v1288, %v1160
          %v1327 = vmul.f32 %v1289, %v1161
          %v1328 = vmul.f32 %v1290, %v1162
          %v1329 = vmul.f32 %v1291, %v1163
          %v1330 = vmul.f32 %v1292, %v1164
          %v1331 = vmul.f32 %v1293, %v1165
          %v1332 = vmul.f32 %v1294, %v1166
          %v1333 = vmul.f32 %v1295, %v1167
          %v1334 = vmul.f32 %v1296, %v1168
          %v1335 = vmul.f32 %v1297, %v1169
          %v1336 = vmul.f32 %v1298, %v1170
          %v1337 = vadd.f32 %v1321, %v1322
          %v1338 = vadd.f32 %v1337, %v1323
          %v1339 = vadd.f32 %v1338, %v1324
          %v1340 = vadd.f32 %v1339, %v1325
          %v1341 = vadd.f32 %v1340, %v1326
          %v1342 = vadd.f32 %v1341, %v1327
          %v1343 = vadd.f32 %v1342, %v1328
          %v1344 = vadd.f32 %v1343, %v1329
          %v1345 = vadd.f32 %v1344, %v1330
          %v1346 = vadd.f32 %v1345, %v1331
          %v1347 = vadd.f32 %v1346, %v1332
          %v1348 = vadd.f32 %v1347, %v1333
          %v1349 = vadd.f32 %v1348, %v1334
          %v1350 = vadd.f32 %v1349, %v1335
          %v1351 = vadd.f32 %v1350, %v1336
          %v1352 = vrot.slane %v1351, 4
          %v1353 = vadd.f32 %v1351, %v1352
          %v1354 = vrot.slane %v1353, 2
          %v1355 = vadd.f32 %v1353, %v1354
          %v1356 = vrot.slane %v1355, 1
          %v1357 = vadd.f32 %v1355, %v1356
          %1358 = vst [vmem:[%s512] sm:$0xff] %v1357
        $region93: #{nsgnn_layer_forward.3} parent=80 // pred_fallthru
          _
        %s1359 = smul.u32 16, %s24
        %p1360 = scmp.lt.s32.totalorder %s1359, 31
        %s1361 = scalar_select %p1360, %s1359, 31
        %s1362 = smul.addr %s1361, 8
        %s1363 = scalar_lea.vmem %s6, %s1362
        %p1364 = scmp.lt.s32.totalorder %s24, 1
        %s1365 = scalar_select %p1364, %s24, 1
        %s1366 = smul.addr %s1365, 8
        %s1367 = scalar_lea.vmem %s7, %s1366
        %p1368 = scmp.lt.s32.totalorder %s24, 1
        %s1369 = scalar_select %p1368, %s24, 1
        %s1370 = smul.addr %s1369, 8
        %s1371 = scalar_lea.vmem %s8, %s1370
        // Predicated region
        $region94: #{nsgnn_layer_forward.3} parent=80 // pred_check
          %p1372 = pneg %p198
        $region95: #{nsgnn_layer_forward.3} parent=80 // pred_check_branch
          %1374 = sbr.rel (%p1372) target = $region97
        $region96: #{nsgnn_layer_forward.3} parent=80 // pred_region
          %s1375 = smul.u32 16, %s24
        $region97: #{nsgnn_layer_forward.3} parent=80 // pred_fallthru
          _
        // Predicated region
        $region98: #{nsgnn_layer_forward.3} parent=80 // pred_check
          %p1376 = pneg %p224
        $region99: #{nsgnn_layer_forward.3} parent=80 // pred_check_branch
          %1378 = sbr.rel (%p1376) target = $region101
        $region100: #{nsgnn_layer_forward.3} parent=80 // pred_region
          _
        $region101: #{nsgnn_layer_forward.3} parent=80 // pred_fallthru
          _
        // Predicated region
        $region102: #{nsgnn_layer_forward.3} parent=80 // pred_check
          %p1379 = pneg %p250
        $region103: #{nsgnn_layer_forward.3} parent=80 // pred_check_branch
          %1381 = sbr.rel (%p1379) target = $region105
        $region104: #{nsgnn_layer_forward.3} parent=80 // pred_region
          _
        $region105: #{nsgnn_layer_forward.3} parent=80 // pred_fallthru
          _
      $region81: #{nsgnn_layer_forward.3} parent=5 // pred_fallthru
        _
      %p1382 = scmp.le.s32.totalorder 2, %s15
      // Predicated region
      $region106: #{nsgnn_layer_forward.3} parent=5 // pred_check
        %p1383 = pneg %p1382
      $region107: #{nsgnn_layer_forward.3} parent=5 // pred_check_branch
        %1385 = sbr.rel (%p1383) target = $region109
      $region108: #{nsgnn_layer_forward.3} parent=5 // pred_region
        %s1386 = ssub.s32 %s15, 2
        // Predicated region
        $region110: #{nsgnn_layer_forward.3} parent=108 // pred_check
          %p1387 = pneg %p204
        $region111: #{nsgnn_layer_forward.3} parent=108 // pred_check_branch
          %1389 = sbr.rel (%p1387) target = $region113
        $region112: #{nsgnn_layer_forward.3} parent=108 // pred_region
          %s1390 = smul.u32 16, %s26
          %p1391 = scmp.lt.s32.totalorder %s1390, 31
          %s1392 = scalar_select %p1391, %s1390, 31
          %s1393 = smul.addr %s1392, 8
          %s1394 = scalar_lea.vmem %s6, %s1393
        $region113: #{nsgnn_layer_forward.3} parent=108 // pred_fallthru
          _
        // Predicated region
        $region114: #{nsgnn_layer_forward.3} parent=108 // pred_check
          %p1395 = pneg %p230
        $region115: #{nsgnn_layer_forward.3} parent=108 // pred_check_branch
          %1397 = sbr.rel (%p1395) target = $region117
        $region116: #{nsgnn_layer_forward.3} parent=108 // pred_region
          %p1398 = scmp.lt.s32.totalorder %s26, 1
          %s1399 = scalar_select %p1398, %s26, 1
          %s1400 = smul.addr %s1399, 8
          %s1401 = scalar_lea.vmem %s7, %s1400
        $region117: #{nsgnn_layer_forward.3} parent=108 // pred_fallthru
          _
        // Predicated region
        $region118: #{nsgnn_layer_forward.3} parent=108 // pred_check
          %p1402 = pneg %p256
        $region119: #{nsgnn_layer_forward.3} parent=108 // pred_check_branch
          %1404 = sbr.rel (%p1402) target = $region121
        $region120: #{nsgnn_layer_forward.3} parent=108 // pred_region
          %p1405 = scmp.lt.s32.totalorder %s26, 1
          %s1406 = scalar_select %p1405, %s26, 1
          %s1407 = smul.addr %s1406, 8
          %s1408 = scalar_lea.vmem %s8, %s1407
        $region121: #{nsgnn_layer_forward.3} parent=108 // pred_fallthru
          _
      $region109: #{nsgnn_layer_forward.3} parent=5 // pred_fallthru
        _
    $region6: #{nsgnn_layer_forward.3} parent=1 // loop_footer
      %s19 = sadd.s32 1, %s15
    $region7: #{nsgnn_layer_forward.3} parent=1 // loop_footer_branch
      %14 = sbr.rel target = $region3
    $region8: #{nsgnn_layer_forward.3} parent=1 // loop_exit
      _

</llo_original>
